<compile_context>
chip_gen: v7x
topology: tpu7x:2x2x1
jax: 0.10.0
libtpu: 0.0.40
codegen_flags: <defaults>
</compile_context>

<pallas_src>
import functools

import jax
import jax.numpy as jnp
from jax import lax
from jax.experimental import pallas as pl
from jax.experimental.pallas import tpu as pltpu


# VMEM budget with headroom for v7x (64 MiB physical per TensorCore).
_VMEM_LIMIT = 48 * 1024 * 1024


def _divisor_tile(size, target):
    """Largest tile <= target that evenly divides `size` (keeps grids exact)."""
    t = min(size, target)
    while size % t:
        t -= 1
    return t


def _gelu_tanh(x):
    # tanh-approx GELU (exp/tanh run on the EUP); matches erf-GELU to ~1e-5 at these scales.
    c = 0.7978845608028654  # sqrt(2/pi)
    return 0.5 * x * (1.0 + jnp.tanh(c * (x + 0.044715 * x * x * x)))


# ----------------------------------------------------------------------------
# Kernel 1: tiled linear  y = act(x @ w + b) * gamma + residual
#   x: (M, K) bf16,  w: (K, N) bf16,  accumulate f32, epilogue fused.
# ----------------------------------------------------------------------------
def _make_linear_kernel(has_bias, has_gamma, has_residual, activation):
    def kernel(*refs):
        x_ref, w_ref = refs[0], refs[1]
        i = 2
        b_ref = g_ref = r_ref = None
        if has_bias:
            b_ref = refs[i]; i += 1
        if has_gamma:
            g_ref = refs[i]; i += 1
        if has_residual:
            r_ref = refs[i]; i += 1
        o_ref, acc_ref = refs[i], refs[i + 1]

        @pl.when(pl.program_id(2) == 0)
        def _():
            acc_ref[...] = jnp.zeros_like(acc_ref)

        acc_ref[...] += jnp.dot(x_ref[...], w_ref[...],
                                preferred_element_type=jnp.float32)

        @pl.when(pl.program_id(2) == pl.num_programs(2) - 1)
        def _():
            y = acc_ref[...]
            if has_bias:
                y = y + b_ref[...].astype(jnp.float32)
            if activation == "gelu":
                y = _gelu_tanh(y)
            if has_gamma:
                y = y * g_ref[...].astype(jnp.float32)
            if has_residual:
                y = y + r_ref[...].astype(jnp.float32)
            o_ref[...] = y.astype(o_ref.dtype)

    return kernel


def linear_pallas(x, w, bias=None, *, gamma=None, residual=None, activation=None,
                  out_dtype=jnp.float32, tm=256, tn=256, tk=512):
    """Tiled, pipelined matmul with fused epilogue.

    x: (M, K), w: (K, N) (already transposed to (in, out)). bias/gamma: (N,).
    residual: (M, N). Tile targets: 256/256/512 (multiples of 256 feed the v6e/v7x
    MXU fully; divisor fallback keeps small test shapes exact).
    """
    M, K = x.shape
    Kw, N = w.shape
    assert K == Kw
    tm = _divisor_tile(M, tm)
    tn = _divisor_tile(N, tn)
    tk = _divisor_tile(K, tk)
    grid = (M // tm, N // tn, K // tk)

    in_specs = [
        pl.BlockSpec((tm, tk), lambda i, j, k: (i, k)),
        pl.BlockSpec((tk, tn), lambda i, j, k: (k, j)),
    ]
    inputs = [x, w]
    if bias is not None:
        in_specs.append(pl.BlockSpec((1, tn), lambda i, j, k: (0, j)))
        inputs.append(bias.reshape(1, N))
    if gamma is not None:
        in_specs.append(pl.BlockSpec((1, tn), lambda i, j, k: (0, j)))
        inputs.append(gamma.reshape(1, N))
    if residual is not None:
        in_specs.append(pl.BlockSpec((tm, tn), lambda i, j, k: (i, j)))
        inputs.append(residual)

    kernel = _make_linear_kernel(bias is not None, gamma is not None,
                                 residual is not None, activation)
    return pl.pallas_call(
        kernel,
        out_shape=jax.ShapeDtypeStruct((M, N), out_dtype),
        grid=grid,
        in_specs=in_specs,
        out_specs=pl.BlockSpec((tm, tn), lambda i, j, k: (i, j)),
        scratch_shapes=[pltpu.VMEM((tm, tn), jnp.float32)],
        compiler_params=pltpu.CompilerParams(
            dimension_semantics=("parallel", "parallel", "arbitrary"),
            vmem_limit_bytes=_VMEM_LIMIT,
        ),
    )(*inputs)


# ----------------------------------------------------------------------------
# Kernel 2: LayerNorm over the last axis (rows tiled, f32 math, bf16 out).
# ----------------------------------------------------------------------------
def _layernorm_kernel(x_ref, g_ref, b_ref, o_ref, *, eps):
    x = x_ref[...].astype(jnp.float32)
    mean = jnp.mean(x, axis=-1, keepdims=True)
    xc = x - mean
    var = jnp.mean(xc * xc, axis=-1, keepdims=True)
    y = xc * lax.rsqrt(var + eps)
    y = y * g_ref[...].astype(jnp.float32) + b_ref[...].astype(jnp.float32)
    o_ref[...] = y.astype(o_ref.dtype)


def layernorm_pallas(x, gamma, beta, *, eps=1e-5, out_dtype=jnp.bfloat16, tm=512):
    M, C = x.shape
    tm = _divisor_tile(M, tm)
    return pl.pallas_call(
        functools.partial(_layernorm_kernel, eps=eps),
        out_shape=jax.ShapeDtypeStruct((M, C), out_dtype),
        grid=(M // tm,),
        in_specs=[pl.BlockSpec((tm, C), lambda i: (i, 0)),
                  pl.BlockSpec((1, C), lambda i: (0, 0)),
                  pl.BlockSpec((1, C), lambda i: (0, 0))],
        out_specs=pl.BlockSpec((tm, C), lambda i: (i, 0)),
        compiler_params=pltpu.CompilerParams(
            dimension_semantics=("parallel",),
            vmem_limit_bytes=_VMEM_LIMIT,
        ),
    )(x, gamma.reshape(1, C), beta.reshape(1, C))


# ----------------------------------------------------------------------------
# Kernel 3: multi-head attention, KV-tiled online softmax.
#   Reads packed qkv (B, N, 3, H, D) directly (no wrapper transposes),
#   writes merged-head output (B, N, H*D) lane-dense.
# ----------------------------------------------------------------------------
def _attn_kernel(q_ref, k_ref, v_ref, o_ref, m_ref, l_ref, acc_ref, *,
                 scale, num_heads):
    kv = pl.program_id(2)

    @pl.when(kv == 0)
    def _():
        m_ref[...] = jnp.full(m_ref.shape, -jnp.inf, dtype=m_ref.dtype)
        l_ref[...] = jnp.zeros_like(l_ref)
        acc_ref[...] = jnp.zeros_like(acc_ref)

    # q_ref: (TQ, H, D) bf16;  k_ref, v_ref: (TK, H, D) bf16
    for h in range(num_heads):                       # static unroll over heads
        q_h = q_ref[:, h, :]                         # (TQ, D)
        k_h = k_ref[:, h, :]                         # (TK, D)
        v_h = v_ref[:, h, :]                         # (TK, D)

        # q @ k^T without materializing a transpose: contract last dims of both.
        s = lax.dot_general(q_h, k_h, (((1,), (1,)), ((), ())),
                            preferred_element_type=jnp.float32) * scale   # (TQ, TK)

        m_prev = m_ref[h]                                             # (TQ, 1)
        m_new = jnp.maximum(m_prev, jnp.max(s, axis=-1, keepdims=True))
        alpha = jnp.exp(m_prev - m_new)
        p = jnp.exp(s - m_new)                                        # (TQ, TK)
        l_ref[h] = alpha * l_ref[h] + jnp.sum(p, axis=-1, keepdims=True)
        acc_ref[h] = alpha * acc_ref[h] + jnp.dot(
            p.astype(v_h.dtype), v_h, preferred_element_type=jnp.float32)
        m_ref[h] = m_new

    @pl.when(kv == pl.num_programs(2) - 1)
    def _():
        outs = []
        for h in range(num_heads):
            inv_l = pl.reciprocal(l_ref[h], approx=True)              # (TQ, 1)
            outs.append(acc_ref[h] * inv_l)                           # (TQ, D)
        # single lane-dense (TQ, H*D) store
        o_ref[...] = jnp.concatenate(outs, axis=-1).astype(o_ref.dtype)


def attention_pallas(qkv, *, scale, num_heads, head_dim,
                     tq_target=512, tk_target=256, out_dtype=jnp.bfloat16):
    """qkv: (B, N, 3, H, D) bf16 -> (B, N, H*D)."""
    B, N, three, H, D = qkv.shape
    assert three == 3 and H == num_heads and D == head_dim
    TQ = _divisor_tile(N, tq_target)
    TK = _divisor_tile(N, tk_target)
    grid = (B, N // TQ, N // TK)   # kv axis last (reduction)

    q_spec = pl.BlockSpec((None, TQ, None, H, D), lambda b, qi, kv: (b, qi, 0, 0, 0))
    k_spec = pl.BlockSpec((None, TK, None, H, D), lambda b, qi, kv: (b, kv, 1, 0, 0))
    v_spec = pl.BlockSpec((None, TK, None, H, D), lambda b, qi, kv: (b, kv, 2, 0, 0))
    o_spec = pl.BlockSpec((None, TQ, H * D), lambda b, qi, kv: (b, qi, 0))

    kernel = functools.partial(_attn_kernel, scale=scale, num_heads=H)
    return pl.pallas_call(
        kernel,
        out_shape=jax.ShapeDtypeStruct((B, N, H * D), out_dtype),
        grid=grid,
        in_specs=[q_spec, k_spec, v_spec],
        out_specs=o_spec,
        scratch_shapes=[
            pltpu.VMEM((H, TQ, 1), jnp.float32),   # running max
            pltpu.VMEM((H, TQ, 1), jnp.float32),   # running denom
            pltpu.VMEM((H, TQ, D), jnp.float32),   # running numerator
        ],
        compiler_params=pltpu.CompilerParams(
            dimension_semantics=("parallel", "parallel", "arbitrary"),
            vmem_limit_bytes=_VMEM_LIMIT,
        ),
    )(qkv, qkv, qkv)


# ----------------------------------------------------------------------------
# Block wrapper (parameters stored pre-transposed as (in, out); residual math f32)
# ----------------------------------------------------------------------------
def init_block_params(key, dim, num_heads, mlp_ratio=4.0, attn_head_dim=None,
                      init_values=None, w_scale=0.02):
    head_dim = dim // num_heads if attn_head_dim is None else attn_head_dim
    ahd = head_dim * num_heads
    hidden = int(dim * mlp_ratio)
    ks = jax.random.split(key, 12)
    p = {
        "norm1_g": 1.0 + 0.1 * jax.random.normal(ks[0], (dim,), jnp.float32),
        "norm1_b": 0.1 * jax.random.normal(ks[1], (dim,), jnp.float32),
        "qkv_w":  w_scale * jax.random.normal(ks[2], (dim, 3 * ahd), jnp.float32),
        "proj_w": w_scale * jax.random.normal(ks[3], (ahd, dim), jnp.float32),
        "proj_b": w_scale * jax.random.normal(ks[4], (dim,), jnp.float32),
        "norm2_g": 1.0 + 0.1 * jax.random.normal(ks[5], (dim,), jnp.float32),
        "norm2_b": 0.1 * jax.random.normal(ks[6], (dim,), jnp.float32),
        "fc1_w": w_scale * jax.random.normal(ks[7], (dim, hidden), jnp.float32),
        "fc1_b": w_scale * jax.random.normal(ks[8], (hidden,), jnp.float32),
        "fc2_w": w_scale * jax.random.normal(ks[9], (hidden, dim), jnp.float32),
        "fc2_b": w_scale * jax.random.normal(ks[10], (dim,), jnp.float32),
    }
    if init_values is not None and init_values > 0:
        p["gamma_1"] = init_values * jnp.ones((dim,), jnp.float32)
        p["gamma_2"] = init_values * jnp.ones((dim,), jnp.float32)
    return p, head_dim


def block_forward(params, x, num_heads, head_dim, qk_scale=None):
    B, N, C = x.shape
    H, D = num_heads, head_dim
    ahd = H * D
    scale = qk_scale if qk_scale is not None else D ** (-0.5)
    M = B * N
    bf16 = jnp.bfloat16

    x2 = x.reshape(M, C).astype(jnp.float32)       # residual stream, f32

    # bf16 weights for the MXU (in production these would be stored pre-cast).
    qkv_w = params["qkv_w"].astype(bf16)
    proj_w = params["proj_w"].astype(bf16)
    fc1_w = params["fc1_w"].astype(bf16)
    fc2_w = params["fc2_w"].astype(bf16)

    # ---- attention branch:  x += gamma_1 * proj(attn(qkv(norm1(x)))) ----
    h1 = layernorm_pallas(x2, params["norm1_g"], params["norm1_b"])          # (M,C) bf16
    qkv = linear_pallas(h1, qkv_w, out_dtype=bf16)                           # (M,3*ahd) bf16
    qkv5 = qkv.reshape(B, N, 3, H, D)                                        # free reshape
    attn = attention_pallas(qkv5, scale=scale, num_heads=H, head_dim=D)      # (B,N,ahd)
    attn2 = attn.reshape(M, ahd)                                             # free reshape
    x2 = linear_pallas(attn2, proj_w, params["proj_b"],
                       gamma=params.get("gamma_1"), residual=x2,
                       out_dtype=jnp.float32)                                # fused +res

    # ---- MLP branch:  x += gamma_2 * fc2(gelu(fc1(norm2(x)))) ----
    h2 = layernorm_pallas(x2, params["norm2_g"], params["norm2_b"])          # (M,C) bf16
    hid = linear_pallas(h2, fc1_w, params["fc1_b"], activation="gelu",
                        out_dtype=bf16)                                      # (M,hidden)
    x2 = linear_pallas(hid, fc2_w, params["fc2_b"],
                       gamma=params.get("gamma_2"), residual=x2,
                       out_dtype=jnp.float32)                                # fused +res

    return x2.reshape(B, N, C)


# ----------------------------------------------------------------------------
# Pure-JAX f32 reference (mirrors the PyTorch Block forward)
# ----------------------------------------------------------------------------
def block_reference(params, x, num_heads, head_dim, qk_scale=None, eps=1e-5):
    B, N, C = x.shape
    H, D = num_heads, head_dim
    scale = qk_scale if qk_scale is not None else D ** (-0.5)

    def ln(z, g, b):
        m = jnp.mean(z, axis=-1, keepdims=True)
        v = jnp.mean((z - m) ** 2, axis=-1, keepdims=True)
        return (z - m) / jnp.sqrt(v + eps) * g + b

    def attn_fn(z):
        qkv = z @ params["qkv_w"]
        qkv = qkv.reshape(B, N, 3, H, D).transpose(2, 0, 3, 1, 4)
        q, k, v = qkv[0] * scale, qkv[1], qkv[2]
        a = jnp.einsum("bhqd,bhkd->bhqk", q, k)
        a = jax.nn.softmax(a, axis=-1)
        o = jnp.einsum("bhqk,bhkd->bhqd", a, v)
        o = o.transpose(0, 2, 1, 3).reshape(B, N, H * D)
        return o @ params["proj_w"] + params["proj_b"]

    def mlp_fn(z):
        h = z @ params["fc1_w"] + params["fc1_b"]
        h = jax.nn.gelu(h, approximate=False)     # PyTorch nn.GELU default (erf)
        return h @ params["fc2_w"] + params["fc2_b"]

    g1 = params.get("gamma_1")
    g2 = params.get("gamma_2")
    a = attn_fn(ln(x, params["norm1_g"], params["norm1_b"]))
    x = x + (a if g1 is None else g1 * a)
    m = mlp_fn(ln(x, params["norm2_g"], params["norm2_b"]))
    x = x + (m if g2 is None else g2 * m)
    return x


if __name__ == "__main__":
    # Small shapes consistent with the module: B=2, N=8 tokens, dim=32, 4 heads.
    B, N, dim, num_heads = 2, 8, 32, 4
    mlp_ratio = 4.0
    init_values = 0.1          # exercise the gamma_1/gamma_2 (LayerScale) path

    key = jax.random.PRNGKey(0)
    kp, kx = jax.random.split(key)
    params, head_dim = init_block_params(kp, dim, num_heads, mlp_ratio,
                                         init_values=init_values)
    x = jax.random.normal(kx, (B, N, dim), jnp.float32)

    fwd = jax.jit(functools.partial(block_forward, num_heads=num_heads,
                                    head_dim=head_dim))
    out = jax.block_until_ready(fwd(params, x))

    ref = block_reference(params, x, num_heads, head_dim)
    assert out.shape == (B, N, dim)
    max_err = float(jnp.max(jnp.abs(out - ref)))
    assert jnp.allclose(out, ref, atol=1e-2, rtol=1e-2), \
        f"mismatch vs reference (max abs err {max_err})"

    print("KERNEL_OK")
</pallas_src>

<mosaic_0001>
module attributes {stable_mosaic.version = 11 : i64} {
  func.func @_layernorm_kernel(%arg0: i32, %arg1: memref<16x32xf32, #tpu.memory_space<vmem>>, %arg2: memref<1x32xf32, #tpu.memory_space<vmem>>, %arg3: memref<1x32xf32, #tpu.memory_space<vmem>>, %arg4: memref<16x32xbf16, #tpu.memory_space<vmem>>) attributes {dimension_semantics = [#tpu.dimension_semantics<parallel>], iteration_bounds = array<i64: 1>, scalar_prefetch = 0 : i64, scratch_operands = 0 : i64, tpu.core_type = #tpu.core_type<tc>, window_params = [{transform_indices = @transform_0, window_bounds = array<i64: 16, 32>}, {pipeline_mode = #tpu.pipeline_mode<synchronous>, transform_indices = @transform_1, window_bounds = array<i64: 1, 32>}, {pipeline_mode = #tpu.pipeline_mode<synchronous>, transform_indices = @transform_2, window_bounds = array<i64: 1, 32>}, {transform_indices = @transform_3, window_bounds = array<i64: 16, 32>}]} {
    %c0 = arith.constant 0 : index
    %c0_0 = arith.constant 0 : index
    %0 = vector.load %arg1[%c0, %c0_0] : memref<16x32xf32, #tpu.memory_space<vmem>>, vector<16x32xf32>
    %cst = arith.constant dense<0.000000e+00> : vector<16xf32>
    %1 = vector.multi_reduction <add>, %0, %cst [1] : vector<16x32xf32> to vector<16xf32>
    %2 = vector.shape_cast %1 : vector<16xf32> to vector<16x1xf32>
    %cst_1 = arith.constant 3.200000e+01 : f32
    %3 = vector.broadcast %cst_1 : f32 to vector<16x1xf32>
    %4 = arith.divf %2, %3 : vector<16x1xf32>
    %5 = vector.broadcast %4 : vector<16x1xf32> to vector<16x32xf32>
    %6 = arith.subf %0, %5 : vector<16x32xf32>
    %7 = arith.mulf %6, %6 : vector<16x32xf32>
    %cst_2 = arith.constant dense<0.000000e+00> : vector<16xf32>
    %8 = vector.multi_reduction <add>, %7, %cst_2 [1] : vector<16x32xf32> to vector<16xf32>
    %9 = vector.shape_cast %8 : vector<16xf32> to vector<16x1xf32>
    %cst_3 = arith.constant 3.200000e+01 : f32
    %10 = vector.broadcast %cst_3 : f32 to vector<16x1xf32>
    %11 = arith.divf %9, %10 : vector<16x1xf32>
    %cst_4 = arith.constant 9.99999974E-6 : f32
    %12 = vector.broadcast %cst_4 : f32 to vector<16x1xf32>
    %13 = arith.addf %11, %12 : vector<16x1xf32>
    %14 = math.rsqrt %13 : vector<16x1xf32>
    %15 = vector.broadcast %14 : vector<16x1xf32> to vector<16x32xf32>
    %16 = arith.mulf %6, %15 : vector<16x32xf32>
    %c0_5 = arith.constant 0 : index
    %c0_6 = arith.constant 0 : index
    %17 = vector.load %arg2[%c0_5, %c0_6] : memref<1x32xf32, #tpu.memory_space<vmem>>, vector<1x32xf32>
    %18 = vector.broadcast %17 : vector<1x32xf32> to vector<16x32xf32>
    %19 = arith.mulf %16, %18 : vector<16x32xf32>
    %c0_7 = arith.constant 0 : index
    %c0_8 = arith.constant 0 : index
    %20 = vector.load %arg3[%c0_7, %c0_8] : memref<1x32xf32, #tpu.memory_space<vmem>>, vector<1x32xf32>
    %21 = vector.broadcast %20 : vector<1x32xf32> to vector<16x32xf32>
    %22 = arith.addf %19, %21 : vector<16x32xf32>
    %23 = arith.truncf %22 : vector<16x32xf32> to vector<16x32xbf16>
    %c0_9 = arith.constant 0 : index
    %c0_10 = arith.constant 0 : index
    %24 = vector.load %arg4[%c0_9, %c0_10] : memref<16x32xbf16, #tpu.memory_space<vmem>>, vector<16x32xbf16>
    tpu.vector_store %arg4[%c0_9, %c0_10], %23 {strides = array<i32>} : memref<16x32xbf16, #tpu.memory_space<vmem>>, vector<16x32xbf16>,
    return
  }
  func.func @transform_0(%arg0: i32) -> (i32, i32) {
    %c0_i32 = arith.constant 0 : i32
    %c0_i32_0 = arith.constant 0 : i32
    return %arg0, %c0_i32 : i32, i32
  }
  func.func @transform_1(%arg0: i32) -> (i32, i32) {
    %c0_i32 = arith.constant 0 : i32
    %c0_i32_0 = arith.constant 0 : i32
    %c0_i32_1 = arith.constant 0 : i32
    return %c0_i32, %c0_i32_0 : i32, i32
  }
  func.func @transform_2(%arg0: i32) -> (i32, i32) {
    %c0_i32 = arith.constant 0 : i32
    %c0_i32_0 = arith.constant 0 : i32
    %c0_i32_1 = arith.constant 0 : i32
    return %c0_i32, %c0_i32_0 : i32, i32
  }
  func.func @transform_3(%arg0: i32) -> (i32, i32) {
    %c0_i32 = arith.constant 0 : i32
    %c0_i32_0 = arith.constant 0 : i32
    return %arg0, %c0_i32 : i32, i32
  }
}

module attributes {stable_mosaic.version = 11 : i64} {
  func.func @kernel(%arg0: i32, %arg1: i32, %arg2: i32, %arg3: memref<16x32xbf16, #tpu.memory_space<vmem>>, %arg4: memref<32x96xbf16, #tpu.memory_space<vmem>>, %arg5: memref<16x96xbf16, #tpu.memory_space<vmem>>, %arg6: memref<16x96xf32, #tpu.memory_space<vmem>>) attributes {dimension_semantics = [#tpu.dimension_semantics<parallel>, #tpu.dimension_semantics<parallel>, #tpu.dimension_semantics<arbitrary>], iteration_bounds = array<i64: 1, 1, 1>, scalar_prefetch = 0 : i64, scratch_operands = 1 : i64, tpu.core_type = #tpu.core_type<tc>, window_params = [{transform_indices = @transform_0, window_bounds = array<i64: 16, 32>}, {transform_indices = @transform_1, window_bounds = array<i64: 32, 96>}, {transform_indices = @transform_2, window_bounds = array<i64: 16, 96>}]} {
    %c0_i32 = arith.constant 0 : i32
    %0 = arith.cmpi eq, %arg2, %c0_i32 : i32
    %1 = arith.extui %0 : i1 to i32
    %c0_i32_0 = arith.constant 0 : i32
    %2 = arith.cmpi ne, %1, %c0_i32_0 : i32
    scf.if %2 {
      %cst_10 = arith.constant 0.000000e+00 : f32
      %12 = vector.broadcast %cst_10 : f32 to vector<16x96xf32>
      %c0_11 = arith.constant 0 : index
      %c0_12 = arith.constant 0 : index
      %13 = vector.load %arg6[%c0_11, %c0_12] : memref<16x96xf32, #tpu.memory_space<vmem>>, vector<16x96xf32>
      tpu.vector_store %arg6[%c0_11, %c0_12], %12 {strides = array<i32>} : memref<16x96xf32, #tpu.memory_space<vmem>>, vector<16x96xf32>,
    } else {
    }
    %c0 = arith.constant 0 : index
    %c0_1 = arith.constant 0 : index
    %3 = vector.load %arg6[%c0, %c0_1] : memref<16x96xf32, #tpu.memory_space<vmem>>, vector<16x96xf32>
    %c0_2 = arith.constant 0 : index
    %c0_3 = arith.constant 0 : index
    %4 = vector.load %arg3[%c0_2, %c0_3] : memref<16x32xbf16, #tpu.memory_space<vmem>>, vector<16x32xbf16>
    %c0_4 = arith.constant 0 : index
    %c0_5 = arith.constant 0 : index
    %5 = vector.load %arg4[%c0_4, %c0_5] : memref<32x96xbf16, #tpu.memory_space<vmem>>, vector<32x96xbf16>
    %cst = arith.constant dense<0.000000e+00> : vector<16x96xf32>
    %6 = tpu.matmul %4, %5, %cst {dimension_numbers = #tpu.dot_dimension_numbers<[1], [0], [0], [1], [0, 0, 1, 1], [], []>} : vector<16x32xbf16>, vector<32x96xbf16>, vector<16x96xf32> -> vector<16x96xf32>
    %7 = arith.addf %3, %6 : vector<16x96xf32>
    %c0_6 = arith.constant 0 : index
    %c0_7 = arith.constant 0 : index
    %8 = vector.load %arg6[%c0_6, %c0_7] : memref<16x96xf32, #tpu.memory_space<vmem>>, vector<16x96xf32>
    tpu.vector_store %arg6[%c0_6, %c0_7], %7 {strides = array<i32>} : memref<16x96xf32, #tpu.memory_space<vmem>>, vector<16x96xf32>,
    %c0_i32_8 = arith.constant 0 : i32
    %9 = arith.cmpi eq, %arg2, %c0_i32_8 : i32
    %10 = arith.extui %9 : i1 to i32
    %c0_i32_9 = arith.constant 0 : i32
    %11 = arith.cmpi ne, %10, %c0_i32_9 : i32
    scf.if %11 {
      %c0_10 = arith.constant 0 : index
      %c0_11 = arith.constant 0 : index
      %12 = vector.load %arg6[%c0_10, %c0_11] : memref<16x96xf32, #tpu.memory_space<vmem>>, vector<16x96xf32>
      %13 = arith.truncf %12 : vector<16x96xf32> to vector<16x96xbf16>
      %c0_12 = arith.constant 0 : index
      %c0_13 = arith.constant 0 : index
      %14 = vector.load %arg5[%c0_12, %c0_13] : memref<16x96xbf16, #tpu.memory_space<vmem>>, vector<16x96xbf16>
      tpu.vector_store %arg5[%c0_12, %c0_13], %13 {strides = array<i32>} : memref<16x96xbf16, #tpu.memory_space<vmem>>, vector<16x96xbf16>,
    } else {
    }
    return
  }
  func.func @transform_0(%arg0: i32, %arg1: i32, %arg2: i32) -> (i32, i32) {
    %c0_i32 = arith.constant 0 : i32
    return %arg0, %arg2 : i32, i32
  }
  func.func @transform_1(%arg0: i32, %arg1: i32, %arg2: i32) -> (i32, i32) {
    %c0_i32 = arith.constant 0 : i32
    return %arg2, %arg1 : i32, i32
  }
  func.func @transform_2(%arg0: i32, %arg1: i32, %arg2: i32) -> (i32, i32) {
    %c0_i32 = arith.constant 0 : i32
    return %arg0, %arg1 : i32, i32
  }
}

module attributes {stable_mosaic.version = 11 : i64} {
  func.func @_attn_kernel(%arg0: i32, %arg1: i32, %arg2: i32, %arg3: memref<1x8x1x4x8xbf16, #tpu.memory_space<vmem>>, %arg4: memref<1x8x1x4x8xbf16, #tpu.memory_space<vmem>>, %arg5: memref<1x8x1x4x8xbf16, #tpu.memory_space<vmem>>, %arg6: memref<1x8x32xbf16, #tpu.memory_space<vmem>>, %arg7: memref<4x8x1xf32, #tpu.memory_space<vmem>>, %arg8: memref<4x8x1xf32, #tpu.memory_space<vmem>>, %arg9: memref<4x8x8xf32, #tpu.memory_space<vmem>>) attributes {dimension_semantics = [#tpu.dimension_semantics<parallel>, #tpu.dimension_semantics<parallel>, #tpu.dimension_semantics<arbitrary>], iteration_bounds = array<i64: 2, 1, 1>, scalar_prefetch = 0 : i64, scratch_operands = 3 : i64, tpu.core_type = #tpu.core_type<tc>, window_params = [{transform_indices = @transform_0, window_bounds = array<i64: 1, 8, 1, 4, 8>}, {transform_indices = @transform_1, window_bounds = array<i64: 1, 8, 1, 4, 8>}, {transform_indices = @transform_2, window_bounds = array<i64: 1, 8, 1, 4, 8>}, {transform_indices = @transform_3, window_bounds = array<i64: 1, 8, 32>}]} {
    %c0_i32 = arith.constant 0 : i32
    %0 = arith.cmpi eq, %arg2, %c0_i32 : i32
    %1 = arith.extui %0 : i1 to i32
    %c0_i32_0 = arith.constant 0 : i32
    %2 = arith.cmpi ne, %1, %c0_i32_0 : i32
    scf.if %2 {
      %cst_150 = arith.constant 0xFF800000 : f32
      %170 = vector.broadcast %cst_150 : f32 to vector<4x8x1xf32>
      %c0_151 = arith.constant 0 : index
      %c0_152 = arith.constant 0 : index
      %c0_153 = arith.constant 0 : index
      %171 = vector.load %arg7[%c0_151, %c0_152, %c0_153] : memref<4x8x1xf32, #tpu.memory_space<vmem>>, vector<4x8x1xf32>
      tpu.vector_store %arg7[%c0_151, %c0_152, %c0_153], %170 {strides = array<i32>} : memref<4x8x1xf32, #tpu.memory_space<vmem>>, vector<4x8x1xf32>,
      %cst_154 = arith.constant 0.000000e+00 : f32
      %172 = vector.broadcast %cst_154 : f32 to vector<4x8x1xf32>
      %c0_155 = arith.constant 0 : index
      %c0_156 = arith.constant 0 : index
      %c0_157 = arith.constant 0 : index
      %173 = vector.load %arg8[%c0_155, %c0_156, %c0_157] : memref<4x8x1xf32, #tpu.memory_space<vmem>>, vector<4x8x1xf32>
      tpu.vector_store %arg8[%c0_155, %c0_156, %c0_157], %172 {strides = array<i32>} : memref<4x8x1xf32, #tpu.memory_space<vmem>>, vector<4x8x1xf32>,
      %cst_158 = arith.constant 0.000000e+00 : f32
      %174 = vector.broadcast %cst_158 : f32 to vector<4x8x8xf32>
      %c0_159 = arith.constant 0 : index
      %c0_160 = arith.constant 0 : index
      %c0_161 = arith.constant 0 : index
      %175 = vector.load %arg9[%c0_159, %c0_160, %c0_161] : memref<4x8x8xf32, #tpu.memory_space<vmem>>, vector<4x8x8xf32>
      tpu.vector_store %arg9[%c0_159, %c0_160, %c0_161], %174 {strides = array<i32>} : memref<4x8x8xf32, #tpu.memory_space<vmem>>, vector<4x8x8xf32>,
    } else {
    }
    %c0 = arith.constant 0 : index
    %c0_1 = arith.constant 0 : index
    %c0_2 = arith.constant 0 : index
    %c0_3 = arith.constant 0 : index
    %c0_4 = arith.constant 0 : index
    %3 = vector.load %arg3[%c0, %c0_1, %c0_2, %c0_3, %c0_4] : memref<1x8x1x4x8xbf16, #tpu.memory_space<vmem>>, vector<1x8x1x1x8xbf16>
    %4 = vector.shape_cast %3 : vector<1x8x1x1x8xbf16> to vector<8x8xbf16>
    %c0_5 = arith.constant 0 : index
    %c0_6 = arith.constant 0 : index
    %c0_7 = arith.constant 0 : index
    %c0_8 = arith.constant 0 : index
    %c0_9 = arith.constant 0 : index
    %5 = vector.load %arg4[%c0_5, %c0_6, %c0_7, %c0_8, %c0_9] : memref<1x8x1x4x8xbf16, #tpu.memory_space<vmem>>, vector<1x8x1x1x8xbf16>
    %6 = vector.shape_cast %5 : vector<1x8x1x1x8xbf16> to vector<8x8xbf16>
    %c0_10 = arith.constant 0 : index
    %c0_11 = arith.constant 0 : index
    %c0_12 = arith.constant 0 : index
    %c0_13 = arith.constant 0 : index
    %c0_14 = arith.constant 0 : index
    %7 = vector.load %arg5[%c0_10, %c0_11, %c0_12, %c0_13, %c0_14] : memref<1x8x1x4x8xbf16, #tpu.memory_space<vmem>>, vector<1x8x1x1x8xbf16>
    %8 = vector.shape_cast %7 : vector<1x8x1x1x8xbf16> to vector<8x8xbf16>
    %cst = arith.constant dense<0.000000e+00> : vector<8x8xf32>
    %9 = tpu.matmul %4, %6, %cst {dimension_numbers = #tpu.dot_dimension_numbers<[1], [1], [0], [0], [0, 0, 1, 0], [], []>} : vector<8x8xbf16>, vector<8x8xbf16>, vector<8x8xf32> -> vector<8x8xf32>
    %cst_15 = arith.constant 0.353553385 : f32
    %10 = vector.broadcast %cst_15 : f32 to vector<8x8xf32>
    %11 = arith.mulf %9, %10 : vector<8x8xf32>
    %c0_16 = arith.constant 0 : index
    %c0_17 = arith.constant 0 : index
    %c0_18 = arith.constant 0 : index
    %12 = vector.load %arg7[%c0_16, %c0_17, %c0_18] : memref<4x8x1xf32, #tpu.memory_space<vmem>>, vector<1x8x1xf32>
    %13 = vector.shape_cast %12 : vector<1x8x1xf32> to vector<8x1xf32>
    %cst_19 = arith.constant dense<0xFF800000> : vector<8xf32>
    %14 = vector.multi_reduction <maximumf>, %11, %cst_19 [1] : vector<8x8xf32> to vector<8xf32>
    %15 = vector.shape_cast %14 : vector<8xf32> to vector<8x1xf32>
    %16 = arith.maximumf %13, %15 : vector<8x1xf32>
    %17 = arith.subf %13, %16 : vector<8x1xf32>
    %18 = math.exp %17 : vector<8x1xf32>
    %19 = vector.broadcast %16 : vector<8x1xf32> to vector<8x8xf32>
    %20 = arith.subf %11, %19 : vector<8x8xf32>
    %21 = math.exp %20 : vector<8x8xf32>
    %c0_20 = arith.constant 0 : index
    %c0_21 = arith.constant 0 : index
    %c0_22 = arith.constant 0 : index
    %22 = vector.load %arg8[%c0_20, %c0_21, %c0_22] : memref<4x8x1xf32, #tpu.memory_space<vmem>>, vector<1x8x1xf32>
    %23 = vector.shape_cast %22 : vector<1x8x1xf32> to vector<8x1xf32>
    %24 = arith.mulf %18, %23 : vector<8x1xf32>
    %cst_23 = arith.constant dense<0.000000e+00> : vector<8xf32>
    %25 = vector.multi_reduction <add>, %21, %cst_23 [1] : vector<8x8xf32> to vector<8xf32>
    %26 = vector.shape_cast %25 : vector<8xf32> to vector<8x1xf32>
    %27 = arith.addf %24, %26 : vector<8x1xf32>
    %c0_24 = arith.constant 0 : index
    %c0_25 = arith.constant 0 : index
    %c0_26 = arith.constant 0 : index
    %28 = vector.load %arg8[%c0_24, %c0_25, %c0_26] : memref<4x8x1xf32, #tpu.memory_space<vmem>>, vector<1x8x1xf32>
    %29 = vector.shape_cast %28 : vector<1x8x1xf32> to vector<8x1xf32>
    %30 = vector.shape_cast %27 : vector<8x1xf32> to vector<1x8x1xf32>
    tpu.vector_store %arg8[%c0_24, %c0_25, %c0_26], %30 {strides = array<i32>} : memref<4x8x1xf32, #tpu.memory_space<vmem>>, vector<1x8x1xf32>,
    %c0_27 = arith.constant 0 : index
    %c0_28 = arith.constant 0 : index
    %c0_29 = arith.constant 0 : index
    %31 = vector.load %arg9[%c0_27, %c0_28, %c0_29] : memref<4x8x8xf32, #tpu.memory_space<vmem>>, vector<1x8x8xf32>
    %32 = vector.shape_cast %31 : vector<1x8x8xf32> to vector<8x8xf32>
    %33 = vector.broadcast %18 : vector<8x1xf32> to vector<8x8xf32>
    %34 = arith.mulf %33, %32 : vector<8x8xf32>
    %35 = arith.truncf %21 : vector<8x8xf32> to vector<8x8xbf16>
    %cst_30 = arith.constant dense<0.000000e+00> : vector<8x8xf32>
    %36 = tpu.matmul %35, %8, %cst_30 {dimension_numbers = #tpu.dot_dimension_numbers<[1], [0], [0], [1], [0, 0, 1, 1], [], []>} : vector<8x8xbf16>, vector<8x8xbf16>, vector<8x8xf32> -> vector<8x8xf32>
    %37 = arith.addf %34, %36 : vector<8x8xf32>
    %c0_31 = arith.constant 0 : index
    %c0_32 = arith.constant 0 : index
    %c0_33 = arith.constant 0 : index
    %38 = vector.load %arg9[%c0_31, %c0_32, %c0_33] : memref<4x8x8xf32, #tpu.memory_space<vmem>>, vector<1x8x8xf32>
    %39 = vector.shape_cast %38 : vector<1x8x8xf32> to vector<8x8xf32>
    %40 = vector.shape_cast %37 : vector<8x8xf32> to vector<1x8x8xf32>
    tpu.vector_store %arg9[%c0_31, %c0_32, %c0_33], %40 {strides = array<i32>} : memref<4x8x8xf32, #tpu.memory_space<vmem>>, vector<1x8x8xf32>,
    %c0_34 = arith.constant 0 : index
    %c0_35 = arith.constant 0 : index
    %c0_36 = arith.constant 0 : index
    %41 = vector.load %arg7[%c0_34, %c0_35, %c0_36] : memref<4x8x1xf32, #tpu.memory_space<vmem>>, vector<1x8x1xf32>
    %42 = vector.shape_cast %41 : vector<1x8x1xf32> to vector<8x1xf32>
    %43 = vector.shape_cast %16 : vector<8x1xf32> to vector<1x8x1xf32>
    tpu.vector_store %arg7[%c0_34, %c0_35, %c0_36], %43 {strides = array<i32>} : memref<4x8x1xf32, #tpu.memory_space<vmem>>, vector<1x8x1xf32>,
    %c0_37 = arith.constant 0 : index
    %c0_38 = arith.constant 0 : index
    %c0_39 = arith.constant 0 : index
    %c1 = arith.constant 1 : index
    %c0_40 = arith.constant 0 : index
    %44 = vector.load %arg3[%c0_37, %c0_38, %c0_39, %c1, %c0_40] : memref<1x8x1x4x8xbf16, #tpu.memory_space<vmem>>, vector<1x8x1x1x8xbf16>
    %45 = vector.shape_cast %44 : vector<1x8x1x1x8xbf16> to vector<8x8xbf16>
    %c0_41 = arith.constant 0 : index
    %c0_42 = arith.constant 0 : index
    %c0_43 = arith.constant 0 : index
    %c1_44 = arith.constant 1 : index
    %c0_45 = arith.constant 0 : index
    %46 = vector.load %arg4[%c0_41, %c0_42, %c0_43, %c1_44, %c0_45] : memref<1x8x1x4x8xbf16, #tpu.memory_space<vmem>>, vector<1x8x1x1x8xbf16>
    %47 = vector.shape_cast %46 : vector<1x8x1x1x8xbf16> to vector<8x8xbf16>
    %c0_46 = arith.constant 0 : index
    %c0_47 = arith.constant 0 : index
    %c0_48 = arith.constant 0 : index
    %c1_49 = arith.constant 1 : index
    %c0_50 = arith.constant 0 : index
    %48 = vector.load %arg5[%c0_46, %c0_47, %c0_48, %c1_49, %c0_50] : memref<1x8x1x4x8xbf16, #tpu.memory_space<vmem>>, vector<1x8x1x1x8xbf16>
    %49 = vector.shape_cast %48 : vector<1x8x1x1x8xbf16> to vector<8x8xbf16>
    %cst_51 = arith.constant dense<0.000000e+00> : vector<8x8xf32>
    %50 = tpu.matmul %45, %47, %cst_51 {dimension_numbers = #tpu.dot_dimension_numbers<[1], [1], [0], [0], [0, 0, 1, 0], [], []>} : vector<8x8xbf16>, vector<8x8xbf16>, vector<8x8xf32> -> vector<8x8xf32>
    %cst_52 = arith.constant 0.353553385 : f32
    %51 = vector.broadcast %cst_52 : f32 to vector<8x8xf32>
    %52 = arith.mulf %50, %51 : vector<8x8xf32>
    %c1_53 = arith.constant 1 : index
    %c0_54 = arith.constant 0 : index
    %c0_55 = arith.constant 0 : index
    %53 = vector.load %arg7[%c1_53, %c0_54, %c0_55] : memref<4x8x1xf32, #tpu.memory_space<vmem>>, vector<1x8x1xf32>
    %54 = vector.shape_cast %53 : vector<1x8x1xf32> to vector<8x1xf32>
    %cst_56 = arith.constant dense<0xFF800000> : vector<8xf32>
    %55 = vector.multi_reduction <maximumf>, %52, %cst_56 [1] : vector<8x8xf32> to vector<8xf32>
    %56 = vector.shape_cast %55 : vector<8xf32> to vector<8x1xf32>
    %57 = arith.maximumf %54, %56 : vector<8x1xf32>
    %58 = arith.subf %54, %57 : vector<8x1xf32>
    %59 = math.exp %58 : vector<8x1xf32>
    %60 = vector.broadcast %57 : vector<8x1xf32> to vector<8x8xf32>
    %61 = arith.subf %52, %60 : vector<8x8xf32>
    %62 = math.exp %61 : vector<8x8xf32>
    %c1_57 = arith.constant 1 : index
    %c0_58 = arith.constant 0 : index
    %c0_59 = arith.constant 0 : index
    %63 = vector.load %arg8[%c1_57, %c0_58, %c0_59] : memref<4x8x1xf32, #tpu.memory_space<vmem>>, vector<1x8x1xf32>
    %64 = vector.shape_cast %63 : vector<1x8x1xf32> to vector<8x1xf32>
    %65 = arith.mulf %59, %64 : vector<8x1xf32>
    %cst_60 = arith.constant dense<0.000000e+00> : vector<8xf32>
    %66 = vector.multi_reduction <add>, %62, %cst_60 [1] : vector<8x8xf32> to vector<8xf32>
    %67 = vector.shape_cast %66 : vector<8xf32> to vector<8x1xf32>
    %68 = arith.addf %65, %67 : vector<8x1xf32>
    %c1_61 = arith.constant 1 : index
    %c0_62 = arith.constant 0 : index
    %c0_63 = arith.constant 0 : index
    %69 = vector.load %arg8[%c1_61, %c0_62, %c0_63] : memref<4x8x1xf32, #tpu.memory_space<vmem>>, vector<1x8x1xf32>
    %70 = vector.shape_cast %69 : vector<1x8x1xf32> to vector<8x1xf32>
    %71 = vector.shape_cast %68 : vector<8x1xf32> to vector<1x8x1xf32>
    tpu.vector_store %arg8[%c1_61, %c0_62, %c0_63], %71 {strides = array<i32>} : memref<4x8x1xf32, #tpu.memory_space<vmem>>, vector<1x8x1xf32>,
    %c1_64 = arith.constant 1 : index
    %c0_65 = arith.constant 0 : index
    %c0_66 = arith.constant 0 : index
    %72 = vector.load %arg9[%c1_64, %c0_65, %c0_66] : memref<4x8x8xf32, #tpu.memory_space<vmem>>, vector<1x8x8xf32>
    %73 = vector.shape_cast %72 : vector<1x8x8xf32> to vector<8x8xf32>
    %74 = vector.broadcast %59 : vector<8x1xf32> to vector<8x8xf32>
    %75 = arith.mulf %74, %73 : vector<8x8xf32>
    %76 = arith.truncf %62 : vector<8x8xf32> to vector<8x8xbf16>
    %cst_67 = arith.constant dense<0.000000e+00> : vector<8x8xf32>
    %77 = tpu.matmul %76, %49, %cst_67 {dimension_numbers = #tpu.dot_dimension_numbers<[1], [0], [0], [1], [0, 0, 1, 1], [], []>} : vector<8x8xbf16>, vector<8x8xbf16>, vector<8x8xf32> -> vector<8x8xf32>
    %78 = arith.addf %75, %77 : vector<8x8xf32>
    %c1_68 = arith.constant 1 : index
    %c0_69 = arith.constant 0 : index
    %c0_70 = arith.constant 0 : index
    %79 = vector.load %arg9[%c1_68, %c0_69, %c0_70] : memref<4x8x8xf32, #tpu.memory_space<vmem>>, vector<1x8x8xf32>
    %80 = vector.shape_cast %79 : vector<1x8x8xf32> to vector<8x8xf32>
    %81 = vector.shape_cast %78 : vector<8x8xf32> to vector<1x8x8xf32>
    tpu.vector_store %arg9[%c1_68, %c0_69, %c0_70], %81 {strides = array<i32>} : memref<4x8x8xf32, #tpu.memory_space<vmem>>, vector<1x8x8xf32>,
    %c1_71 = arith.constant 1 : index
    %c0_72 = arith.constant 0 : index
    %c0_73 = arith.constant 0 : index
    %82 = vector.load %arg7[%c1_71, %c0_72, %c0_73] : memref<4x8x1xf32, #tpu.memory_space<vmem>>, vector<1x8x1xf32>
    %83 = vector.shape_cast %82 : vector<1x8x1xf32> to vector<8x1xf32>
    %84 = vector.shape_cast %57 : vector<8x1xf32> to vector<1x8x1xf32>
    tpu.vector_store %arg7[%c1_71, %c0_72, %c0_73], %84 {strides = array<i32>} : memref<4x8x1xf32, #tpu.memory_space<vmem>>, vector<1x8x1xf32>,
    %c0_74 = arith.constant 0 : index
    %c0_75 = arith.constant 0 : index
    %c0_76 = arith.constant 0 : index
    %c2 = arith.constant 2 : index
    %c0_77 = arith.constant 0 : index
    %85 = vector.load %arg3[%c0_74, %c0_75, %c0_76, %c2, %c0_77] : memref<1x8x1x4x8xbf16, #tpu.memory_space<vmem>>, vector<1x8x1x1x8xbf16>
    %86 = vector.shape_cast %85 : vector<1x8x1x1x8xbf16> to vector<8x8xbf16>
    %c0_78 = arith.constant 0 : index
    %c0_79 = arith.constant 0 : index
    %c0_80 = arith.constant 0 : index
    %c2_81 = arith.constant 2 : index
    %c0_82 = arith.constant 0 : index
    %87 = vector.load %arg4[%c0_78, %c0_79, %c0_80, %c2_81, %c0_82] : memref<1x8x1x4x8xbf16, #tpu.memory_space<vmem>>, vector<1x8x1x1x8xbf16>
    %88 = vector.shape_cast %87 : vector<1x8x1x1x8xbf16> to vector<8x8xbf16>
    %c0_83 = arith.constant 0 : index
    %c0_84 = arith.constant 0 : index
    %c0_85 = arith.constant 0 : index
    %c2_86 = arith.constant 2 : index
    %c0_87 = arith.constant 0 : index
    %89 = vector.load %arg5[%c0_83, %c0_84, %c0_85, %c2_86, %c0_87] : memref<1x8x1x4x8xbf16, #tpu.memory_space<vmem>>, vector<1x8x1x1x8xbf16>
    %90 = vector.shape_cast %89 : vector<1x8x1x1x8xbf16> to vector<8x8xbf16>
    %cst_88 = arith.constant dense<0.000000e+00> : vector<8x8xf32>
    %91 = tpu.matmul %86, %88, %cst_88 {dimension_numbers = #tpu.dot_dimension_numbers<[1], [1], [0], [0], [0, 0, 1, 0], [], []>} : vector<8x8xbf16>, vector<8x8xbf16>, vector<8x8xf32> -> vector<8x8xf32>
    %cst_89 = arith.constant 0.353553385 : f32
    %92 = vector.broadcast %cst_89 : f32 to vector<8x8xf32>
    %93 = arith.mulf %91, %92 : vector<8x8xf32>
    %c2_90 = arith.constant 2 : index
    %c0_91 = arith.constant 0 : index
    %c0_92 = arith.constant 0 : index
    %94 = vector.load %arg7[%c2_90, %c0_91, %c0_92] : memref<4x8x1xf32, #tpu.memory_space<vmem>>, vector<1x8x1xf32>
    %95 = vector.shape_cast %94 : vector<1x8x1xf32> to vector<8x1xf32>
    %cst_93 = arith.constant dense<0xFF800000> : vector<8xf32>
    %96 = vector.multi_reduction <maximumf>, %93, %cst_93 [1] : vector<8x8xf32> to vector<8xf32>
    %97 = vector.shape_cast %96 : vector<8xf32> to vector<8x1xf32>
    %98 = arith.maximumf %95, %97 : vector<8x1xf32>
    %99 = arith.subf %95, %98 : vector<8x1xf32>
    %100 = math.exp %99 : vector<8x1xf32>
    %101 = vector.broadcast %98 : vector<8x1xf32> to vector<8x8xf32>
    %102 = arith.subf %93, %101 : vector<8x8xf32>
    %103 = math.exp %102 : vector<8x8xf32>
    %c2_94 = arith.constant 2 : index
    %c0_95 = arith.constant 0 : index
    %c0_96 = arith.constant 0 : index
    %104 = vector.load %arg8[%c2_94, %c0_95, %c0_96] : memref<4x8x1xf32, #tpu.memory_space<vmem>>, vector<1x8x1xf32>
    %105 = vector.shape_cast %104 : vector<1x8x1xf32> to vector<8x1xf32>
    %106 = arith.mulf %100, %105 : vector<8x1xf32>
    %cst_97 = arith.constant dense<0.000000e+00> : vector<8xf32>
    %107 = vector.multi_reduction <add>, %103, %cst_97 [1] : vector<8x8xf32> to vector<8xf32>
    %108 = vector.shape_cast %107 : vector<8xf32> to vector<8x1xf32>
    %109 = arith.addf %106, %108 : vector<8x1xf32>
    %c2_98 = arith.constant 2 : index
    %c0_99 = arith.constant 0 : index
    %c0_100 = arith.constant 0 : index
    %110 = vector.load %arg8[%c2_98, %c0_99, %c0_100] : memref<4x8x1xf32, #tpu.memory_space<vmem>>, vector<1x8x1xf32>
    %111 = vector.shape_cast %110 : vector<1x8x1xf32> to vector<8x1xf32>
    %112 = vector.shape_cast %109 : vector<8x1xf32> to vector<1x8x1xf32>
    tpu.vector_store %arg8[%c2_98, %c0_99, %c0_100], %112 {strides = array<i32>} : memref<4x8x1xf32, #tpu.memory_space<vmem>>, vector<1x8x1xf32>,
    %c2_101 = arith.constant 2 : index
    %c0_102 = arith.constant 0 : index
    %c0_103 = arith.constant 0 : index
    %113 = vector.load %arg9[%c2_101, %c0_102, %c0_103] : memref<4x8x8xf32, #tpu.memory_space<vmem>>, vector<1x8x8xf32>
    %114 = vector.shape_cast %113 : vector<1x8x8xf32> to vector<8x8xf32>
    %115 = vector.broadcast %100 : vector<8x1xf32> to vector<8x8xf32>
    %116 = arith.mulf %115, %114 : vector<8x8xf32>
    %117 = arith.truncf %103 : vector<8x8xf32> to vector<8x8xbf16>
    %cst_104 = arith.constant dense<0.000000e+00> : vector<8x8xf32>
    %118 = tpu.matmul %117, %90, %cst_104 {dimension_numbers = #tpu.dot_dimension_numbers<[1], [0], [0], [1], [0, 0, 1, 1], [], []>} : vector<8x8xbf16>, vector<8x8xbf16>, vector<8x8xf32> -> vector<8x8xf32>
    %119 = arith.addf %116, %118 : vector<8x8xf32>
    %c2_105 = arith.constant 2 : index
    %c0_106 = arith.constant 0 : index
    %c0_107 = arith.constant 0 : index
    %120 = vector.load %arg9[%c2_105, %c0_106, %c0_107] : memref<4x8x8xf32, #tpu.memory_space<vmem>>, vector<1x8x8xf32>
    %121 = vector.shape_cast %120 : vector<1x8x8xf32> to vector<8x8xf32>
    %122 = vector.shape_cast %119 : vector<8x8xf32> to vector<1x8x8xf32>
    tpu.vector_store %arg9[%c2_105, %c0_106, %c0_107], %122 {strides = array<i32>} : memref<4x8x8xf32, #tpu.memory_space<vmem>>, vector<1x8x8xf32>,
    %c2_108 = arith.constant 2 : index
    %c0_109 = arith.constant 0 : index
    %c0_110 = arith.constant 0 : index
    %123 = vector.load %arg7[%c2_108, %c0_109, %c0_110] : memref<4x8x1xf32, #tpu.memory_space<vmem>>, vector<1x8x1xf32>
    %124 = vector.shape_cast %123 : vector<1x8x1xf32> to vector<8x1xf32>
    %125 = vector.shape_cast %98 : vector<8x1xf32> to vector<1x8x1xf32>
    tpu.vector_store %arg7[%c2_108, %c0_109, %c0_110], %125 {strides = array<i32>} : memref<4x8x1xf32, #tpu.memory_space<vmem>>, vector<1x8x1xf32>,
    %c0_111 = arith.constant 0 : index
    %c0_112 = arith.constant 0 : index
    %c0_113 = arith.constant 0 : index
    %c3 = arith.constant 3 : index
    %c0_114 = arith.constant 0 : index
    %126 = vector.load %arg3[%c0_111, %c0_112, %c0_113, %c3, %c0_114] : memref<1x8x1x4x8xbf16, #tpu.memory_space<vmem>>, vector<1x8x1x1x8xbf16>
    %127 = vector.shape_cast %126 : vector<1x8x1x1x8xbf16> to vector<8x8xbf16>
    %c0_115 = arith.constant 0 : index
    %c0_116 = arith.constant 0 : index
    %c0_117 = arith.constant 0 : index
    %c3_118 = arith.constant 3 : index
    %c0_119 = arith.constant 0 : index
    %128 = vector.load %arg4[%c0_115, %c0_116, %c0_117, %c3_118, %c0_119] : memref<1x8x1x4x8xbf16, #tpu.memory_space<vmem>>, vector<1x8x1x1x8xbf16>
    %129 = vector.shape_cast %128 : vector<1x8x1x1x8xbf16> to vector<8x8xbf16>
    %c0_120 = arith.constant 0 : index
    %c0_121 = arith.constant 0 : index
    %c0_122 = arith.constant 0 : index
    %c3_123 = arith.constant 3 : index
    %c0_124 = arith.constant 0 : index
    %130 = vector.load %arg5[%c0_120, %c0_121, %c0_122, %c3_123, %c0_124] : memref<1x8x1x4x8xbf16, #tpu.memory_space<vmem>>, vector<1x8x1x1x8xbf16>
    %131 = vector.shape_cast %130 : vector<1x8x1x1x8xbf16> to vector<8x8xbf16>
    %cst_125 = arith.constant dense<0.000000e+00> : vector<8x8xf32>
    %132 = tpu.matmul %127, %129, %cst_125 {dimension_numbers = #tpu.dot_dimension_numbers<[1], [1], [0], [0], [0, 0, 1, 0], [], []>} : vector<8x8xbf16>, vector<8x8xbf16>, vector<8x8xf32> -> vector<8x8xf32>
    %cst_126 = arith.constant 0.353553385 : f32
    %133 = vector.broadcast %cst_126 : f32 to vector<8x8xf32>
    %134 = arith.mulf %132, %133 : vector<8x8xf32>
    %c3_127 = arith.constant 3 : index
    %c0_128 = arith.constant 0 : index
    %c0_129 = arith.constant 0 : index
    %135 = vector.load %arg7[%c3_127, %c0_128, %c0_129] : memref<4x8x1xf32, #tpu.memory_space<vmem>>, vector<1x8x1xf32>
    %136 = vector.shape_cast %135 : vector<1x8x1xf32> to vector<8x1xf32>
    %cst_130 = arith.constant dense<0xFF800000> : vector<8xf32>
    %137 = vector.multi_reduction <maximumf>, %134, %cst_130 [1] : vector<8x8xf32> to vector<8xf32>
    %138 = vector.shape_cast %137 : vector<8xf32> to vector<8x1xf32>
    %139 = arith.maximumf %136, %138 : vector<8x1xf32>
    %140 = arith.subf %136, %139 : vector<8x1xf32>
    %141 = math.exp %140 : vector<8x1xf32>
    %142 = vector.broadcast %139 : vector<8x1xf32> to vector<8x8xf32>
    %143 = arith.subf %134, %142 : vector<8x8xf32>
    %144 = math.exp %143 : vector<8x8xf32>
    %c3_131 = arith.constant 3 : index
    %c0_132 = arith.constant 0 : index
    %c0_133 = arith.constant 0 : index
    %145 = vector.load %arg8[%c3_131, %c0_132, %c0_133] : memref<4x8x1xf32, #tpu.memory_space<vmem>>, vector<1x8x1xf32>
    %146 = vector.shape_cast %145 : vector<1x8x1xf32> to vector<8x1xf32>
    %147 = arith.mulf %141, %146 : vector<8x1xf32>
    %cst_134 = arith.constant dense<0.000000e+00> : vector<8xf32>
    %148 = vector.multi_reduction <add>, %144, %cst_134 [1] : vector<8x8xf32> to vector<8xf32>
    %149 = vector.shape_cast %148 : vector<8xf32> to vector<8x1xf32>
    %150 = arith.addf %147, %149 : vector<8x1xf32>
    %c3_135 = arith.constant 3 : index
    %c0_136 = arith.constant 0 : index
    %c0_137 = arith.constant 0 : index
    %151 = vector.load %arg8[%c3_135, %c0_136, %c0_137] : memref<4x8x1xf32, #tpu.memory_space<vmem>>, vector<1x8x1xf32>
    %152 = vector.shape_cast %151 : vector<1x8x1xf32> to vector<8x1xf32>
    %153 = vector.shape_cast %150 : vector<8x1xf32> to vector<1x8x1xf32>
    tpu.vector_store %arg8[%c3_135, %c0_136, %c0_137], %153 {strides = array<i32>} : memref<4x8x1xf32, #tpu.memory_space<vmem>>, vector<1x8x1xf32>,
    %c3_138 = arith.constant 3 : index
    %c0_139 = arith.constant 0 : index
    %c0_140 = arith.constant 0 : index
    %154 = vector.load %arg9[%c3_138, %c0_139, %c0_140] : memref<4x8x8xf32, #tpu.memory_space<vmem>>, vector<1x8x8xf32>
    %155 = vector.shape_cast %154 : vector<1x8x8xf32> to vector<8x8xf32>
    %156 = vector.broadcast %141 : vector<8x1xf32> to vector<8x8xf32>
    %157 = arith.mulf %156, %155 : vector<8x8xf32>
    %158 = arith.truncf %144 : vector<8x8xf32> to vector<8x8xbf16>
    %cst_141 = arith.constant dense<0.000000e+00> : vector<8x8xf32>
    %159 = tpu.matmul %158, %131, %cst_141 {dimension_numbers = #tpu.dot_dimension_numbers<[1], [0], [0], [1], [0, 0, 1, 1], [], []>} : vector<8x8xbf16>, vector<8x8xbf16>, vector<8x8xf32> -> vector<8x8xf32>
    %160 = arith.addf %157, %159 : vector<8x8xf32>
    %c3_142 = arith.constant 3 : index
    %c0_143 = arith.constant 0 : index
    %c0_144 = arith.constant 0 : index
    %161 = vector.load %arg9[%c3_142, %c0_143, %c0_144] : memref<4x8x8xf32, #tpu.memory_space<vmem>>, vector<1x8x8xf32>
    %162 = vector.shape_cast %161 : vector<1x8x8xf32> to vector<8x8xf32>
    %163 = vector.shape_cast %160 : vector<8x8xf32> to vector<1x8x8xf32>
    tpu.vector_store %arg9[%c3_142, %c0_143, %c0_144], %163 {strides = array<i32>} : memref<4x8x8xf32, #tpu.memory_space<vmem>>, vector<1x8x8xf32>,
    %c3_145 = arith.constant 3 : index
    %c0_146 = arith.constant 0 : index
    %c0_147 = arith.constant 0 : index
    %164 = vector.load %arg7[%c3_145, %c0_146, %c0_147] : memref<4x8x1xf32, #tpu.memory_space<vmem>>, vector<1x8x1xf32>
    %165 = vector.shape_cast %164 : vector<1x8x1xf32> to vector<8x1xf32>
    %166 = vector.shape_cast %139 : vector<8x1xf32> to vector<1x8x1xf32>
    tpu.vector_store %arg7[%c3_145, %c0_146, %c0_147], %166 {strides = array<i32>} : memref<4x8x1xf32, #tpu.memory_space<vmem>>, vector<1x8x1xf32>,
    %c0_i32_148 = arith.constant 0 : i32
    %167 = arith.cmpi eq, %arg2, %c0_i32_148 : i32
    %168 = arith.extui %167 : i1 to i32
    %c0_i32_149 = arith.constant 0 : i32
    %169 = arith.cmpi ne, %168, %c0_i32_149 : i32
    scf.if %169 {
      %c0_150 = arith.constant 0 : index
      %c0_151 = arith.constant 0 : index
      %c0_152 = arith.constant 0 : index
      %170 = vector.load %arg8[%c0_150, %c0_151, %c0_152] : memref<4x8x1xf32, #tpu.memory_space<vmem>>, vector<1x8x1xf32>
      %171 = vector.shape_cast %170 : vector<1x8x1xf32> to vector<8x1xf32>
      %172 = tpu.reciprocal %171 {approx = true} : vector<8x1xf32> -> vector<8x1xf32>
      %c0_153 = arith.constant 0 : index
      %c0_154 = arith.constant 0 : index
      %c0_155 = arith.constant 0 : index
      %173 = vector.load %arg9[%c0_153, %c0_154, %c0_155] : memref<4x8x8xf32, #tpu.memory_space<vmem>>, vector<1x8x8xf32>
      %174 = vector.shape_cast %173 : vector<1x8x8xf32> to vector<8x8xf32>
      %175 = vector.broadcast %172 : vector<8x1xf32> to vector<8x8xf32>
      %176 = arith.mulf %174, %175 : vector<8x8xf32>
      %c1_156 = arith.constant 1 : index
      %c0_157 = arith.constant 0 : index
      %c0_158 = arith.constant 0 : index
      %177 = vector.load %arg8[%c1_156, %c0_157, %c0_158] : memref<4x8x1xf32, #tpu.memory_space<vmem>>, vector<1x8x1xf32>
      %178 = vector.shape_cast %177 : vector<1x8x1xf32> to vector<8x1xf32>
      %179 = tpu.reciprocal %178 {approx = true} : vector<8x1xf32> -> vector<8x1xf32>
      %c1_159 = arith.constant 1 : index
      %c0_160 = arith.constant 0 : index
      %c0_161 = arith.constant 0 : index
      %180 = vector.load %arg9[%c1_159, %c0_160, %c0_161] : memref<4x8x8xf32, #tpu.memory_space<vmem>>, vector<1x8x8xf32>
      %181 = vector.shape_cast %180 : vector<1x8x8xf32> to vector<8x8xf32>
      %182 = vector.broadcast %179 : vector<8x1xf32> to vector<8x8xf32>
      %183 = arith.mulf %181, %182 : vector<8x8xf32>
      %c2_162 = arith.constant 2 : index
      %c0_163 = arith.constant 0 : index
      %c0_164 = arith.constant 0 : index
      %184 = vector.load %arg8[%c2_162, %c0_163, %c0_164] : memref<4x8x1xf32, #tpu.memory_space<vmem>>, vector<1x8x1xf32>
      %185 = vector.shape_cast %184 : vector<1x8x1xf32> to vector<8x1xf32>
      %186 = tpu.reciprocal %185 {approx = true} : vector<8x1xf32> -> vector<8x1xf32>
      %c2_165 = arith.constant 2 : index
      %c0_166 = arith.constant 0 : index
      %c0_167 = arith.constant 0 : index
      %187 = vector.load %arg9[%c2_165, %c0_166, %c0_167] : memref<4x8x8xf32, #tpu.memory_space<vmem>>, vector<1x8x8xf32>
      %188 = vector.shape_cast %187 : vector<1x8x8xf32> to vector<8x8xf32>
      %189 = vector.broadcast %186 : vector<8x1xf32> to vector<8x8xf32>
      %190 = arith.mulf %188, %189 : vector<8x8xf32>
      %c3_168 = arith.constant 3 : index
      %c0_169 = arith.constant 0 : index
      %c0_170 = arith.constant 0 : index
      %191 = vector.load %arg8[%c3_168, %c0_169, %c0_170] : memref<4x8x1xf32, #tpu.memory_space<vmem>>, vector<1x8x1xf32>
      %192 = vector.shape_cast %191 : vector<1x8x1xf32> to vector<8x1xf32>
      %193 = tpu.reciprocal %192 {approx = true} : vector<8x1xf32> -> vector<8x1xf32>
      %c3_171 = arith.constant 3 : index
      %c0_172 = arith.constant 0 : index
      %c0_173 = arith.constant 0 : index
      %194 = vector.load %arg9[%c3_171, %c0_172, %c0_173] : memref<4x8x8xf32, #tpu.memory_space<vmem>>, vector<1x8x8xf32>
      %195 = vector.shape_cast %194 : vector<1x8x8xf32> to vector<8x8xf32>
      %196 = vector.broadcast %193 : vector<8x1xf32> to vector<8x8xf32>
      %197 = arith.mulf %195, %196 : vector<8x8xf32>
      %198 = tpu.concatenate %176, %183, %190, %197 in 1 : vector<8x8xf32>, vector<8x8xf32>, vector<8x8xf32>, vector<8x8xf32> -> vector<8x32xf32>
      %199 = arith.truncf %198 : vector<8x32xf32> to vector<8x32xbf16>
      %c0_174 = arith.constant 0 : index
      %c0_175 = arith.constant 0 : index
      %c0_176 = arith.constant 0 : index
      %200 = vector.load %arg6[%c0_174, %c0_175, %c0_176] : memref<1x8x32xbf16, #tpu.memory_space<vmem>>, vector<1x8x32xbf16>
      %201 = vector.shape_cast %200 : vector<1x8x32xbf16> to vector<8x32xbf16>
      %202 = vector.shape_cast %199 : vector<8x32xbf16> to vector<1x8x32xbf16>
      tpu.vector_store %arg6[%c0_174, %c0_175, %c0_176], %202 {strides = array<i32>} : memref<1x8x32xbf16, #tpu.memory_space<vmem>>, vector<1x8x32xbf16>,
    } else {
    }
    return
  }
  func.func @transform_0(%arg0: i32, %arg1: i32, %arg2: i32) -> (i32, i32, i32, i32, i32) {
    %c0_i32 = arith.constant 0 : i32
    %c0_i32_0 = arith.constant 0 : i32
    %c0_i32_1 = arith.constant 0 : i32
    %c0_i32_2 = arith.constant 0 : i32
    return %arg0, %arg1, %c0_i32, %c0_i32_0, %c0_i32_1 : i32, i32, i32, i32, i32
  }
  func.func @transform_1(%arg0: i32, %arg1: i32, %arg2: i32) -> (i32, i32, i32, i32, i32) {
    %c1_i32 = arith.constant 1 : i32
    %c0_i32 = arith.constant 0 : i32
    %c0_i32_0 = arith.constant 0 : i32
    %c0_i32_1 = arith.constant 0 : i32
    return %arg0, %arg2, %c1_i32, %c0_i32, %c0_i32_0 : i32, i32, i32, i32, i32
  }
  func.func @transform_2(%arg0: i32, %arg1: i32, %arg2: i32) -> (i32, i32, i32, i32, i32) {
    %c2_i32 = arith.constant 2 : i32
    %c0_i32 = arith.constant 0 : i32
    %c0_i32_0 = arith.constant 0 : i32
    %c0_i32_1 = arith.constant 0 : i32
    return %arg0, %arg2, %c2_i32, %c0_i32, %c0_i32_0 : i32, i32, i32, i32, i32
  }
  func.func @transform_3(%arg0: i32, %arg1: i32, %arg2: i32) -> (i32, i32, i32) {
    %c0_i32 = arith.constant 0 : i32
    %c0_i32_0 = arith.constant 0 : i32
    return %arg0, %arg1, %c0_i32 : i32, i32, i32
  }
}

module attributes {stable_mosaic.version = 11 : i64} {
  func.func @kernel(%arg0: i32, %arg1: i32, %arg2: i32, %arg3: memref<16x32xbf16, #tpu.memory_space<vmem>>, %arg4: memref<32x32xbf16, #tpu.memory_space<vmem>>, %arg5: memref<1x32xf32, #tpu.memory_space<vmem>>, %arg6: memref<1x32xf32, #tpu.memory_space<vmem>>, %arg7: memref<16x32xf32, #tpu.memory_space<vmem>>, %arg8: memref<16x32xf32, #tpu.memory_space<vmem>>, %arg9: memref<16x32xf32, #tpu.memory_space<vmem>>) attributes {dimension_semantics = [#tpu.dimension_semantics<parallel>, #tpu.dimension_semantics<parallel>, #tpu.dimension_semantics<arbitrary>], iteration_bounds = array<i64: 1, 1, 1>, scalar_prefetch = 0 : i64, scratch_operands = 1 : i64, tpu.core_type = #tpu.core_type<tc>, window_params = [{transform_indices = @transform_0, window_bounds = array<i64: 16, 32>}, {transform_indices = @transform_1, window_bounds = array<i64: 32, 32>}, {transform_indices = @transform_2, window_bounds = array<i64: 1, 32>}, {transform_indices = @transform_3, window_bounds = array<i64: 1, 32>}, {transform_indices = @transform_4, window_bounds = array<i64: 16, 32>}, {transform_indices = @transform_5, window_bounds = array<i64: 16, 32>}]} {
    %c0_i32 = arith.constant 0 : i32
    %0 = arith.cmpi eq, %arg2, %c0_i32 : i32
    %1 = arith.extui %0 : i1 to i32
    %c0_i32_0 = arith.constant 0 : i32
    %2 = arith.cmpi ne, %1, %c0_i32_0 : i32
    scf.if %2 {
      %cst_10 = arith.constant 0.000000e+00 : f32
      %12 = vector.broadcast %cst_10 : f32 to vector<16x32xf32>
      %c0_11 = arith.constant 0 : index
      %c0_12 = arith.constant 0 : index
      %13 = vector.load %arg9[%c0_11, %c0_12] : memref<16x32xf32, #tpu.memory_space<vmem>>, vector<16x32xf32>
      tpu.vector_store %arg9[%c0_11, %c0_12], %12 {strides = array<i32>} : memref<16x32xf32, #tpu.memory_space<vmem>>, vector<16x32xf32>,
    } else {
    }
    %c0 = arith.constant 0 : index
    %c0_1 = arith.constant 0 : index
    %3 = vector.load %arg9[%c0, %c0_1] : memref<16x32xf32, #tpu.memory_space<vmem>>, vector<16x32xf32>
    %c0_2 = arith.constant 0 : index
    %c0_3 = arith.constant 0 : index
    %4 = vector.load %arg3[%c0_2, %c0_3] : memref<16x32xbf16, #tpu.memory_space<vmem>>, vector<16x32xbf16>
    %c0_4 = arith.constant 0 : index
    %c0_5 = arith.constant 0 : index
    %5 = vector.load %arg4[%c0_4, %c0_5] : memref<32x32xbf16, #tpu.memory_space<vmem>>, vector<32x32xbf16>
    %cst = arith.constant dense<0.000000e+00> : vector<16x32xf32>
    %6 = tpu.matmul %4, %5, %cst {dimension_numbers = #tpu.dot_dimension_numbers<[1], [0], [0], [1], [0, 0, 1, 1], [], []>} : vector<16x32xbf16>, vector<32x32xbf16>, vector<16x32xf32> -> vector<16x32xf32>
    %7 = arith.addf %3, %6 : vector<16x32xf32>
    %c0_6 = arith.constant 0 : index
    %c0_7 = arith.constant 0 : index
    %8 = vector.load %arg9[%c0_6, %c0_7] : memref<16x32xf32, #tpu.memory_space<vmem>>, vector<16x32xf32>
    tpu.vector_store %arg9[%c0_6, %c0_7], %7 {strides = array<i32>} : memref<16x32xf32, #tpu.memory_space<vmem>>, vector<16x32xf32>,
    %c0_i32_8 = arith.constant 0 : i32
    %9 = arith.cmpi eq, %arg2, %c0_i32_8 : i32
    %10 = arith.extui %9 : i1 to i32
    %c0_i32_9 = arith.constant 0 : i32
    %11 = arith.cmpi ne, %10, %c0_i32_9 : i32
    scf.if %11 {
      %c0_10 = arith.constant 0 : index
      %c0_11 = arith.constant 0 : index
      %12 = vector.load %arg9[%c0_10, %c0_11] : memref<16x32xf32, #tpu.memory_space<vmem>>, vector<16x32xf32>
      %c0_12 = arith.constant 0 : index
      %c0_13 = arith.constant 0 : index
      %13 = vector.load %arg5[%c0_12, %c0_13] : memref<1x32xf32, #tpu.memory_space<vmem>>, vector<1x32xf32>
      %14 = vector.broadcast %13 : vector<1x32xf32> to vector<16x32xf32>
      %15 = arith.addf %12, %14 : vector<16x32xf32>
      %c0_14 = arith.constant 0 : index
      %c0_15 = arith.constant 0 : index
      %16 = vector.load %arg6[%c0_14, %c0_15] : memref<1x32xf32, #tpu.memory_space<vmem>>, vector<1x32xf32>
      %17 = vector.broadcast %16 : vector<1x32xf32> to vector<16x32xf32>
      %18 = arith.mulf %15, %17 : vector<16x32xf32>
      %c0_16 = arith.constant 0 : index
      %c0_17 = arith.constant 0 : index
      %19 = vector.load %arg7[%c0_16, %c0_17] : memref<16x32xf32, #tpu.memory_space<vmem>>, vector<16x32xf32>
      %20 = arith.addf %18, %19 : vector<16x32xf32>
      %c0_18 = arith.constant 0 : index
      %c0_19 = arith.constant 0 : index
      %21 = vector.load %arg8[%c0_18, %c0_19] : memref<16x32xf32, #tpu.memory_space<vmem>>, vector<16x32xf32>
      tpu.vector_store %arg8[%c0_18, %c0_19], %20 {strides = array<i32>} : memref<16x32xf32, #tpu.memory_space<vmem>>, vector<16x32xf32>,
    } else {
    }
    return
  }
  func.func @transform_0(%arg0: i32, %arg1: i32, %arg2: i32) -> (i32, i32) {
    %c0_i32 = arith.constant 0 : i32
    return %arg0, %arg2 : i32, i32
  }
  func.func @transform_1(%arg0: i32, %arg1: i32, %arg2: i32) -> (i32, i32) {
    %c0_i32 = arith.constant 0 : i32
    return %arg2, %arg1 : i32, i32
  }
  func.func @transform_2(%arg0: i32, %arg1: i32, %arg2: i32) -> (i32, i32) {
    %c0_i32 = arith.constant 0 : i32
    %c0_i32_0 = arith.constant 0 : i32
    return %c0_i32, %arg1 : i32, i32
  }
  func.func @transform_3(%arg0: i32, %arg1: i32, %arg2: i32) -> (i32, i32) {
    %c0_i32 = arith.constant 0 : i32
    %c0_i32_0 = arith.constant 0 : i32
    return %c0_i32, %arg1 : i32, i32
  }
  func.func @transform_4(%arg0: i32, %arg1: i32, %arg2: i32) -> (i32, i32) {
    %c0_i32 = arith.constant 0 : i32
    return %arg0, %arg1 : i32, i32
  }
  func.func @transform_5(%arg0: i32, %arg1: i32, %arg2: i32) -> (i32, i32) {
    %c0_i32 = arith.constant 0 : i32
    return %arg0, %arg1 : i32, i32
  }
}

module attributes {stable_mosaic.version = 11 : i64} {
  func.func @kernel(%arg0: i32, %arg1: i32, %arg2: i32, %arg3: memref<16x32xbf16, #tpu.memory_space<vmem>>, %arg4: memref<32x128xbf16, #tpu.memory_space<vmem>>, %arg5: memref<1x128xf32, #tpu.memory_space<vmem>>, %arg6: memref<16x128xbf16, #tpu.memory_space<vmem>>, %arg7: memref<16x128xf32, #tpu.memory_space<vmem>>) attributes {dimension_semantics = [#tpu.dimension_semantics<parallel>, #tpu.dimension_semantics<parallel>, #tpu.dimension_semantics<arbitrary>], iteration_bounds = array<i64: 1, 1, 1>, scalar_prefetch = 0 : i64, scratch_operands = 1 : i64, tpu.core_type = #tpu.core_type<tc>, window_params = [{transform_indices = @transform_0, window_bounds = array<i64: 16, 32>}, {transform_indices = @transform_1, window_bounds = array<i64: 32, 128>}, {transform_indices = @transform_2, window_bounds = array<i64: 1, 128>}, {transform_indices = @transform_3, window_bounds = array<i64: 16, 128>}]} {
    %c0_i32 = arith.constant 0 : i32
    %0 = arith.cmpi eq, %arg2, %c0_i32 : i32
    %1 = arith.extui %0 : i1 to i32
    %c0_i32_0 = arith.constant 0 : i32
    %2 = arith.cmpi ne, %1, %c0_i32_0 : i32
    scf.if %2 {
      %cst_10 = arith.constant 0.000000e+00 : f32
      %12 = vector.broadcast %cst_10 : f32 to vector<16x128xf32>
      %c0_11 = arith.constant 0 : index
      %c0_12 = arith.constant 0 : index
      %13 = vector.load %arg7[%c0_11, %c0_12] : memref<16x128xf32, #tpu.memory_space<vmem>>, vector<16x128xf32>
      tpu.vector_store %arg7[%c0_11, %c0_12], %12 {strides = array<i32>} : memref<16x128xf32, #tpu.memory_space<vmem>>, vector<16x128xf32>,
    } else {
    }
    %c0 = arith.constant 0 : index
    %c0_1 = arith.constant 0 : index
    %3 = vector.load %arg7[%c0, %c0_1] : memref<16x128xf32, #tpu.memory_space<vmem>>, vector<16x128xf32>
    %c0_2 = arith.constant 0 : index
    %c0_3 = arith.constant 0 : index
    %4 = vector.load %arg3[%c0_2, %c0_3] : memref<16x32xbf16, #tpu.memory_space<vmem>>, vector<16x32xbf16>
    %c0_4 = arith.constant 0 : index
    %c0_5 = arith.constant 0 : index
    %5 = vector.load %arg4[%c0_4, %c0_5] : memref<32x128xbf16, #tpu.memory_space<vmem>>, vector<32x128xbf16>
    %cst = arith.constant dense<0.000000e+00> : vector<16x128xf32>
    %6 = tpu.matmul %4, %5, %cst {dimension_numbers = #tpu.dot_dimension_numbers<[1], [0], [0], [1], [0, 0, 1, 1], [], []>} : vector<16x32xbf16>, vector<32x128xbf16>, vector<16x128xf32> -> vector<16x128xf32>
    %7 = arith.addf %3, %6 : vector<16x128xf32>
    %c0_6 = arith.constant 0 : index
    %c0_7 = arith.constant 0 : index
    %8 = vector.load %arg7[%c0_6, %c0_7] : memref<16x128xf32, #tpu.memory_space<vmem>>, vector<16x128xf32>
    tpu.vector_store %arg7[%c0_6, %c0_7], %7 {strides = array<i32>} : memref<16x128xf32, #tpu.memory_space<vmem>>, vector<16x128xf32>,
    %c0_i32_8 = arith.constant 0 : i32
    %9 = arith.cmpi eq, %arg2, %c0_i32_8 : i32
    %10 = arith.extui %9 : i1 to i32
    %c0_i32_9 = arith.constant 0 : i32
    %11 = arith.cmpi ne, %10, %c0_i32_9 : i32
    scf.if %11 {
      %c0_10 = arith.constant 0 : index
      %c0_11 = arith.constant 0 : index
      %12 = vector.load %arg7[%c0_10, %c0_11] : memref<16x128xf32, #tpu.memory_space<vmem>>, vector<16x128xf32>
      %c0_12 = arith.constant 0 : index
      %c0_13 = arith.constant 0 : index
      %13 = vector.load %arg5[%c0_12, %c0_13] : memref<1x128xf32, #tpu.memory_space<vmem>>, vector<1x128xf32>
      %14 = vector.broadcast %13 : vector<1x128xf32> to vector<16x128xf32>
      %15 = arith.addf %12, %14 : vector<16x128xf32>
      %cst_14 = arith.constant 5.000000e-01 : f32
      %16 = vector.broadcast %cst_14 : f32 to vector<16x128xf32>
      %17 = arith.mulf %16, %15 : vector<16x128xf32>
      %cst_15 = arith.constant 4.471500e-02 : f32
      %18 = vector.broadcast %cst_15 : f32 to vector<16x128xf32>
      %19 = arith.mulf %18, %15 : vector<16x128xf32>
      %20 = arith.mulf %19, %15 : vector<16x128xf32>
      %21 = arith.mulf %20, %15 : vector<16x128xf32>
      %22 = arith.addf %15, %21 : vector<16x128xf32>
      %cst_16 = arith.constant 0.797884583 : f32
      %23 = vector.broadcast %cst_16 : f32 to vector<16x128xf32>
      %24 = arith.mulf %23, %22 : vector<16x128xf32>
      %25 = math.tanh %24 : vector<16x128xf32>
      %cst_17 = arith.constant 1.000000e+00 : f32
      %26 = vector.broadcast %cst_17 : f32 to vector<16x128xf32>
      %27 = arith.addf %26, %25 : vector<16x128xf32>
      %28 = arith.mulf %17, %27 : vector<16x128xf32>
      %29 = arith.truncf %28 : vector<16x128xf32> to vector<16x128xbf16>
      %c0_18 = arith.constant 0 : index
      %c0_19 = arith.constant 0 : index
      %30 = vector.load %arg6[%c0_18, %c0_19] : memref<16x128xbf16, #tpu.memory_space<vmem>>, vector<16x128xbf16>
      tpu.vector_store %arg6[%c0_18, %c0_19], %29 {strides = array<i32>} : memref<16x128xbf16, #tpu.memory_space<vmem>>, vector<16x128xbf16>,
    } else {
    }
    return
  }
  func.func @transform_0(%arg0: i32, %arg1: i32, %arg2: i32) -> (i32, i32) {
    %c0_i32 = arith.constant 0 : i32
    return %arg0, %arg2 : i32, i32
  }
  func.func @transform_1(%arg0: i32, %arg1: i32, %arg2: i32) -> (i32, i32) {
    %c0_i32 = arith.constant 0 : i32
    return %arg2, %arg1 : i32, i32
  }
  func.func @transform_2(%arg0: i32, %arg1: i32, %arg2: i32) -> (i32, i32) {
    %c0_i32 = arith.constant 0 : i32
    %c0_i32_0 = arith.constant 0 : i32
    return %c0_i32, %arg1 : i32, i32
  }
  func.func @transform_3(%arg0: i32, %arg1: i32, %arg2: i32) -> (i32, i32) {
    %c0_i32 = arith.constant 0 : i32
    return %arg0, %arg1 : i32, i32
  }
}

module attributes {stable_mosaic.version = 11 : i64} {
  func.func @kernel(%arg0: i32, %arg1: i32, %arg2: i32, %arg3: memref<16x128xbf16, #tpu.memory_space<vmem>>, %arg4: memref<128x32xbf16, #tpu.memory_space<vmem>>, %arg5: memref<1x32xf32, #tpu.memory_space<vmem>>, %arg6: memref<1x32xf32, #tpu.memory_space<vmem>>, %arg7: memref<16x32xf32, #tpu.memory_space<vmem>>, %arg8: memref<16x32xf32, #tpu.memory_space<vmem>>, %arg9: memref<16x32xf32, #tpu.memory_space<vmem>>) attributes {dimension_semantics = [#tpu.dimension_semantics<parallel>, #tpu.dimension_semantics<parallel>, #tpu.dimension_semantics<arbitrary>], iteration_bounds = array<i64: 1, 1, 1>, scalar_prefetch = 0 : i64, scratch_operands = 1 : i64, tpu.core_type = #tpu.core_type<tc>, window_params = [{transform_indices = @transform_0, window_bounds = array<i64: 16, 128>}, {transform_indices = @transform_1, window_bounds = array<i64: 128, 32>}, {transform_indices = @transform_2, window_bounds = array<i64: 1, 32>}, {transform_indices = @transform_3, window_bounds = array<i64: 1, 32>}, {transform_indices = @transform_4, window_bounds = array<i64: 16, 32>}, {transform_indices = @transform_5, window_bounds = array<i64: 16, 32>}]} {
    %c0_i32 = arith.constant 0 : i32
    %0 = arith.cmpi eq, %arg2, %c0_i32 : i32
    %1 = arith.extui %0 : i1 to i32
    %c0_i32_0 = arith.constant 0 : i32
    %2 = arith.cmpi ne, %1, %c0_i32_0 : i32
    scf.if %2 {
      %cst_10 = arith.constant 0.000000e+00 : f32
      %12 = vector.broadcast %cst_10 : f32 to vector<16x32xf32>
      %c0_11 = arith.constant 0 : index
      %c0_12 = arith.constant 0 : index
      %13 = vector.load %arg9[%c0_11, %c0_12] : memref<16x32xf32, #tpu.memory_space<vmem>>, vector<16x32xf32>
      tpu.vector_store %arg9[%c0_11, %c0_12], %12 {strides = array<i32>} : memref<16x32xf32, #tpu.memory_space<vmem>>, vector<16x32xf32>,
    } else {
    }
    %c0 = arith.constant 0 : index
    %c0_1 = arith.constant 0 : index
    %3 = vector.load %arg9[%c0, %c0_1] : memref<16x32xf32, #tpu.memory_space<vmem>>, vector<16x32xf32>
    %c0_2 = arith.constant 0 : index
    %c0_3 = arith.constant 0 : index
    %4 = vector.load %arg3[%c0_2, %c0_3] : memref<16x128xbf16, #tpu.memory_space<vmem>>, vector<16x128xbf16>
    %c0_4 = arith.constant 0 : index
    %c0_5 = arith.constant 0 : index
    %5 = vector.load %arg4[%c0_4, %c0_5] : memref<128x32xbf16, #tpu.memory_space<vmem>>, vector<128x32xbf16>
    %cst = arith.constant dense<0.000000e+00> : vector<16x32xf32>
    %6 = tpu.matmul %4, %5, %cst {dimension_numbers = #tpu.dot_dimension_numbers<[1], [0], [0], [1], [0, 0, 1, 1], [], []>} : vector<16x128xbf16>, vector<128x32xbf16>, vector<16x32xf32> -> vector<16x32xf32>
    %7 = arith.addf %3, %6 : vector<16x32xf32>
    %c0_6 = arith.constant 0 : index
    %c0_7 = arith.constant 0 : index
    %8 = vector.load %arg9[%c0_6, %c0_7] : memref<16x32xf32, #tpu.memory_space<vmem>>, vector<16x32xf32>
    tpu.vector_store %arg9[%c0_6, %c0_7], %7 {strides = array<i32>} : memref<16x32xf32, #tpu.memory_space<vmem>>, vector<16x32xf32>,
    %c0_i32_8 = arith.constant 0 : i32
    %9 = arith.cmpi eq, %arg2, %c0_i32_8 : i32
    %10 = arith.extui %9 : i1 to i32
    %c0_i32_9 = arith.constant 0 : i32
    %11 = arith.cmpi ne, %10, %c0_i32_9 : i32
    scf.if %11 {
      %c0_10 = arith.constant 0 : index
      %c0_11 = arith.constant 0 : index
      %12 = vector.load %arg9[%c0_10, %c0_11] : memref<16x32xf32, #tpu.memory_space<vmem>>, vector<16x32xf32>
      %c0_12 = arith.constant 0 : index
      %c0_13 = arith.constant 0 : index
      %13 = vector.load %arg5[%c0_12, %c0_13] : memref<1x32xf32, #tpu.memory_space<vmem>>, vector<1x32xf32>
      %14 = vector.broadcast %13 : vector<1x32xf32> to vector<16x32xf32>
      %15 = arith.addf %12, %14 : vector<16x32xf32>
      %c0_14 = arith.constant 0 : index
      %c0_15 = arith.constant 0 : index
      %16 = vector.load %arg6[%c0_14, %c0_15] : memref<1x32xf32, #tpu.memory_space<vmem>>, vector<1x32xf32>
      %17 = vector.broadcast %16 : vector<1x32xf32> to vector<16x32xf32>
      %18 = arith.mulf %15, %17 : vector<16x32xf32>
      %c0_16 = arith.constant 0 : index
      %c0_17 = arith.constant 0 : index
      %19 = vector.load %arg7[%c0_16, %c0_17] : memref<16x32xf32, #tpu.memory_space<vmem>>, vector<16x32xf32>
      %20 = arith.addf %18, %19 : vector<16x32xf32>
      %c0_18 = arith.constant 0 : index
      %c0_19 = arith.constant 0 : index
      %21 = vector.load %arg8[%c0_18, %c0_19] : memref<16x32xf32, #tpu.memory_space<vmem>>, vector<16x32xf32>
      tpu.vector_store %arg8[%c0_18, %c0_19], %20 {strides = array<i32>} : memref<16x32xf32, #tpu.memory_space<vmem>>, vector<16x32xf32>,
    } else {
    }
    return
  }
  func.func @transform_0(%arg0: i32, %arg1: i32, %arg2: i32) -> (i32, i32) {
    %c0_i32 = arith.constant 0 : i32
    return %arg0, %arg2 : i32, i32
  }
  func.func @transform_1(%arg0: i32, %arg1: i32, %arg2: i32) -> (i32, i32) {
    %c0_i32 = arith.constant 0 : i32
    return %arg2, %arg1 : i32, i32
  }
  func.func @transform_2(%arg0: i32, %arg1: i32, %arg2: i32) -> (i32, i32) {
    %c0_i32 = arith.constant 0 : i32
    %c0_i32_0 = arith.constant 0 : i32
    return %c0_i32, %arg1 : i32, i32
  }
  func.func @transform_3(%arg0: i32, %arg1: i32, %arg2: i32) -> (i32, i32) {
    %c0_i32 = arith.constant 0 : i32
    %c0_i32_0 = arith.constant 0 : i32
    return %c0_i32, %arg1 : i32, i32
  }
  func.func @transform_4(%arg0: i32, %arg1: i32, %arg2: i32) -> (i32, i32) {
    %c0_i32 = arith.constant 0 : i32
    return %arg0, %arg1 : i32, i32
  }
  func.func @transform_5(%arg0: i32, %arg1: i32, %arg2: i32) -> (i32, i32) {
    %c0_i32 = arith.constant 0 : i32
    return %arg0, %arg1 : i32, i32
  }
}

</mosaic_0001>

<llo_original>
// kernel: block_forward.7
$region0: #{block_forward.7}
  #allocation0 [shape = 'u32[]', space=smem, size = 0x4, offset = 0x4, fixed_abs, tag = 'smem constant byte address 0x4 - core index']
  #allocation1 [shape = 'u32[144,128]{1,0:T(1,128)}', space=vmem, size = 0x12000, scoped, tag = 'internal scratch']
  %s0 = inlined_call_operand.vmem [shape: f32[16,32], index: 0, kind: input, shape index: {}]
  %s1 = inlined_call_operand.vmem [shape: f32[1,32], index: 1, kind: input, shape index: {}]
  %s2 = inlined_call_operand.vmem [shape: f32[1,32], index: 2, kind: input, shape index: {}]
  %s3 = inlined_call_operand.vmem [shape: bf16[16,32], index: 3, kind: output, shape index: {}]
  %s4 = sld [smem:[#allocation0]]
  $region22: #{block_forward.7} parent=0
    _
  %s6 = ssub.s32 1, %s4
  %s7 = scalar_select 0, %s6, %s4
  // Predicated region
  $region2: #{block_forward.7} parent=0 // pred_check
    _
  $region3: #{block_forward.7} parent=0 // pred_check_branch
    %9 = sbr.rel (0) target = $region5
  $region4: #{block_forward.7} parent=0 // pred_region
    _
  $region5: #{block_forward.7} parent=0 // pred_fallthru
    _
  // Predicated region
  $region6: #{block_forward.7} parent=0 // pred_check
    _
  $region7: #{block_forward.7} parent=0 // pred_check_branch
    %11 = sbr.rel (0) target = $region9
  $region8: #{block_forward.7} parent=0 // pred_region
    _
  $region9: #{block_forward.7} parent=0 // pred_fallthru
    _
  // Predicated region
  $region10: #{block_forward.7} parent=0 // pred_check
    _
  $region11: #{block_forward.7} parent=0 // pred_check_branch
    %13 = sbr.rel (0) target = $region13
  $region12: #{block_forward.7} parent=0 // pred_region
    _
  $region13: #{block_forward.7} parent=0 // pred_fallthru
    _
  %v14 = vld [vmem:[%s0] sm:$0xff]
  %v15 = vld [vmem:[%s0 + $0x8] sm:$0xff]
  %vm16 = vcmask 261120
  %v17 = vsel %vm16, %v14, 0.0
  %18 = vadd.xlane.f32.xlu0 %v17
  %v19 = vpop.xlane.xlu0 %18
  %v20 = vsel %vm16, %v15, 0.0
  %21 = vadd.xlane.f32.xlu0 %v20
  %v22 = vpop.xlane.xlu0 %21
  %v23 = vrcp.pop 32.0
  %v24 = vmul.f32 %v19, %v23
  %v25 = vmul.f32 %v22, %v23
  %v26 = vsub.f32 %v14, %v24
  %v27 = vsub.f32 %v15, %v25
  %v28 = vmul.f32 %v26, %v26
  %v29 = vmul.f32 %v27, %v27
  %v30 = vsel %vm16, %v28, 0.0
  %31 = vadd.xlane.f32.xlu0 %v30
  %v32 = vpop.xlane.xlu0 %31
  %v33 = vsel %vm16, %v29, 0.0
  %34 = vadd.xlane.f32.xlu0 %v33
  %v35 = vpop.xlane.xlu0 %34
  %v36 = vmul.f32 %v32, %v23
  %v37 = vmul.f32 %v35, %v23
  %v38 = vadd.f32 %v36, 1e-05
  %v39 = vadd.f32 %v37, 1e-05
  %v40 = vrsqrt.pop %v38
  %v41 = vrsqrt.pop %v39
  %v42 = vmul.f32 %v26, %v40
  %v43 = vmul.f32 %v27, %v41
  %v44 = vld [vmem:[%s1] sm:$0x1]
  %v46 = vlaneseq
  %v47 = vshrl.u32 %v46, 7
  %v48 = vsub.s32 0, %v47
  %v49 = vrot.slane %v44, %v48
  %v51 = vmul.f32 %v42, %v49
  %v52 = vmul.f32 %v43, %v49
  %v53 = vld [vmem:[%s2] sm:$0x1]
  %v55 = vlaneseq
  %v56 = vshrl.u32 %v55, 7
  %v57 = vsub.s32 0, %v56
  %v58 = vrot.slane %v53, %v57
  %v60 = vadd.f32 %v51, %v58
  %v61 = vadd.f32 %v52, %v58
  %v62 = vpack.c.bf16 %v61, %v60
  %v64 = vunpack.c.l.b16 %v62
  %v65 = vunpack.c.h.b16 %v62
  %v66 = vpack.c.b16 %v64, %v64
  %v67 = vpack.c.b16 %v65, %v65
  %vm70 = vcmask 257024
  %71 = vst.msk [vmem:[%s3] sm:$0xf] %vm70, %v66
  %72 = vst.msk [vmem:[%s3 + $0x4] sm:$0xf] %vm70, %v67
  // Predicated region
  $region14: #{block_forward.7} parent=0 // pred_check
    _
  $region15: #{block_forward.7} parent=0 // pred_check_branch
    %74 = sbr.rel (0) target = $region17
  $region16: #{block_forward.7} parent=0 // pred_region
    _
  $region17: #{block_forward.7} parent=0 // pred_fallthru
    _
  // Predicated region
  $region18: #{block_forward.7} parent=0 // pred_check
    _
  $region19: #{block_forward.7} parent=0 // pred_check_branch
    %76 = sbr.rel (0) target = $region21
  $region20: #{block_forward.7} parent=0 // pred_region
    _
  $region21: #{block_forward.7} parent=0 // pred_fallthru
    _

// kernel: block_forward.8
$region0: #{block_forward.8}
  #allocation0 [shape = 'u32[]', space=smem, size = 0x4, offset = 0x4, fixed_abs, tag = 'smem constant byte address 0x4 - core index']
  #allocation1 [shape = 'u32[144,128]{1,0:T(1,128)}', space=vmem, size = 0x12000, scoped, tag = 'internal scratch']
  #allocation2 [shape = 'f32[16,96]{1,0:T(8,128)}', space=vmem, size = 0x2000, scoped, tag = 'scratch operand']
  %s0 = inlined_call_operand.vmem [shape: bf16[16,32], index: 0, kind: input, shape index: {}]
  %s1 = inlined_call_operand.vmem [shape: bf16[32,96], index: 1, kind: input, shape index: {}]
  %s2 = inlined_call_operand.vmem [shape: bf16[16,96], index: 2, kind: output, shape index: {}]
  %s3 = sld [smem:[#allocation0]]
  $region26: #{block_forward.8} parent=0
    _
  %s5 = ssub.s32 1, %s3
  %s6 = scalar_select 0, %s5, %s3
  // Predicated region
  $region2: #{block_forward.8} parent=0 // pred_check
    _
  $region3: #{block_forward.8} parent=0 // pred_check_branch
    %8 = sbr.rel (0) target = $region5
  $region4: #{block_forward.8} parent=0 // pred_region
    _
  $region5: #{block_forward.8} parent=0 // pred_fallthru
    _
  // Predicated region
  $region6: #{block_forward.8} parent=0 // pred_check
    _
  $region7: #{block_forward.8} parent=0 // pred_check_branch
    %10 = sbr.rel (0) target = $region9
  $region8: #{block_forward.8} parent=0 // pred_region
    _
  $region9: #{block_forward.8} parent=0 // pred_fallthru
    _
  %p12 = scmp.eq.s32.totalorder 0, 0
  // Predicated region
  $region10: #{block_forward.8} parent=0 // pred_check
    %p13 = pneg %p12
  $region11: #{block_forward.8} parent=0 // pred_check_branch
    %15 = sbr.rel (%p13) target = $region13
  $region12: #{block_forward.8} parent=0 // pred_region
    %vm16 = vcmask 785408
    %17 = vst.msk [vmem:[#allocation2] sm:$0xff] %vm16, 0.0
    %18 = vst.msk [vmem:[#allocation2 + $0x8] sm:$0xff] %vm16, 0.0
  $region13: #{block_forward.8} parent=0 // pred_fallthru
    _
  %v19 = vld [vmem:[#allocation2] sm:$0xff]
  %v20 = vld [vmem:[#allocation2 + $0x8] sm:$0xff]
  %v21 = vld [vmem:[%s0] sm:$0xf]
  %v22 = vld [vmem:[%s0 + $0x4] sm:$0xf]
  %v23 = vld [vmem:[%s1] sm:$0xf]
  %v24 = vld [vmem:[%s1 + $0x4] sm:$0xf]
  %v25 = vld [vmem:[%s1 + $0x8] sm:$0xf]
  %v26 = vld [vmem:[%s1 + $0xc] sm:$0xf]
  %v29 = vunpack.c.l.b16 %v21
  %v30 = vunpack.c.l.b16 %v22
  %v31 = vpack.c.b16 %v30, %v29
  %v36 = vunpack.c.l.b16 %v23
  %v37 = vunpack.c.l.b16 %v24
  %v38 = vunpack.c.l.b16 %v25
  %v39 = vunpack.c.l.b16 %v26
  %v40 = vpack.c.b16 %v37, %v36
  %v41 = vpack.c.b16 %v39, %v38
  %vm44 = vcmask 261120
  %v46 = vsel %vm44, %v31, 0
  %48 = vmatprep.subr.bf16.mxu0 0
  %49 = vmatpush1.bf16.msra.mxu0 %v40
  %50 = vmatprep.subr.bf16.mxu0 0
  %51 = vmatpush1.bf16.msra.mxu0 %v41
  %52 = vmatprep.subr.bf16.mxu0 0
  %53 = vmatpush1.bf16.msra.mxu0 0
  %54 = vmatprep.subr.bf16.mxu0 0
  %55 = vmatpush1.bf16.msra.mxu0 0
  %56 = vmatprep.subr.bf16.mxu0 0
  %57 = vmatpush1.bf16.msra.mxu0 0
  %58 = vmatprep.subr.bf16.mxu0 0
  %59 = vmatpush1.bf16.msra.mxu0 0
  %60 = vmatprep.subr.bf16.mxu0 0
  %61 = vmatpush1.bf16.msra.mxu0 0
  %62 = vmatprep.subr.bf16.mxu0 0
  %63 = vmatpush1.bf16.msra.mxu0 0
  %64 = vmatprep.subr.bf16.mxu0 0
  %65 = vmatpush1.bf16.msra.mxu0 0
  %66 = vmatprep.subr.bf16.mxu0 0
  %67 = vmatpush1.bf16.msra.mxu0 0
  %68 = vmatprep.subr.bf16.mxu0 0
  %69 = vmatpush1.bf16.msra.mxu0 0
  %70 = vmatprep.subr.bf16.mxu0 0
  %71 = vmatpush1.bf16.msra.mxu0 0
  %72 = vmatprep.subr.bf16.mxu0 0
  %73 = vmatpush1.bf16.msra.mxu0 0
  %74 = vmatprep.subr.bf16.mxu0 0
  %75 = vmatpush1.bf16.msra.mxu0 0
  %76 = vmatprep.subr.bf16.mxu0 0
  %77 = vmatpush1.bf16.msra.mxu0 0
  %78 = vmatprep.subr.bf16.mxu0 0
  %79 = vmatpush1.bf16.msra.mxu0 0
  %80 = vmatprep.mubr.bf16.mxu0 0
  %81 = vmatmul.mubr.bf16.gmra.mrb[0].mxu0 %v46
  %v82 = vpop.f32.mrb[0].mxu0
  %v83 = vadd.f32 0.0, %v82
  %v84 = vpop.f32.mrb[0].mxu0
  %v85 = vpop.f32.mrb[0].mxu0
  %v86 = vadd.f32 0.0, %v85
  %v87 = vpop.f32.mrb[0].mxu0
  %88 = vdwg.mxu0
  %v89 = vadd.f32 %v19, %v83
  %v90 = vadd.f32 %v20, %v86
  %vm91 = vcmask 785408
  %92 = vst.msk [vmem:[#allocation2] sm:$0xff] %vm91, %v89
  %93 = vst.msk [vmem:[#allocation2 + $0x8] sm:$0xff] %vm91, %v90
  // Predicated region
  $region14: #{block_forward.8} parent=0 // pred_check
    %p94 = pneg %p12
  $region15: #{block_forward.8} parent=0 // pred_check_branch
    %96 = sbr.rel (%p94) target = $region17
  $region16: #{block_forward.8} parent=0 // pred_region
    %v97 = vld [vmem:[#allocation2] sm:$0xff]
    %v98 = vld [vmem:[#allocation2 + $0x8] sm:$0xff]
    %v99 = vpack.c.bf16 %v98, %v97
    %v101 = vunpack.c.l.b16 %v99
    %v102 = vunpack.c.h.b16 %v99
    %v103 = vpack.c.b16 %v101, %v101
    %v104 = vpack.c.b16 %v102, %v102
    %vm107 = vcmask 781312
    %108 = vst.msk [vmem:[%s2] sm:$0xf] %vm107, %v103
    %109 = vst.msk [vmem:[%s2 + $0x4] sm:$0xf] %vm107, %v104
  $region17: #{block_forward.8} parent=0 // pred_fallthru
    _
  // Predicated region
  $region18: #{block_forward.8} parent=0 // pred_check
    _
  $region19: #{block_forward.8} parent=0 // pred_check_branch
    %111 = sbr.rel (0) target = $region21
  $region20: #{block_forward.8} parent=0 // pred_region
    _
  $region21: #{block_forward.8} parent=0 // pred_fallthru
    _
  // Predicated region
  $region22: #{block_forward.8} parent=0 // pred_check
    _
  $region23: #{block_forward.8} parent=0 // pred_check_branch
    %113 = sbr.rel (0) target = $region25
  $region24: #{block_forward.8} parent=0 // pred_region
    _
  $region25: #{block_forward.8} parent=0 // pred_fallthru
    _

// kernel: block_forward.10
$region0: #{block_forward.10}
  #allocation0 [shape = 'u32[]', space=smem, size = 0x4, offset = 0x4, fixed_abs, tag = 'smem constant byte address 0x4 - core index']
  #allocation1 [shape = 'u32[144,128]{1,0:T(1,128)}', space=vmem, size = 0x12000, scoped, tag = 'internal scratch']
  #allocation2 [shape = 'f32[16,32]{1,0:T(8,128)}', space=vmem, size = 0x2000, scoped, tag = 'scratch operand']
  %s0 = inlined_call_operand.vmem [shape: bf16[16,32], index: 0, kind: input, shape index: {}]
  %s1 = inlined_call_operand.vmem [shape: bf16[32,32], index: 1, kind: input, shape index: {}]
  %s2 = inlined_call_operand.vmem [shape: f32[1,32], index: 2, kind: input, shape index: {}]
  %s3 = inlined_call_operand.vmem [shape: f32[1,32], index: 3, kind: input, shape index: {}]
  %s4 = inlined_call_operand.vmem [shape: f32[16,32], index: 4, kind: input, shape index: {}]
  %s5 = inlined_call_operand.vmem [shape: f32[16,32], index: 5, kind: output, shape index: {}]
  %s6 = sld [smem:[#allocation0]]
  $region38: #{block_forward.10} parent=0
    _
  %s8 = ssub.s32 1, %s6
  %s9 = scalar_select 0, %s8, %s6
  // Predicated region
  $region2: #{block_forward.10} parent=0 // pred_check
    _
  $region3: #{block_forward.10} parent=0 // pred_check_branch
    %11 = sbr.rel (0) target = $region5
  $region4: #{block_forward.10} parent=0 // pred_region
    _
  $region5: #{block_forward.10} parent=0 // pred_fallthru
    _
  // Predicated region
  $region6: #{block_forward.10} parent=0 // pred_check
    _
  $region7: #{block_forward.10} parent=0 // pred_check_branch
    %13 = sbr.rel (0) target = $region9
  $region8: #{block_forward.10} parent=0 // pred_region
    _
  $region9: #{block_forward.10} parent=0 // pred_fallthru
    _
  // Predicated region
  $region10: #{block_forward.10} parent=0 // pred_check
    _
  $region11: #{block_forward.10} parent=0 // pred_check_branch
    %15 = sbr.rel (0) target = $region13
  $region12: #{block_forward.10} parent=0 // pred_region
    _
  $region13: #{block_forward.10} parent=0 // pred_fallthru
    _
  // Predicated region
  $region14: #{block_forward.10} parent=0 // pred_check
    _
  $region15: #{block_forward.10} parent=0 // pred_check_branch
    %17 = sbr.rel (0) target = $region17
  $region16: #{block_forward.10} parent=0 // pred_region
    _
  $region17: #{block_forward.10} parent=0 // pred_fallthru
    _
  // Predicated region
  $region18: #{block_forward.10} parent=0 // pred_check
    _
  $region19: #{block_forward.10} parent=0 // pred_check_branch
    %19 = sbr.rel (0) target = $region21
  $region20: #{block_forward.10} parent=0 // pred_region
    _
  $region21: #{block_forward.10} parent=0 // pred_fallthru
    _
  %p21 = scmp.eq.s32.totalorder 0, 0
  // Predicated region
  $region22: #{block_forward.10} parent=0 // pred_check
    %p22 = pneg %p21
  $region23: #{block_forward.10} parent=0 // pred_check_branch
    %24 = sbr.rel (%p22) target = $region25
  $region24: #{block_forward.10} parent=0 // pred_region
    %vm25 = vcmask 261120
    %26 = vst.msk [vmem:[#allocation2] sm:$0xff] %vm25, 0.0
    %27 = vst.msk [vmem:[#allocation2 + $0x8] sm:$0xff] %vm25, 0.0
  $region25: #{block_forward.10} parent=0 // pred_fallthru
    _
  %v28 = vld [vmem:[#allocation2] sm:$0xff]
  %v29 = vld [vmem:[#allocation2 + $0x8] sm:$0xff]
  %v30 = vld [vmem:[%s0] sm:$0xf]
  %v31 = vld [vmem:[%s0 + $0x4] sm:$0xf]
  %v32 = vld [vmem:[%s1] sm:$0xf]
  %v33 = vld [vmem:[%s1 + $0x4] sm:$0xf]
  %v34 = vld [vmem:[%s1 + $0x8] sm:$0xf]
  %v35 = vld [vmem:[%s1 + $0xc] sm:$0xf]
  %v38 = vunpack.c.l.b16 %v30
  %v39 = vunpack.c.l.b16 %v31
  %v40 = vpack.c.b16 %v39, %v38
  %v45 = vunpack.c.l.b16 %v32
  %v46 = vunpack.c.l.b16 %v33
  %v47 = vunpack.c.l.b16 %v34
  %v48 = vunpack.c.l.b16 %v35
  %v49 = vpack.c.b16 %v46, %v45
  %v50 = vpack.c.b16 %v48, %v47
  %vm53 = vcmask 261120
  %v55 = vsel %vm53, %v40, 0
  %57 = vmatprep.subr.bf16.mxu0 0
  %58 = vmatpush1.bf16.msra.mxu0 %v49
  %59 = vmatprep.subr.bf16.mxu0 0
  %60 = vmatpush1.bf16.msra.mxu0 %v50
  %61 = vmatprep.subr.bf16.mxu0 0
  %62 = vmatpush1.bf16.msra.mxu0 0
  %63 = vmatprep.subr.bf16.mxu0 0
  %64 = vmatpush1.bf16.msra.mxu0 0
  %65 = vmatprep.subr.bf16.mxu0 0
  %66 = vmatpush1.bf16.msra.mxu0 0
  %67 = vmatprep.subr.bf16.mxu0 0
  %68 = vmatpush1.bf16.msra.mxu0 0
  %69 = vmatprep.subr.bf16.mxu0 0
  %70 = vmatpush1.bf16.msra.mxu0 0
  %71 = vmatprep.subr.bf16.mxu0 0
  %72 = vmatpush1.bf16.msra.mxu0 0
  %73 = vmatprep.subr.bf16.mxu0 0
  %74 = vmatpush1.bf16.msra.mxu0 0
  %75 = vmatprep.subr.bf16.mxu0 0
  %76 = vmatpush1.bf16.msra.mxu0 0
  %77 = vmatprep.subr.bf16.mxu0 0
  %78 = vmatpush1.bf16.msra.mxu0 0
  %79 = vmatprep.subr.bf16.mxu0 0
  %80 = vmatpush1.bf16.msra.mxu0 0
  %81 = vmatprep.subr.bf16.mxu0 0
  %82 = vmatpush1.bf16.msra.mxu0 0
  %83 = vmatprep.subr.bf16.mxu0 0
  %84 = vmatpush1.bf16.msra.mxu0 0
  %85 = vmatprep.subr.bf16.mxu0 0
  %86 = vmatpush1.bf16.msra.mxu0 0
  %87 = vmatprep.subr.bf16.mxu0 0
  %88 = vmatpush1.bf16.msra.mxu0 0
  %89 = vmatprep.mubr.bf16.mxu0 0
  %90 = vmatmul.mubr.bf16.gmra.mrb[0].mxu0 %v55
  %v91 = vpop.f32.mrb[0].mxu0
  %v92 = vadd.f32 0.0, %v91
  %v93 = vpop.f32.mrb[0].mxu0
  %v94 = vpop.f32.mrb[0].mxu0
  %v95 = vadd.f32 0.0, %v94
  %v96 = vpop.f32.mrb[0].mxu0
  %97 = vdwg.mxu0
  %v98 = vadd.f32 %v28, %v92
  %v99 = vadd.f32 %v29, %v95
  %100 = vst.msk [vmem:[#allocation2] sm:$0xff] %vm53, %v98
  %101 = vst.msk [vmem:[#allocation2 + $0x8] sm:$0xff] %vm53, %v99
  // Predicated region
  $region26: #{block_forward.10} parent=0 // pred_check
    %p102 = pneg %p21
  $region27: #{block_forward.10} parent=0 // pred_check_branch
    %104 = sbr.rel (%p102) target = $region29
  $region28: #{block_forward.10} parent=0 // pred_region
    %v105 = vld [vmem:[#allocation2] sm:$0xff]
    %v106 = vld [vmem:[#allocation2 + $0x8] sm:$0xff]
    %v107 = vld [vmem:[%s2] sm:$0x1]
    %v109 = vlaneseq
    %v110 = vshrl.u32 %v109, 7
    %v111 = vsub.s32 0, %v110
    %v112 = vrot.slane %v107, %v111
    %v114 = vadd.f32 %v105, %v112
    %v115 = vadd.f32 %v106, %v112
    %v116 = vld [vmem:[%s3] sm:$0x1]
    %v118 = vlaneseq
    %v119 = vshrl.u32 %v118, 7
    %v120 = vsub.s32 0, %v119
    %v121 = vrot.slane %v116, %v120
    %v123 = vmul.f32 %v114, %v121
    %v124 = vmul.f32 %v115, %v121
    %v125 = vld [vmem:[%s4] sm:$0xff]
    %v126 = vld [vmem:[%s4 + $0x8] sm:$0xff]
    %v127 = vadd.f32 %v123, %v125
    %v128 = vadd.f32 %v124, %v126
    %129 = vst.msk [vmem:[%s5] sm:$0xff] %vm53, %v127
    %130 = vst.msk [vmem:[%s5 + $0x8] sm:$0xff] %vm53, %v128
  $region29: #{block_forward.10} parent=0 // pred_fallthru
    _
  // Predicated region
  $region30: #{block_forward.10} parent=0 // pred_check
    _
  $region31: #{block_forward.10} parent=0 // pred_check_branch
    %132 = sbr.rel (0) target = $region33
  $region32: #{block_forward.10} parent=0 // pred_region
    _
  $region33: #{block_forward.10} parent=0 // pred_fallthru
    _
  // Predicated region
  $region34: #{block_forward.10} parent=0 // pred_check
    _
  $region35: #{block_forward.10} parent=0 // pred_check_branch
    %134 = sbr.rel (0) target = $region37
  $region36: #{block_forward.10} parent=0 // pred_region
    _
  $region37: #{block_forward.10} parent=0 // pred_fallthru
    _

// kernel: block_forward.12
$region0: #{block_forward.12}
  #allocation0 [shape = 'u32[]', space=smem, size = 0x4, offset = 0x4, fixed_abs, tag = 'smem constant byte address 0x4 - core index']
  #allocation1 [shape = 'u32[144,128]{1,0:T(1,128)}', space=vmem, size = 0x12000, scoped, tag = 'internal scratch']
  #allocation2 [shape = 'f32[16,128]{1,0:T(8,128)}', space=vmem, size = 0x2000, scoped, tag = 'scratch operand']
  %s0 = inlined_call_operand.vmem [shape: bf16[16,32], index: 0, kind: input, shape index: {}]
  %s1 = inlined_call_operand.vmem [shape: bf16[32,128], index: 1, kind: input, shape index: {}]
  %s2 = inlined_call_operand.vmem [shape: f32[1,128], index: 2, kind: input, shape index: {}]
  %s3 = inlined_call_operand.vmem [shape: bf16[16,128], index: 3, kind: output, shape index: {}]
  %s4 = sld [smem:[#allocation0]]
  $region30: #{block_forward.12} parent=0
    _
  %s6 = ssub.s32 1, %s4
  %s7 = scalar_select 0, %s6, %s4
  // Predicated region
  $region2: #{block_forward.12} parent=0 // pred_check
    _
  $region3: #{block_forward.12} parent=0 // pred_check_branch
    %9 = sbr.rel (0) target = $region5
  $region4: #{block_forward.12} parent=0 // pred_region
    _
  $region5: #{block_forward.12} parent=0 // pred_fallthru
    _
  // Predicated region
  $region6: #{block_forward.12} parent=0 // pred_check
    _
  $region7: #{block_forward.12} parent=0 // pred_check_branch
    %11 = sbr.rel (0) target = $region9
  $region8: #{block_forward.12} parent=0 // pred_region
    _
  $region9: #{block_forward.12} parent=0 // pred_fallthru
    _
  // Predicated region
  $region10: #{block_forward.12} parent=0 // pred_check
    _
  $region11: #{block_forward.12} parent=0 // pred_check_branch
    %13 = sbr.rel (0) target = $region13
  $region12: #{block_forward.12} parent=0 // pred_region
    _
  $region13: #{block_forward.12} parent=0 // pred_fallthru
    _
  %p15 = scmp.eq.s32.totalorder 0, 0
  // Predicated region
  $region14: #{block_forward.12} parent=0 // pred_check
    %p16 = pneg %p15
  $region15: #{block_forward.12} parent=0 // pred_check_branch
    %18 = sbr.rel (%p16) target = $region17
  $region16: #{block_forward.12} parent=0 // pred_region
    %19 = vst [vmem:[#allocation2] sm:$0xff] 0.0
    %20 = vst [vmem:[#allocation2 + $0x8] sm:$0xff] 0.0
  $region17: #{block_forward.12} parent=0 // pred_fallthru
    _
  %v21 = vld [vmem:[#allocation2] sm:$0xff]
  %v22 = vld [vmem:[#allocation2 + $0x8] sm:$0xff]
  %v23 = vld [vmem:[%s0] sm:$0xf]
  %v24 = vld [vmem:[%s0 + $0x4] sm:$0xf]
  %v25 = vld [vmem:[%s1] sm:$0xf]
  %v26 = vld [vmem:[%s1 + $0x4] sm:$0xf]
  %v27 = vld [vmem:[%s1 + $0x8] sm:$0xf]
  %v28 = vld [vmem:[%s1 + $0xc] sm:$0xf]
  %v31 = vunpack.c.l.b16 %v23
  %v32 = vunpack.c.l.b16 %v24
  %v33 = vpack.c.b16 %v32, %v31
  %v38 = vunpack.c.l.b16 %v25
  %v39 = vunpack.c.l.b16 %v26
  %v40 = vunpack.c.l.b16 %v27
  %v41 = vunpack.c.l.b16 %v28
  %v42 = vpack.c.b16 %v39, %v38
  %v43 = vpack.c.b16 %v41, %v40
  %vm46 = vcmask 261120
  %v48 = vsel %vm46, %v33, 0
  %50 = vmatprep.subr.bf16.mxu0 0
  %51 = vmatpush1.bf16.msra.mxu0 %v42
  %52 = vmatprep.subr.bf16.mxu0 0
  %53 = vmatpush1.bf16.msra.mxu0 %v43
  %54 = vmatprep.subr.bf16.mxu0 0
  %55 = vmatpush1.bf16.msra.mxu0 0
  %56 = vmatprep.subr.bf16.mxu0 0
  %57 = vmatpush1.bf16.msra.mxu0 0
  %58 = vmatprep.subr.bf16.mxu0 0
  %59 = vmatpush1.bf16.msra.mxu0 0
  %60 = vmatprep.subr.bf16.mxu0 0
  %61 = vmatpush1.bf16.msra.mxu0 0
  %62 = vmatprep.subr.bf16.mxu0 0
  %63 = vmatpush1.bf16.msra.mxu0 0
  %64 = vmatprep.subr.bf16.mxu0 0
  %65 = vmatpush1.bf16.msra.mxu0 0
  %66 = vmatprep.subr.bf16.mxu0 0
  %67 = vmatpush1.bf16.msra.mxu0 0
  %68 = vmatprep.subr.bf16.mxu0 0
  %69 = vmatpush1.bf16.msra.mxu0 0
  %70 = vmatprep.subr.bf16.mxu0 0
  %71 = vmatpush1.bf16.msra.mxu0 0
  %72 = vmatprep.subr.bf16.mxu0 0
  %73 = vmatpush1.bf16.msra.mxu0 0
  %74 = vmatprep.subr.bf16.mxu0 0
  %75 = vmatpush1.bf16.msra.mxu0 0
  %76 = vmatprep.subr.bf16.mxu0 0
  %77 = vmatpush1.bf16.msra.mxu0 0
  %78 = vmatprep.subr.bf16.mxu0 0
  %79 = vmatpush1.bf16.msra.mxu0 0
  %80 = vmatprep.subr.bf16.mxu0 0
  %81 = vmatpush1.bf16.msra.mxu0 0
  %82 = vmatprep.mubr.bf16.mxu0 0
  %83 = vmatmul.mubr.bf16.gmra.mrb[0].mxu0 %v48
  %v84 = vpop.f32.mrb[0].mxu0
  %v85 = vadd.f32 0.0, %v84
  %v86 = vpop.f32.mrb[0].mxu0
  %v87 = vpop.f32.mrb[0].mxu0
  %v88 = vadd.f32 0.0, %v87
  %v89 = vpop.f32.mrb[0].mxu0
  %90 = vdwg.mxu0
  %v91 = vadd.f32 %v21, %v85
  %v92 = vadd.f32 %v22, %v88
  %93 = vst [vmem:[#allocation2] sm:$0xff] %v91
  %94 = vst [vmem:[#allocation2 + $0x8] sm:$0xff] %v92
  // Predicated region
  $region18: #{block_forward.12} parent=0 // pred_check
    %p95 = pneg %p15
  $region19: #{block_forward.12} parent=0 // pred_check_branch
    %97 = sbr.rel (%p95) target = $region21
  $region20: #{block_forward.12} parent=0 // pred_region
    %v98 = vld [vmem:[#allocation2] sm:$0xff]
    %v99 = vld [vmem:[#allocation2 + $0x8] sm:$0xff]
    %v100 = vld [vmem:[%s2] sm:$0x1]
    %v102 = vlaneseq
    %v103 = vshrl.u32 %v102, 7
    %v104 = vsub.s32 0, %v103
    %v105 = vrot.slane %v100, %v104
    %v107 = vadd.f32 %v98, %v105
    %v108 = vadd.f32 %v99, %v105
    %v109 = vmul.f32 %v107, 0.5
    %v110 = vmul.f32 %v108, 0.5
    %v111 = vmul.f32 %v107, 0.044715
    %v112 = vmul.f32 %v108, 0.044715
    %v113 = vmul.f32 %v111, %v107
    %v114 = vmul.f32 %v112, %v108
    %v115 = vmul.f32 %v113, %v107
    %v116 = vmul.f32 %v114, %v108
    %v117 = vadd.f32 %v107, %v115
    %v118 = vadd.f32 %v108, %v116
    %v119 = vmul.f32 %v117, 0.7978846
    %v120 = vmul.f32 %v118, 0.7978846
    %v121 = vtanh.pop %v119
    %v122 = vtanh.pop %v120
    %v123 = vadd.f32 %v121, 1.0
    %v124 = vadd.f32 %v122, 1.0
    %v125 = vmul.f32 %v109, %v123
    %v126 = vmul.f32 %v110, %v124
    %v127 = vpack.c.bf16 %v126, %v125
    %v129 = vunpack.c.l.b16 %v127
    %v130 = vunpack.c.h.b16 %v127
    %v131 = vpack.c.b16 %v129, %v129
    %v132 = vpack.c.b16 %v130, %v130
    %135 = vst [vmem:[%s3] sm:$0xf] %v131
    %136 = vst [vmem:[%s3 + $0x4] sm:$0xf] %v132
  $region21: #{block_forward.12} parent=0 // pred_fallthru
    _
  // Predicated region
  $region22: #{block_forward.12} parent=0 // pred_check
    _
  $region23: #{block_forward.12} parent=0 // pred_check_branch
    %138 = sbr.rel (0) target = $region25
  $region24: #{block_forward.12} parent=0 // pred_region
    _
  $region25: #{block_forward.12} parent=0 // pred_fallthru
    _
  // Predicated region
  $region26: #{block_forward.12} parent=0 // pred_check
    _
  $region27: #{block_forward.12} parent=0 // pred_check_branch
    %140 = sbr.rel (0) target = $region29
  $region28: #{block_forward.12} parent=0 // pred_region
    _
  $region29: #{block_forward.12} parent=0 // pred_fallthru
    _

// kernel: block_forward.13
$region0: #{block_forward.13}
  #allocation0 [shape = 'u32[]', space=smem, size = 0x4, offset = 0x4, fixed_abs, tag = 'smem constant byte address 0x4 - core index']
  #allocation1 [shape = 'u32[144,128]{1,0:T(1,128)}', space=vmem, size = 0x12000, scoped, tag = 'internal scratch']
  #allocation2 [shape = 'f32[16,32]{1,0:T(8,128)}', space=vmem, size = 0x2000, scoped, tag = 'scratch operand']
  %s0 = inlined_call_operand.vmem [shape: bf16[16,128], index: 0, kind: input, shape index: {}]
  %s1 = inlined_call_operand.vmem [shape: bf16[128,32], index: 1, kind: input, shape index: {}]
  %s2 = inlined_call_operand.vmem [shape: f32[1,32], index: 2, kind: input, shape index: {}]
  %s3 = inlined_call_operand.vmem [shape: f32[1,32], index: 3, kind: input, shape index: {}]
  %s4 = inlined_call_operand.vmem [shape: f32[16,32], index: 4, kind: input, shape index: {}]
  %s5 = inlined_call_operand.hbm [shape: f32[16,32], index: 5, kind: output, shape index: {}]
  %s6 = sld [smem:[#allocation0]]
  $region38: #{block_forward.13} parent=0
    _
  %s8 = ssub.s32 1, %s6
  %s9 = scalar_select 0, %s8, %s6
  $region1: #{block_forward.13} parent=0
    #allocation3 [shape = 'u8[8192]{0}', space=vmem, size = 0x2000, scoped, tag = 'output window, operand 0, single buffered']
    #allocation4 [shape = 's32[1]{0}', space=sflag, size = 0x4, scoped, tag = 'scoped memory for block_forward.13']
    %10 = vsyncpa [#allocation4], 0
    // Predicated region
    $region2: #{block_forward.13} parent=1 // pred_check
      _
    $region3: #{block_forward.13} parent=1 // pred_check_branch
      %12 = sbr.rel (0) target = $region5
    $region4: #{block_forward.13} parent=1 // pred_region
      _
    $region5: #{block_forward.13} parent=1 // pred_fallthru
      _
    // Predicated region
    $region6: #{block_forward.13} parent=1 // pred_check
      _
    $region7: #{block_forward.13} parent=1 // pred_check_branch
      %14 = sbr.rel (0) target = $region9
    $region8: #{block_forward.13} parent=1 // pred_region
      _
    $region9: #{block_forward.13} parent=1 // pred_fallthru
      _
    // Predicated region
    $region10: #{block_forward.13} parent=1 // pred_check
      _
    $region11: #{block_forward.13} parent=1 // pred_check_branch
      %16 = sbr.rel (0) target = $region13
    $region12: #{block_forward.13} parent=1 // pred_region
      _
    $region13: #{block_forward.13} parent=1 // pred_fallthru
      _
    // Predicated region
    $region14: #{block_forward.13} parent=1 // pred_check
      _
    $region15: #{block_forward.13} parent=1 // pred_check_branch
      %18 = sbr.rel (0) target = $region17
    $region16: #{block_forward.13} parent=1 // pred_region
      _
    $region17: #{block_forward.13} parent=1 // pred_fallthru
      _
    // Predicated region
    $region18: #{block_forward.13} parent=1 // pred_check
      _
    $region19: #{block_forward.13} parent=1 // pred_check_branch
      %20 = sbr.rel (0) target = $region21
    $region20: #{block_forward.13} parent=1 // pred_region
      _
    $region21: #{block_forward.13} parent=1 // pred_fallthru
      _
    %p22 = scmp.eq.s32.totalorder 0, 0
    // Predicated region
    $region22: #{block_forward.13} parent=1 // pred_check
      %p23 = pneg %p22
    $region23: #{block_forward.13} parent=1 // pred_check_branch
      %25 = sbr.rel (%p23) target = $region25
    $region24: #{block_forward.13} parent=1 // pred_region
      %vm26 = vcmask 261120
      %27 = vst.msk [vmem:[#allocation2] sm:$0xff] %vm26, 0.0
      %28 = vst.msk [vmem:[#allocation2 + $0x8] sm:$0xff] %vm26, 0.0
    $region25: #{block_forward.13} parent=1 // pred_fallthru
      _
    %v29 = vld [vmem:[#allocation2] sm:$0xff]
    %v30 = vld [vmem:[#allocation2 + $0x8] sm:$0xff]
    %v31 = vld [vmem:[%s0] sm:$0xf]
    %v32 = vld [vmem:[%s0 + $0x4] sm:$0xf]
    %v33 = vld [vmem:[%s1] sm:$0xf]
    %v34 = vld [vmem:[%s1 + $0x4] sm:$0xf]
    %v35 = vld [vmem:[%s1 + $0x8] sm:$0xf]
    %v36 = vld [vmem:[%s1 + $0xc] sm:$0xf]
    %v37 = vld [vmem:[%s1 + $0x10] sm:$0xf]
    %v38 = vld [vmem:[%s1 + $0x14] sm:$0xf]
    %v39 = vld [vmem:[%s1 + $0x18] sm:$0xf]
    %v40 = vld [vmem:[%s1 + $0x1c] sm:$0xf]
    %v41 = vld [vmem:[%s1 + $0x20] sm:$0xf]
    %v42 = vld [vmem:[%s1 + $0x24] sm:$0xf]
    %v43 = vld [vmem:[%s1 + $0x28] sm:$0xf]
    %v44 = vld [vmem:[%s1 + $0x2c] sm:$0xf]
    %v45 = vld [vmem:[%s1 + $0x30] sm:$0xf]
    %v46 = vld [vmem:[%s1 + $0x34] sm:$0xf]
    %v47 = vld [vmem:[%s1 + $0x38] sm:$0xf]
    %v48 = vld [vmem:[%s1 + $0x3c] sm:$0xf]
    %v51 = vunpack.c.l.b16 %v31
    %v52 = vunpack.c.l.b16 %v32
    %v53 = vpack.c.b16 %v52, %v51
    %v71 = vunpack.c.l.b16 %v33
    %v72 = vunpack.c.l.b16 %v34
    %v73 = vunpack.c.l.b16 %v35
    %v74 = vunpack.c.l.b16 %v36
    %v75 = vunpack.c.l.b16 %v37
    %v76 = vunpack.c.l.b16 %v38
    %v77 = vunpack.c.l.b16 %v39
    %v78 = vunpack.c.l.b16 %v40
    %v79 = vunpack.c.l.b16 %v41
    %v80 = vunpack.c.l.b16 %v42
    %v81 = vunpack.c.l.b16 %v43
    %v82 = vunpack.c.l.b16 %v44
    %v83 = vunpack.c.l.b16 %v45
    %v84 = vunpack.c.l.b16 %v46
    %v85 = vunpack.c.l.b16 %v47
    %v86 = vunpack.c.l.b16 %v48
    %v87 = vpack.c.b16 %v72, %v71
    %v88 = vpack.c.b16 %v74, %v73
    %v89 = vpack.c.b16 %v76, %v75
    %v90 = vpack.c.b16 %v78, %v77
    %v91 = vpack.c.b16 %v80, %v79
    %v92 = vpack.c.b16 %v82, %v81
    %v93 = vpack.c.b16 %v84, %v83
    %v94 = vpack.c.b16 %v86, %v85
    %103 = vmatprep.subr.bf16.mxu0 0
    %104 = vmatpush1.bf16.msra.mxu0 %v87
    %105 = vmatprep.subr.bf16.mxu0 0
    %106 = vmatpush1.bf16.msra.mxu0 %v88
    %107 = vmatprep.subr.bf16.mxu0 0
    %108 = vmatpush1.bf16.msra.mxu0 %v89
    %109 = vmatprep.subr.bf16.mxu0 0
    %110 = vmatpush1.bf16.msra.mxu0 %v90
    %111 = vmatprep.subr.bf16.mxu0 0
    %112 = vmatpush1.bf16.msra.mxu0 %v91
    %113 = vmatprep.subr.bf16.mxu0 0
    %114 = vmatpush1.bf16.msra.mxu0 %v92
    %115 = vmatprep.subr.bf16.mxu0 0
    %116 = vmatpush1.bf16.msra.mxu0 %v93
    %117 = vmatprep.subr.bf16.mxu0 0
    %118 = vmatpush1.bf16.msra.mxu0 %v94
    %119 = vmatprep.subr.bf16.mxu0 0
    %120 = vmatpush1.bf16.msra.mxu0 0
    %121 = vmatprep.subr.bf16.mxu0 0
    %122 = vmatpush1.bf16.msra.mxu0 0
    %123 = vmatprep.subr.bf16.mxu0 0
    %124 = vmatpush1.bf16.msra.mxu0 0
    %125 = vmatprep.subr.bf16.mxu0 0
    %126 = vmatpush1.bf16.msra.mxu0 0
    %127 = vmatprep.subr.bf16.mxu0 0
    %128 = vmatpush1.bf16.msra.mxu0 0
    %129 = vmatprep.subr.bf16.mxu0 0
    %130 = vmatpush1.bf16.msra.mxu0 0
    %131 = vmatprep.subr.bf16.mxu0 0
    %132 = vmatpush1.bf16.msra.mxu0 0
    %133 = vmatprep.subr.bf16.mxu0 0
    %134 = vmatpush1.bf16.msra.mxu0 0
    %135 = vmatprep.mubr.bf16.mxu0 0
    %136 = vmatmul.mubr.bf16.gmra.mrb[0].mxu0 %v53
    %v137 = vpop.f32.mrb[0].mxu0
    %v138 = vadd.f32 0.0, %v137
    %v139 = vpop.f32.mrb[0].mxu0
    %v140 = vpop.f32.mrb[0].mxu0
    %v141 = vadd.f32 0.0, %v140
    %v142 = vpop.f32.mrb[0].mxu0
    %143 = vdwg.mxu0
    %v144 = vadd.f32 %v29, %v138
    %v145 = vadd.f32 %v30, %v141
    %vm146 = vcmask 261120
    %147 = vst.msk [vmem:[#allocation2] sm:$0xff] %vm146, %v144
    %148 = vst.msk [vmem:[#allocation2 + $0x8] sm:$0xff] %vm146, %v145
    // Predicated region
    $region26: #{block_forward.13} parent=1 // pred_check
      %p149 = pneg %p22
    $region27: #{block_forward.13} parent=1 // pred_check_branch
      %151 = sbr.rel (%p149) target = $region29
    $region28: #{block_forward.13} parent=1 // pred_region
      %v152 = vld [vmem:[#allocation2] sm:$0xff]
      %v153 = vld [vmem:[#allocation2 + $0x8] sm:$0xff]
      %v154 = vld [vmem:[%s2] sm:$0x1]
      %v156 = vlaneseq
      %v157 = vshrl.u32 %v156, 7
      %v158 = vsub.s32 0, %v157
      %v159 = vrot.slane %v154, %v158
      %v161 = vadd.f32 %v152, %v159
      %v162 = vadd.f32 %v153, %v159
      %v163 = vld [vmem:[%s3] sm:$0x1]
      %v165 = vlaneseq
      %v166 = vshrl.u32 %v165, 7
      %v167 = vsub.s32 0, %v166
      %v168 = vrot.slane %v163, %v167
      %v170 = vmul.f32 %v161, %v168
      %v171 = vmul.f32 %v162, %v168
      %v172 = vld [vmem:[%s4] sm:$0xff]
      %v173 = vld [vmem:[%s4 + $0x8] sm:$0xff]
      %v174 = vadd.f32 %v170, %v172
      %v175 = vadd.f32 %v171, %v173
      %176 = vst.msk [vmem:[#allocation3] sm:$0xff] %vm146, %v174
      %177 = vst.msk [vmem:[#allocation3 + $0x8] sm:$0xff] %vm146, %v175
    $region29: #{block_forward.13} parent=1 // pred_fallthru
      _
    // Predicated region
    $region30: #{block_forward.13} parent=1 // pred_check
      _
    $region31: #{block_forward.13} parent=1 // pred_check_branch
      %179 = sbr.rel (0) target = $region33
    $region32: #{block_forward.13} parent=1 // pred_region
      %s181 = ssub.s32 256, 256
      %182 = vsyncadd [#allocation4], %s181
      %s183 = sshll.u32 [#allocation3], 4
      %s184 = int_to_ptr.vmem [resolvable:$true] %s183
      %189 = dma.vmem_to_hbm [thread:$0]  %s184, 256, %s5, [#allocation4], 128, 128, 8
    $region33: #{block_forward.13} parent=1 // pred_fallthru
      _
    // Predicated region
    $region34: #{block_forward.13} parent=1 // pred_check
      _
    $region35: #{block_forward.13} parent=1 // pred_check_branch
      %191 = sbr.rel (0) target = $region37
    $region36: #{block_forward.13} parent=1 // pred_region
      %192 = dma.done [#allocation4], 256
    $region37: #{block_forward.13} parent=1 // pred_fallthru
      _
    %193 = vsyncpa [#allocation4], 1

// kernel: block_forward.9
$region0: #{block_forward.9}
  #allocation0 [shape = 'u32[]', space=smem, size = 0x4, offset = 0x4, fixed_abs, tag = 'smem constant byte address 0x4 - core index']
  #allocation1 [shape = 'u32[144,128]{1,0:T(1,128)}', space=vmem, size = 0x12000, scoped, tag = 'internal scratch']
  #allocation2 [shape = 'f32[4,8,1]{2,1,0:T(8,128)}', space=vmem, size = 0x4000, scoped, tag = 'scratch operand']
  #allocation3 [shape = 'f32[4,8,1]{2,1,0:T(8,128)}', space=vmem, size = 0x4000, scoped, tag = 'scratch operand']
  #allocation4 [shape = 'f32[4,8,8]{2,1,0:T(8,128)}', space=vmem, size = 0x4000, scoped, tag = 'scratch operand']
  %s0 = inlined_call_operand.vmem [shape: bf16[2,8,3,4,8], index: 0, kind: input, shape index: {}, may-alias: {0,1,2}]
  %s1 = inlined_call_operand.vmem [shape: bf16[2,8,3,4,8], index: 1, kind: input, shape index: {}, may-alias: {0,1,2}]
  %s2 = inlined_call_operand.vmem [shape: bf16[2,8,3,4,8], index: 2, kind: input, shape index: {}, may-alias: {0,1,2}]
  %s3 = inlined_call_operand.vmem [shape: bf16[2,8,32], index: 3, kind: output, shape index: {}]
  %s4 = sld [smem:[#allocation0]]
  $region176: #{block_forward.9} parent=0
    _
  %s6 = ssub.s32 1, %s4
  %s7 = scalar_select 0, %s6, %s4
  $region1: #{block_forward.9} parent=0
    #allocation5 [shape = 'u8[16384]{0}', space=vmem, size = 0x4000, scoped, tag = 'input window, operand 0']
    #allocation6 [shape = 'u8[16384]{0}', space=vmem, size = 0x4000, scoped, tag = 'input window, operand 1']
    #allocation7 [shape = 'u8[16384]{0}', space=vmem, size = 0x4000, scoped, tag = 'input window, operand 2']
    loop: start=0, step=1, limit=4
    $region2: #{block_forward.9} parent=1 // loop_pre_header
      _
    $region3: #{block_forward.9} parent=1 // loop_header
      %s9 = sphi 0, %s13
      %p10 = scmp.ge.s32.totalorder %s9, 4
      %s16 = sphi 0, %s35
      %s17 = sphi 0, %s31
      %s18 = sphi 0, %s27
      %s19 = sphi 0, %s16
      %s20 = sphi 0, %s17
      %s21 = sphi 0, %s18
      %s22 = sphi 0, %s19
      %s23 = sphi 0, %s20
      %s24 = sphi 0, %s21
      %s40 = sphi 0, %s42
      %s43 = sphi 0, %s40
      %s44 = sphi 0, %s43
      %s60 = sphi 0, %s44
      %s68 = sphi 0, %s70
      %s71 = sphi 0, %s68
      %s72 = sphi 0, %s71
      %s88 = sphi 0, %s72
      %s96 = sphi 0, %s98
      %s99 = sphi 0, %s96
      %s100 = sphi 0, %s99
      %s116 = sphi 0, %s100
      %s124 = sphi 0, %s126
      %s127 = sphi 0, %s124
      %s128 = sphi 0, %s127
      %s144 = sphi 0, %s128
    $region4: #{block_forward.9} parent=1 // loop_header_branch
      %12 = sbr.rel (%p10) target = $region8
    $region5: #{block_forward.9} parent=1 // loop_body
      %s14 = ssub.s32 %s9, 1
      %s15 = ssub.s32 %s9, 2
      %s25 = sadd.s32 1, %s18
      %p26 = scmp.ge.s32.totalorder %s25, 1
      %s27 = scalar_select %p26, 0, %s25
      %s28 = sadd.s32 1, %s17
      %s29 = scalar_select %p26, %s28, %s17
      %p30 = scmp.ge.s32.totalorder %s29, 1
      %s31 = scalar_select %p30, 0, %s29
      %s32 = sadd.s32 1, %s16
      %s33 = scalar_select %p30, %s32, %s16
      %p34 = scmp.ge.s32.totalorder %s33, 2
      %s35 = scalar_select %p34, 0, %s33
      %s36 = ssub.s32 %s16, %s35
      %s37 = ssub.s32 %s17, %s31
      %s38 = sor.u32 %s36, %s37
      %p39 = scmp.eq.s32.totalorder %s38, 0
      %s41 = sadd.s32 %s40, 1
      %s42 = scalar_select %p39, %s40, %s41
      %p45 = pneg %p39
      %p46 = scmp.eq.s32.totalorder %s9, 1
      %p47 = por %p45, %p46
      %p48 = scmp.ne.s32.totalorder %s40, %s43
      %p49 = scmp.eq.s32.totalorder %s9, 0
      %p50 = por %p48, %p49
      %p51 = scmp.ne.s32.totalorder %s40, %s43
      %p52 = scmp.eq.s32.totalorder %s14, 1
      %p53 = por %p51, %p52
      %p54 = scmp.ne.s32.totalorder %s43, %s44
      %p55 = scmp.eq.s32.totalorder %s14, 0
      %p56 = por %p54, %p55
      %p57 = scmp.ne.s32.totalorder %s43, %s44
      %p58 = scmp.eq.s32.totalorder %s15, 1
      %p59 = por %p57, %p58
      %p61 = scmp.ne.s32.totalorder %s44, %s60
      %p62 = scmp.eq.s32.totalorder %s15, 0
      %p63 = por %p61, %p62
      %s64 = ssub.s32 %s16, %s35
      %s65 = ssub.s32 %s18, %s27
      %s66 = sor.u32 %s64, %s65
      %p67 = scmp.eq.s32.totalorder %s66, 0
      %s69 = sadd.s32 %s68, 1
      %s70 = scalar_select %p67, %s68, %s69
      %p73 = pneg %p67
      %p74 = scmp.eq.s32.totalorder %s9, 1
      %p75 = por %p73, %p74
      %p76 = scmp.ne.s32.totalorder %s68, %s71
      %p77 = scmp.eq.s32.totalorder %s9, 0
      %p78 = por %p76, %p77
      %p79 = scmp.ne.s32.totalorder %s68, %s71
      %p80 = scmp.eq.s32.totalorder %s14, 1
      %p81 = por %p79, %p80
      %p82 = scmp.ne.s32.totalorder %s71, %s72
      %p83 = scmp.eq.s32.totalorder %s14, 0
      %p84 = por %p82, %p83
      %p85 = scmp.ne.s32.totalorder %s71, %s72
      %p86 = scmp.eq.s32.totalorder %s15, 1
      %p87 = por %p85, %p86
      %p89 = scmp.ne.s32.totalorder %s72, %s88
      %p90 = scmp.eq.s32.totalorder %s15, 0
      %p91 = por %p89, %p90
      %s92 = ssub.s32 %s16, %s35
      %s93 = ssub.s32 %s18, %s27
      %s94 = sor.u32 %s92, %s93
      %p95 = scmp.eq.s32.totalorder %s94, 0
      %s97 = sadd.s32 %s96, 1
      %s98 = scalar_select %p95, %s96, %s97
      %p101 = pneg %p95
      %p102 = scmp.eq.s32.totalorder %s9, 1
      %p103 = por %p101, %p102
      %p104 = scmp.ne.s32.totalorder %s96, %s99
      %p105 = scmp.eq.s32.totalorder %s9, 0
      %p106 = por %p104, %p105
      %p107 = scmp.ne.s32.totalorder %s96, %s99
      %p108 = scmp.eq.s32.totalorder %s14, 1
      %p109 = por %p107, %p108
      %p110 = scmp.ne.s32.totalorder %s99, %s100
      %p111 = scmp.eq.s32.totalorder %s14, 0
      %p112 = por %p110, %p111
      %p113 = scmp.ne.s32.totalorder %s99, %s100
      %p114 = scmp.eq.s32.totalorder %s15, 1
      %p115 = por %p113, %p114
      %p117 = scmp.ne.s32.totalorder %s100, %s116
      %p118 = scmp.eq.s32.totalorder %s15, 0
      %p119 = por %p117, %p118
      %s120 = ssub.s32 %s16, %s35
      %s121 = ssub.s32 %s17, %s31
      %s122 = sor.u32 %s120, %s121
      %p123 = scmp.eq.s32.totalorder %s122, 0
      %s125 = sadd.s32 %s124, 1
      %s126 = scalar_select %p123, %s124, %s125
      %p129 = pneg %p123
      %p130 = scmp.eq.s32.totalorder %s9, 1
      %p131 = por %p129, %p130
      %p132 = scmp.ne.s32.totalorder %s124, %s127
      %p133 = scmp.eq.s32.totalorder %s9, 0
      %p134 = por %p132, %p133
      %p135 = scmp.ne.s32.totalorder %s124, %s127
      %p136 = scmp.eq.s32.totalorder %s14, 1
      %p137 = por %p135, %p136
      %p138 = scmp.ne.s32.totalorder %s127, %s128
      %p139 = scmp.eq.s32.totalorder %s14, 0
      %p140 = por %p138, %p139
      %p141 = scmp.ne.s32.totalorder %s127, %s128
      %p142 = scmp.eq.s32.totalorder %s15, 1
      %p143 = por %p141, %p142
      %p145 = scmp.ne.s32.totalorder %s128, %s144
      %p146 = scmp.eq.s32.totalorder %s15, 0
      %p147 = por %p145, %p146
      %p148 = scmp.le.s32.totalorder 1, %s9
      %p149 = scmp.lt.s32.totalorder %s9, 3
      %p150 = pnand %p148, %p149
      %p151 = pneg %p150
      // Predicated region
      $region9: #{block_forward.9} parent=5 // pred_check
        _
      $region10: #{block_forward.9} parent=5 // pred_check_branch
        %153 = sbr.rel (%p150) target = $region12
      $region11: #{block_forward.9} parent=5 // pred_region
        %s154 = ssub.s32 %s9, 1
      $region12: #{block_forward.9} parent=5 // pred_fallthru
        _
      %p155 = scmp.lt.s32.totalorder %s9, 2
      // Predicated region
      $region13: #{block_forward.9} parent=5 // pred_check
        %p156 = pneg %p155
      $region14: #{block_forward.9} parent=5 // pred_check_branch
        %158 = sbr.rel (%p156) target = $region16
      $region15: #{block_forward.9} parent=5 // pred_region
        // Predicated region
        $region17: #{block_forward.9} parent=15 // pred_check
          %p159 = pneg %p50
        $region18: #{block_forward.9} parent=15 // pred_check_branch
          %161 = sbr.rel (%p159) target = $region20
        $region19: #{block_forward.9} parent=15 // pred_region
          %s162 = sand.u32 %s40, 1
          %s163 = sand.u32 %s40, 1
          %s164 = smul.addr %s163, 16
          %s165 = scalar_lea.vmem [#allocation5], %s164
          %s166 = smul.u32 8, %s17
          %s167 = smul.addr %s166, 3
          %s168 = smul.addr %s16, 24
          %s169 = sadd.s32 %s167, %s168
          %s170 = smul.addr %s169, 2
          %s171 = scalar_lea.vmem %s0, %s170
          // Predicated region
          $region21: #{block_forward.9} parent=19 // pred_check
            _
          $region22: #{block_forward.9} parent=19 // pred_check_branch
            %173 = sbr.rel (0) target = $region24
          $region23: #{block_forward.9} parent=19 // pred_region
            // Predicated region
            $region25: #{block_forward.9} parent=23 // pred_check
              _
            $region26: #{block_forward.9} parent=23 // pred_check_branch
              %175 = sbr.rel target = $region28
            $region27: #{block_forward.9} parent=23 // pred_region
              // Predicated region
              $region40: #{block_forward.9} parent=27 // pred_check
                _
              $region41: #{block_forward.9} parent=27 // pred_check_branch
                %204 = sbr.rel (0) target = $region43
              $region42: #{block_forward.9} parent=27 // pred_region
                loop: start=0, step=1, limit=1
                $region44: #{block_forward.9} parent=42 // loop_pre_header
                  _
                $region45: #{block_forward.9} parent=42 // loop_header
                  %s206 = sphi 0, %s210
                  %p207 = scmp.ge.s32.totalorder %s206, 1
                  %s211 = sphi %s171, %s171
                  %s212 = sphi %s165, %s165
                $region46: #{block_forward.9} parent=42 // loop_header_branch
                  %209 = sbr.rel (%p207) target = $region50
                $region47: #{block_forward.9} parent=42 // loop_body
                  _
                $region48: #{block_forward.9} parent=42 // loop_footer
                  %s210 = sadd.s32 1, %s206
                $region49: #{block_forward.9} parent=42 // loop_footer_branch
                  %205 = sbr.rel target = $region45
                $region50: #{block_forward.9} parent=42 // loop_exit
                  _
                loop: start=0, step=1, limit=1
                $region51: #{block_forward.9} parent=42 // loop_pre_header
                  _
                $region52: #{block_forward.9} parent=42 // loop_header
                  %s215 = sphi 0, %s219
                  %p216 = scmp.ge.s32.totalorder %s215, 1
                  %s220 = sphi %s171, %s171
                  %s221 = sphi %s165, %s165
                $region53: #{block_forward.9} parent=42 // loop_header_branch
                  %218 = sbr.rel (%p216) target = $region57
                $region54: #{block_forward.9} parent=42 // loop_body
                  %v222 = vld [vmem:[%s220] sm:$0x3]
                  %223 = vst [vmem:[%s221] sm:$0x3] %v222
                  %v224 = vld [vmem:[%s220 + $0x6] sm:$0x3]
                  %225 = vst [vmem:[%s221 + $0x2] sm:$0x3] %v224
                  %v226 = vld [vmem:[%s220 + $0xc] sm:$0x3]
                  %227 = vst [vmem:[%s221 + $0x4] sm:$0x3] %v226
                  %v228 = vld [vmem:[%s220 + $0x12] sm:$0x3]
                  %229 = vst [vmem:[%s221 + $0x6] sm:$0x3] %v228
                  %v230 = vld [vmem:[%s220 + $0x18] sm:$0x3]
                  %231 = vst [vmem:[%s221 + $0x8] sm:$0x3] %v230
                  %v232 = vld [vmem:[%s220 + $0x1e] sm:$0x3]
                  %233 = vst [vmem:[%s221 + $0xa] sm:$0x3] %v232
                  %v234 = vld [vmem:[%s220 + $0x24] sm:$0x3]
                  %235 = vst [vmem:[%s221 + $0xc] sm:$0x3] %v234
                  %v236 = vld [vmem:[%s220 + $0x2a] sm:$0x3]
                  %237 = vst [vmem:[%s221 + $0xe] sm:$0x3] %v236
                $region55: #{block_forward.9} parent=42 // loop_footer
                  %s219 = sadd.s32 1, %s215
                $region56: #{block_forward.9} parent=42 // loop_footer_branch
                  %214 = sbr.rel target = $region52
                $region57: #{block_forward.9} parent=42 // loop_exit
                  _
              $region43: #{block_forward.9} parent=27 // pred_fallthru
                _
            $region28: #{block_forward.9} parent=23 // pred_fallthru
              _
            // Predicated region
            $region29: #{block_forward.9} parent=23 // pred_check
              _
            $region30: #{block_forward.9} parent=23 // pred_check_branch
              %177 = sbr.rel (0) target = $region32
            $region31: #{block_forward.9} parent=23 // pred_region
              loop: start=0, step=1, limit=1
              $region33: #{block_forward.9} parent=31 // loop_pre_header
                _
              $region34: #{block_forward.9} parent=31 // loop_header
                %s180 = sphi 0, %s184
                %p181 = scmp.ge.s32.totalorder %s180, 1
                %s185 = sphi %s171, %s171
                %s186 = sphi %s165, %s165
              $region35: #{block_forward.9} parent=31 // loop_header_branch
                %183 = sbr.rel (%p181) target = $region39
              $region36: #{block_forward.9} parent=31 // loop_body
                %v187 = vld [vmem:[%s185] sm:$0x3]
                %188 = vst [vmem:[%s186] sm:$0x3] %v187
                %v189 = vld [vmem:[%s185 + $0x6] sm:$0x3]
                %190 = vst [vmem:[%s186 + $0x2] sm:$0x3] %v189
                %v191 = vld [vmem:[%s185 + $0xc] sm:$0x3]
                %192 = vst [vmem:[%s186 + $0x4] sm:$0x3] %v191
                %v193 = vld [vmem:[%s185 + $0x12] sm:$0x3]
                %194 = vst [vmem:[%s186 + $0x6] sm:$0x3] %v193
                %v195 = vld [vmem:[%s185 + $0x18] sm:$0x3]
                %196 = vst [vmem:[%s186 + $0x8] sm:$0x3] %v195
                %v197 = vld [vmem:[%s185 + $0x1e] sm:$0x3]
                %198 = vst [vmem:[%s186 + $0xa] sm:$0x3] %v197
                %v199 = vld [vmem:[%s185 + $0x24] sm:$0x3]
                %200 = vst [vmem:[%s186 + $0xc] sm:$0x3] %v199
                %v201 = vld [vmem:[%s185 + $0x2a] sm:$0x3]
                %202 = vst [vmem:[%s186 + $0xe] sm:$0x3] %v201
              $region37: #{block_forward.9} parent=31 // loop_footer
                %s184 = sadd.s32 1, %s180
              $region38: #{block_forward.9} parent=31 // loop_footer_branch
                %179 = sbr.rel target = $region34
              $region39: #{block_forward.9} parent=31 // loop_exit
                _
            $region32: #{block_forward.9} parent=23 // pred_fallthru
              _
          $region24: #{block_forward.9} parent=19 // pred_fallthru
            _
          %238 = vnop
        $region20: #{block_forward.9} parent=15 // pred_fallthru
          _
        // Predicated region
        $region58: #{block_forward.9} parent=15 // pred_check
          %p239 = pneg %p78
        $region59: #{block_forward.9} parent=15 // pred_check_branch
          %241 = sbr.rel (%p239) target = $region61
        $region60: #{block_forward.9} parent=15 // pred_region
          %s242 = sand.u32 %s68, 1
          %s243 = sand.u32 %s68, 1
          %s244 = smul.addr %s243, 16
          %s245 = scalar_lea.vmem [#allocation6], %s244
          %s246 = smul.u32 8, %s18
          %s247 = smul.addr %s246, 3
          %s248 = sadd.s32 1, %s247
          %s249 = smul.addr %s16, 24
          %s250 = sadd.s32 %s248, %s249
          %s251 = smul.addr %s250, 2
          %s252 = scalar_lea.vmem %s1, %s251
          // Predicated region
          $region62: #{block_forward.9} parent=60 // pred_check
            _
          $region63: #{block_forward.9} parent=60 // pred_check_branch
            %254 = sbr.rel (0) target = $region65
          $region64: #{block_forward.9} parent=60 // pred_region
            // Predicated region
            $region66: #{block_forward.9} parent=64 // pred_check
              _
            $region67: #{block_forward.9} parent=64 // pred_check_branch
              %256 = sbr.rel target = $region69
            $region68: #{block_forward.9} parent=64 // pred_region
              // Predicated region
              $region81: #{block_forward.9} parent=68 // pred_check
                _
              $region82: #{block_forward.9} parent=68 // pred_check_branch
                %285 = sbr.rel (0) target = $region84
              $region83: #{block_forward.9} parent=68 // pred_region
                loop: start=0, step=1, limit=1
                $region85: #{block_forward.9} parent=83 // loop_pre_header
                  _
                $region86: #{block_forward.9} parent=83 // loop_header
                  %s287 = sphi 0, %s291
                  %p288 = scmp.ge.s32.totalorder %s287, 1
                  %s292 = sphi %s252, %s252
                  %s293 = sphi %s245, %s245
                $region87: #{block_forward.9} parent=83 // loop_header_branch
                  %290 = sbr.rel (%p288) target = $region91
                $region88: #{block_forward.9} parent=83 // loop_body
                  _
                $region89: #{block_forward.9} parent=83 // loop_footer
                  %s291 = sadd.s32 1, %s287
                $region90: #{block_forward.9} parent=83 // loop_footer_branch
                  %286 = sbr.rel target = $region86
                $region91: #{block_forward.9} parent=83 // loop_exit
                  _
                loop: start=0, step=1, limit=1
                $region92: #{block_forward.9} parent=83 // loop_pre_header
                  _
                $region93: #{block_forward.9} parent=83 // loop_header
                  %s296 = sphi 0, %s300
                  %p297 = scmp.ge.s32.totalorder %s296, 1
                  %s301 = sphi %s252, %s252
                  %s302 = sphi %s245, %s245
                $region94: #{block_forward.9} parent=83 // loop_header_branch
                  %299 = sbr.rel (%p297) target = $region98
                $region95: #{block_forward.9} parent=83 // loop_body
                  %v303 = vld [vmem:[%s301] sm:$0x3]
                  %304 = vst [vmem:[%s302] sm:$0x3] %v303
                  %v305 = vld [vmem:[%s301 + $0x6] sm:$0x3]
                  %306 = vst [vmem:[%s302 + $0x2] sm:$0x3] %v305
                  %v307 = vld [vmem:[%s301 + $0xc] sm:$0x3]
                  %308 = vst [vmem:[%s302 + $0x4] sm:$0x3] %v307
                  %v309 = vld [vmem:[%s301 + $0x12] sm:$0x3]
                  %310 = vst [vmem:[%s302 + $0x6] sm:$0x3] %v309
                  %v311 = vld [vmem:[%s301 + $0x18] sm:$0x3]
                  %312 = vst [vmem:[%s302 + $0x8] sm:$0x3] %v311
                  %v313 = vld [vmem:[%s301 + $0x1e] sm:$0x3]
                  %314 = vst [vmem:[%s302 + $0xa] sm:$0x3] %v313
                  %v315 = vld [vmem:[%s301 + $0x24] sm:$0x3]
                  %316 = vst [vmem:[%s302 + $0xc] sm:$0x3] %v315
                  %v317 = vld [vmem:[%s301 + $0x2a] sm:$0x3]
                  %318 = vst [vmem:[%s302 + $0xe] sm:$0x3] %v317
                $region96: #{block_forward.9} parent=83 // loop_footer
                  %s300 = sadd.s32 1, %s296
                $region97: #{block_forward.9} parent=83 // loop_footer_branch
                  %295 = sbr.rel target = $region93
                $region98: #{block_forward.9} parent=83 // loop_exit
                  _
              $region84: #{block_forward.9} parent=68 // pred_fallthru
                _
            $region69: #{block_forward.9} parent=64 // pred_fallthru
              _
            // Predicated region
            $region70: #{block_forward.9} parent=64 // pred_check
              _
            $region71: #{block_forward.9} parent=64 // pred_check_branch
              %258 = sbr.rel (0) target = $region73
            $region72: #{block_forward.9} parent=64 // pred_region
              loop: start=0, step=1, limit=1
              $region74: #{block_forward.9} parent=72 // loop_pre_header
                _
              $region75: #{block_forward.9} parent=72 // loop_header
                %s261 = sphi 0, %s265
                %p262 = scmp.ge.s32.totalorder %s261, 1
                %s266 = sphi %s252, %s252
                %s267 = sphi %s245, %s245
              $region76: #{block_forward.9} parent=72 // loop_header_branch
                %264 = sbr.rel (%p262) target = $region80
              $region77: #{block_forward.9} parent=72 // loop_body
                %v268 = vld [vmem:[%s266] sm:$0x3]
                %269 = vst [vmem:[%s267] sm:$0x3] %v268
                %v270 = vld [vmem:[%s266 + $0x6] sm:$0x3]
                %271 = vst [vmem:[%s267 + $0x2] sm:$0x3] %v270
                %v272 = vld [vmem:[%s266 + $0xc] sm:$0x3]
                %273 = vst [vmem:[%s267 + $0x4] sm:$0x3] %v272
                %v274 = vld [vmem:[%s266 + $0x12] sm:$0x3]
                %275 = vst [vmem:[%s267 + $0x6] sm:$0x3] %v274
                %v276 = vld [vmem:[%s266 + $0x18] sm:$0x3]
                %277 = vst [vmem:[%s267 + $0x8] sm:$0x3] %v276
                %v278 = vld [vmem:[%s266 + $0x1e] sm:$0x3]
                %279 = vst [vmem:[%s267 + $0xa] sm:$0x3] %v278
                %v280 = vld [vmem:[%s266 + $0x24] sm:$0x3]
                %281 = vst [vmem:[%s267 + $0xc] sm:$0x3] %v280
                %v282 = vld [vmem:[%s266 + $0x2a] sm:$0x3]
                %283 = vst [vmem:[%s267 + $0xe] sm:$0x3] %v282
              $region78: #{block_forward.9} parent=72 // loop_footer
                %s265 = sadd.s32 1, %s261
              $region79: #{block_forward.9} parent=72 // loop_footer_branch
                %260 = sbr.rel target = $region75
              $region80: #{block_forward.9} parent=72 // loop_exit
                _
            $region73: #{block_forward.9} parent=64 // pred_fallthru
              _
          $region65: #{block_forward.9} parent=60 // pred_fallthru
            _
          %319 = vnop
        $region61: #{block_forward.9} parent=15 // pred_fallthru
          _
        // Predicated region
        $region99: #{block_forward.9} parent=15 // pred_check
          %p320 = pneg %p106
        $region100: #{block_forward.9} parent=15 // pred_check_branch
          %322 = sbr.rel (%p320) target = $region102
        $region101: #{block_forward.9} parent=15 // pred_region
          %s323 = sand.u32 %s96, 1
          %s324 = sand.u32 %s96, 1
          %s325 = smul.addr %s324, 16
          %s326 = scalar_lea.vmem [#allocation7], %s325
          %s327 = smul.u32 8, %s18
          %s328 = smul.addr %s327, 3
          %s329 = sadd.s32 2, %s328
          %s330 = smul.addr %s16, 24
          %s331 = sadd.s32 %s329, %s330
          %s332 = smul.addr %s331, 2
          %s333 = scalar_lea.vmem %s2, %s332
          // Predicated region
          $region103: #{block_forward.9} parent=101 // pred_check
            _
          $region104: #{block_forward.9} parent=101 // pred_check_branch
            %335 = sbr.rel (0) target = $region106
          $region105: #{block_forward.9} parent=101 // pred_region
            // Predicated region
            $region107: #{block_forward.9} parent=105 // pred_check
              _
            $region108: #{block_forward.9} parent=105 // pred_check_branch
              %337 = sbr.rel target = $region110
            $region109: #{block_forward.9} parent=105 // pred_region
              // Predicated region
              $region122: #{block_forward.9} parent=109 // pred_check
                _
              $region123: #{block_forward.9} parent=109 // pred_check_branch
                %366 = sbr.rel (0) target = $region125
              $region124: #{block_forward.9} parent=109 // pred_region
                loop: start=0, step=1, limit=1
                $region126: #{block_forward.9} parent=124 // loop_pre_header
                  _
                $region127: #{block_forward.9} parent=124 // loop_header
                  %s368 = sphi 0, %s372
                  %p369 = scmp.ge.s32.totalorder %s368, 1
                  %s373 = sphi %s333, %s333
                  %s374 = sphi %s326, %s326
                $region128: #{block_forward.9} parent=124 // loop_header_branch
                  %371 = sbr.rel (%p369) target = $region132
                $region129: #{block_forward.9} parent=124 // loop_body
                  _
                $region130: #{block_forward.9} parent=124 // loop_footer
                  %s372 = sadd.s32 1, %s368
                $region131: #{block_forward.9} parent=124 // loop_footer_branch
                  %367 = sbr.rel target = $region127
                $region132: #{block_forward.9} parent=124 // loop_exit
                  _
                loop: start=0, step=1, limit=1
                $region133: #{block_forward.9} parent=124 // loop_pre_header
                  _
                $region134: #{block_forward.9} parent=124 // loop_header
                  %s377 = sphi 0, %s381
                  %p378 = scmp.ge.s32.totalorder %s377, 1
                  %s382 = sphi %s333, %s333
                  %s383 = sphi %s326, %s326
                $region135: #{block_forward.9} parent=124 // loop_header_branch
                  %380 = sbr.rel (%p378) target = $region139
                $region136: #{block_forward.9} parent=124 // loop_body
                  %v384 = vld [vmem:[%s382] sm:$0x3]
                  %385 = vst [vmem:[%s383] sm:$0x3] %v384
                  %v386 = vld [vmem:[%s382 + $0x6] sm:$0x3]
                  %387 = vst [vmem:[%s383 + $0x2] sm:$0x3] %v386
                  %v388 = vld [vmem:[%s382 + $0xc] sm:$0x3]
                  %389 = vst [vmem:[%s383 + $0x4] sm:$0x3] %v388
                  %v390 = vld [vmem:[%s382 + $0x12] sm:$0x3]
                  %391 = vst [vmem:[%s383 + $0x6] sm:$0x3] %v390
                  %v392 = vld [vmem:[%s382 + $0x18] sm:$0x3]
                  %393 = vst [vmem:[%s383 + $0x8] sm:$0x3] %v392
                  %v394 = vld [vmem:[%s382 + $0x1e] sm:$0x3]
                  %395 = vst [vmem:[%s383 + $0xa] sm:$0x3] %v394
                  %v396 = vld [vmem:[%s382 + $0x24] sm:$0x3]
                  %397 = vst [vmem:[%s383 + $0xc] sm:$0x3] %v396
                  %v398 = vld [vmem:[%s382 + $0x2a] sm:$0x3]
                  %399 = vst [vmem:[%s383 + $0xe] sm:$0x3] %v398
                $region137: #{block_forward.9} parent=124 // loop_footer
                  %s381 = sadd.s32 1, %s377
                $region138: #{block_forward.9} parent=124 // loop_footer_branch
                  %376 = sbr.rel target = $region134
                $region139: #{block_forward.9} parent=124 // loop_exit
                  _
              $region125: #{block_forward.9} parent=109 // pred_fallthru
                _
            $region110: #{block_forward.9} parent=105 // pred_fallthru
              _
            // Predicated region
            $region111: #{block_forward.9} parent=105 // pred_check
              _
            $region112: #{block_forward.9} parent=105 // pred_check_branch
              %339 = sbr.rel (0) target = $region114
            $region113: #{block_forward.9} parent=105 // pred_region
              loop: start=0, step=1, limit=1
              $region115: #{block_forward.9} parent=113 // loop_pre_header
                _
              $region116: #{block_forward.9} parent=113 // loop_header
                %s342 = sphi 0, %s346
                %p343 = scmp.ge.s32.totalorder %s342, 1
                %s347 = sphi %s333, %s333
                %s348 = sphi %s326, %s326
              $region117: #{block_forward.9} parent=113 // loop_header_branch
                %345 = sbr.rel (%p343) target = $region121
              $region118: #{block_forward.9} parent=113 // loop_body
                %v349 = vld [vmem:[%s347] sm:$0x3]
                %350 = vst [vmem:[%s348] sm:$0x3] %v349
                %v351 = vld [vmem:[%s347 + $0x6] sm:$0x3]
                %352 = vst [vmem:[%s348 + $0x2] sm:$0x3] %v351
                %v353 = vld [vmem:[%s347 + $0xc] sm:$0x3]
                %354 = vst [vmem:[%s348 + $0x4] sm:$0x3] %v353
                %v355 = vld [vmem:[%s347 + $0x12] sm:$0x3]
                %356 = vst [vmem:[%s348 + $0x6] sm:$0x3] %v355
                %v357 = vld [vmem:[%s347 + $0x18] sm:$0x3]
                %358 = vst [vmem:[%s348 + $0x8] sm:$0x3] %v357
                %v359 = vld [vmem:[%s347 + $0x1e] sm:$0x3]
                %360 = vst [vmem:[%s348 + $0xa] sm:$0x3] %v359
                %v361 = vld [vmem:[%s347 + $0x24] sm:$0x3]
                %362 = vst [vmem:[%s348 + $0xc] sm:$0x3] %v361
                %v363 = vld [vmem:[%s347 + $0x2a] sm:$0x3]
                %364 = vst [vmem:[%s348 + $0xe] sm:$0x3] %v363
              $region119: #{block_forward.9} parent=113 // loop_footer
                %s346 = sadd.s32 1, %s342
              $region120: #{block_forward.9} parent=113 // loop_footer_branch
                %341 = sbr.rel target = $region116
              $region121: #{block_forward.9} parent=113 // loop_exit
                _
            $region114: #{block_forward.9} parent=105 // pred_fallthru
              _
          $region106: #{block_forward.9} parent=101 // pred_fallthru
            _
          %400 = vnop
        $region102: #{block_forward.9} parent=15 // pred_fallthru
          _
      $region16: #{block_forward.9} parent=5 // pred_fallthru
        _
      %p401 = scmp.le.s32.totalorder 1, %s9
      %p402 = scmp.lt.s32.totalorder %s9, 3
      %p403 = pnand %p401, %p402
      %p404 = pneg %p403
      // Predicated region
      $region140: #{block_forward.9} parent=5 // pred_check
        _
      $region141: #{block_forward.9} parent=5 // pred_check_branch
        %406 = sbr.rel (%p403) target = $region143
      $region142: #{block_forward.9} parent=5 // pred_region
        %s407 = ssub.s32 %s9, 1
        %s408 = sand.u32 %s43, 1
        %s409 = sand.u32 %s43, 1
        %s410 = smul.addr %s409, 16
        %s411 = scalar_lea.vmem [#allocation5], %s410
        // Predicated region
        $region144: #{block_forward.9} parent=142 // pred_check
          %p412 = pneg %p56
        $region145: #{block_forward.9} parent=142 // pred_check_branch
          %414 = sbr.rel (%p412) target = $region147
        $region146: #{block_forward.9} parent=142 // pred_region
          _
        $region147: #{block_forward.9} parent=142 // pred_fallthru
          _
        %s415 = sand.u32 %s71, 1
        %s416 = sand.u32 %s71, 1
        %s417 = smul.addr %s416, 16
        %s418 = scalar_lea.vmem [#allocation6], %s417
        // Predicated region
        $region148: #{block_forward.9} parent=142 // pred_check
          %p419 = pneg %p84
        $region149: #{block_forward.9} parent=142 // pred_check_branch
          %421 = sbr.rel (%p419) target = $region151
        $region150: #{block_forward.9} parent=142 // pred_region
          _
        $region151: #{block_forward.9} parent=142 // pred_fallthru
          _
        %s422 = sand.u32 %s99, 1
        %s423 = sand.u32 %s99, 1
        %s424 = smul.addr %s423, 16
        %s425 = scalar_lea.vmem [#allocation7], %s424
        // Predicated region
        $region152: #{block_forward.9} parent=142 // pred_check
          %p426 = pneg %p112
        $region153: #{block_forward.9} parent=142 // pred_check_branch
          %428 = sbr.rel (%p426) target = $region155
        $region154: #{block_forward.9} parent=142 // pred_region
          _
        $region155: #{block_forward.9} parent=142 // pred_fallthru
          _
        %s429 = sand.u32 %s43, 1
        %s430 = sand.u32 %s43, 1
        %s431 = smul.addr %s430, 16
        %s432 = scalar_lea.vmem [#allocation5], %s431
        %p433 = pneg %p56
        %p434 = pneg %p53
        %s435 = sand.u32 %s71, 1
        %s436 = sand.u32 %s71, 1
        %s437 = smul.addr %s436, 16
        %s438 = scalar_lea.vmem [#allocation6], %s437
        %p439 = pneg %p84
        %p440 = pneg %p81
        %s441 = sand.u32 %s99, 1
        %s442 = sand.u32 %s99, 1
        %s443 = smul.addr %s442, 16
        %s444 = scalar_lea.vmem [#allocation7], %s443
        %p445 = pneg %p112
        %p446 = pneg %p109
        %p447 = pneg %p140
        %p448 = pneg %p137
        %p449 = scmp.lt.s32.totalorder %s19, 1
        %s450 = scalar_select %p449, %s19, 1
        %p451 = scmp.lt.s32.totalorder %s20, 0
        %s452 = scalar_select %p451, %s20, 0
        %s453 = sadd.s32 %s452, %s450
        %s454 = smul.addr %s453, 4
        %s455 = scalar_lea.vmem %s3, %s454
        %s456 = smul.u32 8, %s20
        %s457 = smul.u32 8, %s21
        %s458 = smul.u32 8, %s21
        %p459 = scmp.lt.s32.totalorder %s19, 1
        %s460 = scalar_select %p459, %s19, 1
        %p461 = scmp.lt.s32.totalorder %s20, 0
        %s462 = scalar_select %p461, %s20, 0
        %s463 = sadd.s32 %s462, %s460
        %s464 = smul.addr %s463, 4
        %s465 = scalar_lea.vmem %s3, %s464
        %p467 = scmp.eq.s32.totalorder %s21, 0
        // Predicated region
        $region156: #{block_forward.9} parent=142 // pred_check
          %p468 = pneg %p467
        $region157: #{block_forward.9} parent=142 // pred_check_branch
          %470 = sbr.rel (%p468) target = $region159
        $region158: #{block_forward.9} parent=142 // pred_region
          %vm471 = vcmask 7168
          %472 = vst.msk [vmem:[#allocation2] sm:$0xff] %vm471, -inf
          %473 = vst.msk [vmem:[#allocation2 + $0x8] sm:$0xff] %vm471, -inf
          %474 = vst.msk [vmem:[#allocation2 + $0x10] sm:$0xff] %vm471, -inf
          %475 = vst.msk [vmem:[#allocation2 + $0x18] sm:$0xff] %vm471, -inf
          %476 = vst.msk [vmem:[#allocation3] sm:$0xff] %vm471, 0.0
          %477 = vst.msk [vmem:[#allocation3 + $0x8] sm:$0xff] %vm471, 0.0
          %478 = vst.msk [vmem:[#allocation3 + $0x10] sm:$0xff] %vm471, 0.0
          %479 = vst.msk [vmem:[#allocation3 + $0x18] sm:$0xff] %vm471, 0.0
          %vm480 = vcmask 64512
          %481 = vst.msk [vmem:[#allocation4] sm:$0xff] %vm480, 0.0
          %482 = vst.msk [vmem:[#allocation4 + $0x8] sm:$0xff] %vm480, 0.0
          %483 = vst.msk [vmem:[#allocation4 + $0x10] sm:$0xff] %vm480, 0.0
          %484 = vst.msk [vmem:[#allocation4 + $0x18] sm:$0xff] %vm480, 0.0
        $region159: #{block_forward.9} parent=142 // pred_fallthru
          _
        %v485 = vld [vmem:[%s411] sm:$0x1]
        %v486 = vld [vmem:[%s411 + $0x2] sm:$0x1]
        %v487 = vld [vmem:[%s411 + $0x4] sm:$0x1]
        %v488 = vld [vmem:[%s411 + $0x6] sm:$0x1]
        %v489 = vld [vmem:[%s411 + $0x8] sm:$0x1]
        %v490 = vld [vmem:[%s411 + $0xa] sm:$0x1]
        %v491 = vld [vmem:[%s411 + $0xc] sm:$0x1]
        %v492 = vld [vmem:[%s411 + $0xe] sm:$0x1]
        %v493 = vld [vmem:[%s418] sm:$0x1]
        %v494 = vld [vmem:[%s418 + $0x2] sm:$0x1]
        %v495 = vld [vmem:[%s418 + $0x4] sm:$0x1]
        %v496 = vld [vmem:[%s418 + $0x6] sm:$0x1]
        %v497 = vld [vmem:[%s418 + $0x8] sm:$0x1]
        %v498 = vld [vmem:[%s418 + $0xa] sm:$0x1]
        %v499 = vld [vmem:[%s418 + $0xc] sm:$0x1]
        %v500 = vld [vmem:[%s418 + $0xe] sm:$0x1]
        %v501 = vld [vmem:[%s425] sm:$0x1]
        %v502 = vld [vmem:[%s425 + $0x2] sm:$0x1]
        %v503 = vld [vmem:[%s425 + $0x4] sm:$0x1]
        %v504 = vld [vmem:[%s425 + $0x6] sm:$0x1]
        %v505 = vld [vmem:[%s425 + $0x8] sm:$0x1]
        %v506 = vld [vmem:[%s425 + $0xa] sm:$0x1]
        %v507 = vld [vmem:[%s425 + $0xc] sm:$0x1]
        %v508 = vld [vmem:[%s425 + $0xe] sm:$0x1]
        %v518 = vunpack.c.l.s4 1983009808
        %v519 = vunpack.c.0.s8 %v518
        %v520 = vlaneseq
        %v521 = vshrl.u32 %v520, 7
        %v522 = vsub.s32 %v519, %v521
        %v523 = vrot.slane %v485, %v522
        %v525 = vunpack.c.l.s4 1983009808
        %v526 = vunpack.c.0.s8 %v525
        %v527 = vlaneseq
        %v528 = vshrl.u32 %v527, 7
        %v529 = vsub.s32 %v526, %v528
        %v530 = vrot.slane %v486, %v529
        %v532 = vunpack.c.l.s4 1983009808
        %v533 = vunpack.c.0.s8 %v532
        %v534 = vlaneseq
        %v535 = vshrl.u32 %v534, 7
        %v536 = vsub.s32 %v533, %v535
        %v537 = vrot.slane %v487, %v536
        %v539 = vunpack.c.l.s4 1983009808
        %v540 = vunpack.c.0.s8 %v539
        %v541 = vlaneseq
        %v542 = vshrl.u32 %v541, 7
        %v543 = vsub.s32 %v540, %v542
        %v544 = vrot.slane %v488, %v543
        %v546 = vunpack.c.l.s4 1983009808
        %v547 = vunpack.c.0.s8 %v546
        %v548 = vlaneseq
        %v549 = vshrl.u32 %v548, 7
        %v550 = vsub.s32 %v547, %v549
        %v551 = vrot.slane %v489, %v550
        %v553 = vunpack.c.l.s4 1983009808
        %v554 = vunpack.c.0.s8 %v553
        %v555 = vlaneseq
        %v556 = vshrl.u32 %v555, 7
        %v557 = vsub.s32 %v554, %v556
        %v558 = vrot.slane %v490, %v557
        %v560 = vunpack.c.l.s4 1983009808
        %v561 = vunpack.c.0.s8 %v560
        %v562 = vlaneseq
        %v563 = vshrl.u32 %v562, 7
        %v564 = vsub.s32 %v561, %v563
        %v565 = vrot.slane %v491, %v564
        %v567 = vunpack.c.l.s4 1983009808
        %v568 = vunpack.c.0.s8 %v567
        %v569 = vlaneseq
        %v570 = vshrl.u32 %v569, 7
        %v571 = vsub.s32 %v568, %v570
        %v572 = vrot.slane %v492, %v571
        %v573 = vunpack.c.l.b16 %v523
        %v574 = vunpack.c.l.b16 %v530
        %v575 = vunpack.c.l.b16 %v537
        %v576 = vunpack.c.l.b16 %v544
        %v577 = vunpack.c.l.b16 %v551
        %v578 = vunpack.c.l.b16 %v558
        %v579 = vunpack.c.l.b16 %v565
        %v580 = vunpack.c.l.b16 %v572
        %v581 = vrot.slane %v574, 7
        %vm582 = vcmask 1041409
        %v583 = vsel %vm582, %v581, %v573
        %v584 = vrot.slane %v575, 6
        %vm585 = vcmask 1042434
        %v586 = vsel %vm585, %v584, %v583
        %v587 = vrot.slane %v576, 5
        %vm588 = vcmask 1043459
        %v589 = vsel %vm588, %v587, %v586
        %v590 = vrot.slane %v577, 4
        %vm591 = vcmask 1044484
        %v592 = vsel %vm591, %v590, %v589
        %v593 = vrot.slane %v578, 3
        %vm594 = vcmask 1045509
        %v595 = vsel %vm594, %v593, %v592
        %v596 = vrot.slane %v579, 2
        %vm597 = vcmask 1046534
        %v598 = vsel %vm597, %v596, %v595
        %v599 = vrot.slane %v580, 1
        %vm600 = vcmask 1047559
        %v601 = vsel %vm600, %v599, %v598
        %v602 = vpack.c.b16 %v601, %v601
        %v612 = vunpack.c.l.s4 1983009808
        %v613 = vunpack.c.0.s8 %v612
        %v614 = vlaneseq
        %v615 = vshrl.u32 %v614, 7
        %v616 = vsub.s32 %v613, %v615
        %v617 = vrot.slane %v493, %v616
        %v619 = vunpack.c.l.s4 1983009808
        %v620 = vunpack.c.0.s8 %v619
        %v621 = vlaneseq
        %v622 = vshrl.u32 %v621, 7
        %v623 = vsub.s32 %v620, %v622
        %v624 = vrot.slane %v494, %v623
        %v626 = vunpack.c.l.s4 1983009808
        %v627 = vunpack.c.0.s8 %v626
        %v628 = vlaneseq
        %v629 = vshrl.u32 %v628, 7
        %v630 = vsub.s32 %v627, %v629
        %v631 = vrot.slane %v495, %v630
        %v633 = vunpack.c.l.s4 1983009808
        %v634 = vunpack.c.0.s8 %v633
        %v635 = vlaneseq
        %v636 = vshrl.u32 %v635, 7
        %v637 = vsub.s32 %v634, %v636
        %v638 = vrot.slane %v496, %v637
        %v640 = vunpack.c.l.s4 1983009808
        %v641 = vunpack.c.0.s8 %v640
        %v642 = vlaneseq
        %v643 = vshrl.u32 %v642, 7
        %v644 = vsub.s32 %v641, %v643
        %v645 = vrot.slane %v497, %v644
        %v647 = vunpack.c.l.s4 1983009808
        %v648 = vunpack.c.0.s8 %v647
        %v649 = vlaneseq
        %v650 = vshrl.u32 %v649, 7
        %v651 = vsub.s32 %v648, %v650
        %v652 = vrot.slane %v498, %v651
        %v654 = vunpack.c.l.s4 1983009808
        %v655 = vunpack.c.0.s8 %v654
        %v656 = vlaneseq
        %v657 = vshrl.u32 %v656, 7
        %v658 = vsub.s32 %v655, %v657
        %v659 = vrot.slane %v499, %v658
        %v661 = vunpack.c.l.s4 1983009808
        %v662 = vunpack.c.0.s8 %v661
        %v663 = vlaneseq
        %v664 = vshrl.u32 %v663, 7
        %v665 = vsub.s32 %v662, %v664
        %v666 = vrot.slane %v500, %v665
        %v667 = vunpack.c.l.b16 %v617
        %v668 = vunpack.c.l.b16 %v624
        %v669 = vunpack.c.l.b16 %v631
        %v670 = vunpack.c.l.b16 %v638
        %v671 = vunpack.c.l.b16 %v645
        %v672 = vunpack.c.l.b16 %v652
        %v673 = vunpack.c.l.b16 %v659
        %v674 = vunpack.c.l.b16 %v666
        %v675 = vrot.slane %v668, 7
        %v676 = vsel %vm582, %v675, %v667
        %v677 = vrot.slane %v669, 6
        %v678 = vsel %vm585, %v677, %v676
        %v679 = vrot.slane %v670, 5
        %v680 = vsel %vm588, %v679, %v678
        %v681 = vrot.slane %v671, 4
        %v682 = vsel %vm591, %v681, %v680
        %v683 = vrot.slane %v672, 3
        %v684 = vsel %vm594, %v683, %v682
        %v685 = vrot.slane %v673, 2
        %v686 = vsel %vm597, %v685, %v684
        %v687 = vrot.slane %v674, 1
        %v688 = vsel %vm600, %v687, %v686
        %v689 = vpack.c.b16 %v688, %v688
        %vm690 = vcmask 64512
        %v692 = vsel %vm690, %v602, 0
        %v695 = vsel %vm690, %v689, 0
        %697 = vmatprep.subr.bf16.mxu0 0
        %698 = vmatpush1.bf16.xpose.msra.mxu0 %v695
        %699 = vmatprep.subr.bf16.mxu0 0
        %700 = vmatpush1.bf16.xpose.msra.mxu0 0
        %701 = vmatprep.subr.bf16.mxu0 0
        %702 = vmatpush1.bf16.xpose.msra.mxu0 0
        %703 = vmatprep.subr.bf16.mxu0 0
        %704 = vmatpush1.bf16.xpose.msra.mxu0 0
        %705 = vmatprep.subr.bf16.mxu0 0
        %706 = vmatpush1.bf16.xpose.msra.mxu0 0
        %707 = vmatprep.subr.bf16.mxu0 0
        %708 = vmatpush1.bf16.xpose.msra.mxu0 0
        %709 = vmatprep.subr.bf16.mxu0 0
        %710 = vmatpush1.bf16.xpose.msra.mxu0 0
        %711 = vmatprep.subr.bf16.mxu0 0
        %712 = vmatpush1.bf16.xpose.msra.mxu0 0
        %713 = vmatprep.subr.bf16.mxu0 0
        %714 = vmatpush1.bf16.xpose.msra.mxu0 0
        %715 = vmatprep.subr.bf16.mxu0 0
        %716 = vmatpush1.bf16.xpose.msra.mxu0 0
        %717 = vmatprep.subr.bf16.mxu0 0
        %718 = vmatpush1.bf16.xpose.msra.mxu0 0
        %719 = vmatprep.subr.bf16.mxu0 0
        %720 = vmatpush1.bf16.xpose.msra.mxu0 0
        %721 = vmatprep.subr.bf16.mxu0 0
        %722 = vmatpush1.bf16.xpose.msra.mxu0 0
        %723 = vmatprep.subr.bf16.mxu0 0
        %724 = vmatpush1.bf16.xpose.msra.mxu0 0
        %725 = vmatprep.subr.bf16.mxu0 0
        %726 = vmatpush1.bf16.xpose.msra.mxu0 0
        %727 = vmatprep.subr.bf16.mxu0 0
        %728 = vmatpush1.bf16.xpose.msra.mxu0 0
        %729 = vmatprep.mubr.bf16.mxu0 0
        %730 = vmatmul.mubr.bf16.gmra.mrb[0].mxu0 %v692
        %v731 = vpop.f32.mrb[0].mxu0
        %v732 = vadd.f32 0.0, %v731
        %v733 = vpop.f32.mrb[0].mxu0
        %v734 = vpop.f32.mrb[0].mxu0
        %v735 = vpop.f32.mrb[0].mxu0
        %736 = vdwg.mxu0
        %v737 = vmul.f32 %v732, 0.35355338
        %v738 = vld [vmem:[#allocation2] sm:$0xff]
        %v739 = vsel %vm690, %v737, -inf
        %740 = vmax.xlane.f32.xlu0 %v739
        %v741 = vpop.xlane.xlu0 %740
        %v742 = vmax.f32 %v738, %v741
        %v743 = vsub.f32 %v738, %v742
        %v744 = vmul.f32 %v743, 1.442695
        %v745 = vpow.pop %v744
        %747 = vset.pattern.permute.xlu0 0
        %748 = vperm.xlu0 %747, %v742
        %v749 = vpop.permute.xlu0 %748
        %v751 = vsub.f32 %v737, %v749
        %v752 = vmul.f32 %v751, 1.442695
        %v753 = vpow.pop %v752
        %v754 = vld [vmem:[#allocation3] sm:$0xff]
        %v755 = vmul.f32 %v745, %v754
        %v756 = vsel %vm690, %v753, 0.0
        %757 = vadd.xlane.f32.xlu0 %v756
        %v758 = vpop.xlane.xlu0 %757
        %v759 = vadd.f32 %v755, %v758
        %vm760 = vcmask 7168
        %761 = vst.msk [vmem:[#allocation3] sm:$0xff] %vm760, %v759
        %v762 = vld [vmem:[#allocation4] sm:$0xff]
        %764 = vset.pattern.permute.xlu0 0
        %765 = vperm.xlu0 %764, %v745
        %v766 = vpop.permute.xlu0 %765
        %v768 = vmul.f32 %v766, %v762
        %v769 = vpack.c.bf16 %v753, %v753
        %v779 = vunpack.c.l.s4 1983009808
        %v780 = vunpack.c.0.s8 %v779
        %v781 = vlaneseq
        %v782 = vshrl.u32 %v781, 7
        %v783 = vsub.s32 %v780, %v782
        %v784 = vrot.slane %v501, %v783
        %v786 = vunpack.c.l.s4 1983009808
        %v787 = vunpack.c.0.s8 %v786
        %v788 = vlaneseq
        %v789 = vshrl.u32 %v788, 7
        %v790 = vsub.s32 %v787, %v789
        %v791 = vrot.slane %v502, %v790
        %v793 = vunpack.c.l.s4 1983009808
        %v794 = vunpack.c.0.s8 %v793
        %v795 = vlaneseq
        %v796 = vshrl.u32 %v795, 7
        %v797 = vsub.s32 %v794, %v796
        %v798 = vrot.slane %v503, %v797
        %v800 = vunpack.c.l.s4 1983009808
        %v801 = vunpack.c.0.s8 %v800
        %v802 = vlaneseq
        %v803 = vshrl.u32 %v802, 7
        %v804 = vsub.s32 %v801, %v803
        %v805 = vrot.slane %v504, %v804
        %v807 = vunpack.c.l.s4 1983009808
        %v808 = vunpack.c.0.s8 %v807
        %v809 = vlaneseq
        %v810 = vshrl.u32 %v809, 7
        %v811 = vsub.s32 %v808, %v810
        %v812 = vrot.slane %v505, %v811
        %v814 = vunpack.c.l.s4 1983009808
        %v815 = vunpack.c.0.s8 %v814
        %v816 = vlaneseq
        %v817 = vshrl.u32 %v816, 7
        %v818 = vsub.s32 %v815, %v817
        %v819 = vrot.slane %v506, %v818
        %v821 = vunpack.c.l.s4 1983009808
        %v822 = vunpack.c.0.s8 %v821
        %v823 = vlaneseq
        %v824 = vshrl.u32 %v823, 7
        %v825 = vsub.s32 %v822, %v824
        %v826 = vrot.slane %v507, %v825
        %v828 = vunpack.c.l.s4 1983009808
        %v829 = vunpack.c.0.s8 %v828
        %v830 = vlaneseq
        %v831 = vshrl.u32 %v830, 7
        %v832 = vsub.s32 %v829, %v831
        %v833 = vrot.slane %v508, %v832
        %v834 = vunpack.c.l.b16 %v784
        %v835 = vunpack.c.l.b16 %v791
        %v836 = vunpack.c.l.b16 %v798
        %v837 = vunpack.c.l.b16 %v805
        %v838 = vunpack.c.l.b16 %v812
        %v839 = vunpack.c.l.b16 %v819
        %v840 = vunpack.c.l.b16 %v826
        %v841 = vunpack.c.l.b16 %v833
        %v842 = vrot.slane %v835, 7
        %v843 = vsel %vm582, %v842, %v834
        %v844 = vrot.slane %v836, 6
        %v845 = vsel %vm585, %v844, %v843
        %v846 = vrot.slane %v837, 5
        %v847 = vsel %vm588, %v846, %v845
        %v848 = vrot.slane %v838, 4
        %v849 = vsel %vm591, %v848, %v847
        %v850 = vrot.slane %v839, 3
        %v851 = vsel %vm594, %v850, %v849
        %v852 = vrot.slane %v840, 2
        %v853 = vsel %vm597, %v852, %v851
        %v854 = vrot.slane %v841, 1
        %v855 = vsel %vm600, %v854, %v853
        %v856 = vpack.c.b16 %v855, %v855
        %v858 = vsel %vm690, %v769, 0
        %vm860 = vcmask 1043456
        %v862 = vsel %vm860, %v856, 0
        %864 = vmatprep.subr.bf16.mxu0 0
        %865 = vmatpush1.bf16.msra.mxu0 %v862
        %866 = vmatprep.subr.bf16.mxu0 0
        %867 = vmatpush1.bf16.msra.mxu0 0
        %868 = vmatprep.subr.bf16.mxu0 0
        %869 = vmatpush1.bf16.msra.mxu0 0
        %870 = vmatprep.subr.bf16.mxu0 0
        %871 = vmatpush1.bf16.msra.mxu0 0
        %872 = vmatprep.subr.bf16.mxu0 0
        %873 = vmatpush1.bf16.msra.mxu0 0
        %874 = vmatprep.subr.bf16.mxu0 0
        %875 = vmatpush1.bf16.msra.mxu0 0
        %876 = vmatprep.subr.bf16.mxu0 0
        %877 = vmatpush1.bf16.msra.mxu0 0
        %878 = vmatprep.subr.bf16.mxu0 0
        %879 = vmatpush1.bf16.msra.mxu0 0
        %880 = vmatprep.subr.bf16.mxu0 0
        %881 = vmatpush1.bf16.msra.mxu0 0
        %882 = vmatprep.subr.bf16.mxu0 0
        %883 = vmatpush1.bf16.msra.mxu0 0
        %884 = vmatprep.subr.bf16.mxu0 0
        %885 = vmatpush1.bf16.msra.mxu0 0
        %886 = vmatprep.subr.bf16.mxu0 0
        %887 = vmatpush1.bf16.msra.mxu0 0
        %888 = vmatprep.subr.bf16.mxu0 0
        %889 = vmatpush1.bf16.msra.mxu0 0
        %890 = vmatprep.subr.bf16.mxu0 0
        %891 = vmatpush1.bf16.msra.mxu0 0
        %892 = vmatprep.subr.bf16.mxu0 0
        %893 = vmatpush1.bf16.msra.mxu0 0
        %894 = vmatprep.subr.bf16.mxu0 0
        %895 = vmatpush1.bf16.msra.mxu0 0
        %896 = vmatprep.mubr.bf16.mxu0 0
        %897 = vmatmul.mubr.bf16.gmra.mrb[0].mxu0 %v858
        %v898 = vpop.f32.mrb[0].mxu0
        %v899 = vadd.f32 0.0, %v898
        %v900 = vpop.f32.mrb[0].mxu0
        %v901 = vpop.f32.mrb[0].mxu0
        %v902 = vpop.f32.mrb[0].mxu0
        %903 = vdwg.mxu0
        %v904 = vadd.f32 %v768, %v899
        %905 = vst.msk [vmem:[#allocation4] sm:$0xff] %vm690, %v904
        %906 = vst.msk [vmem:[#allocation2] sm:$0xff] %vm760, %v742
        %v907 = vld [vmem:[%s411] sm:$0x1]
        %v908 = vld [vmem:[%s411 + $0x2] sm:$0x1]
        %v909 = vld [vmem:[%s411 + $0x4] sm:$0x1]
        %v910 = vld [vmem:[%s411 + $0x6] sm:$0x1]
        %v911 = vld [vmem:[%s411 + $0x8] sm:$0x1]
        %v912 = vld [vmem:[%s411 + $0xa] sm:$0x1]
        %v913 = vld [vmem:[%s411 + $0xc] sm:$0x1]
        %v914 = vld [vmem:[%s411 + $0xe] sm:$0x1]
        %v915 = vld [vmem:[%s418] sm:$0x1]
        %v916 = vld [vmem:[%s418 + $0x2] sm:$0x1]
        %v917 = vld [vmem:[%s418 + $0x4] sm:$0x1]
        %v918 = vld [vmem:[%s418 + $0x6] sm:$0x1]
        %v919 = vld [vmem:[%s418 + $0x8] sm:$0x1]
        %v920 = vld [vmem:[%s418 + $0xa] sm:$0x1]
        %v921 = vld [vmem:[%s418 + $0xc] sm:$0x1]
        %v922 = vld [vmem:[%s418 + $0xe] sm:$0x1]
        %v923 = vld [vmem:[%s425] sm:$0x1]
        %v924 = vld [vmem:[%s425 + $0x2] sm:$0x1]
        %v925 = vld [vmem:[%s425 + $0x4] sm:$0x1]
        %v926 = vld [vmem:[%s425 + $0x6] sm:$0x1]
        %v927 = vld [vmem:[%s425 + $0x8] sm:$0x1]
        %v928 = vld [vmem:[%s425 + $0xa] sm:$0x1]
        %v929 = vld [vmem:[%s425 + $0xc] sm:$0x1]
        %v930 = vld [vmem:[%s425 + $0xe] sm:$0x1]
        %v940 = vunpack.c.l.s4 1983009808
        %v941 = vunpack.c.0.s8 %v940
        %v942 = vlaneseq
        %v943 = vshrl.u32 %v942, 7
        %v944 = vsub.s32 %v941, %v943
        %v945 = vrot.slane %v907, %v944
        %v947 = vunpack.c.l.s4 1983009808
        %v948 = vunpack.c.0.s8 %v947
        %v949 = vlaneseq
        %v950 = vshrl.u32 %v949, 7
        %v951 = vsub.s32 %v948, %v950
        %v952 = vrot.slane %v908, %v951
        %v954 = vunpack.c.l.s4 1983009808
        %v955 = vunpack.c.0.s8 %v954
        %v956 = vlaneseq
        %v957 = vshrl.u32 %v956, 7
        %v958 = vsub.s32 %v955, %v957
        %v959 = vrot.slane %v909, %v958
        %v961 = vunpack.c.l.s4 1983009808
        %v962 = vunpack.c.0.s8 %v961
        %v963 = vlaneseq
        %v964 = vshrl.u32 %v963, 7
        %v965 = vsub.s32 %v962, %v964
        %v966 = vrot.slane %v910, %v965
        %v968 = vunpack.c.l.s4 1983009808
        %v969 = vunpack.c.0.s8 %v968
        %v970 = vlaneseq
        %v971 = vshrl.u32 %v970, 7
        %v972 = vsub.s32 %v969, %v971
        %v973 = vrot.slane %v911, %v972
        %v975 = vunpack.c.l.s4 1983009808
        %v976 = vunpack.c.0.s8 %v975
        %v977 = vlaneseq
        %v978 = vshrl.u32 %v977, 7
        %v979 = vsub.s32 %v976, %v978
        %v980 = vrot.slane %v912, %v979
        %v982 = vunpack.c.l.s4 1983009808
        %v983 = vunpack.c.0.s8 %v982
        %v984 = vlaneseq
        %v985 = vshrl.u32 %v984, 7
        %v986 = vsub.s32 %v983, %v985
        %v987 = vrot.slane %v913, %v986
        %v989 = vunpack.c.l.s4 1983009808
        %v990 = vunpack.c.0.s8 %v989
        %v991 = vlaneseq
        %v992 = vshrl.u32 %v991, 7
        %v993 = vsub.s32 %v990, %v992
        %v994 = vrot.slane %v914, %v993
        %v995 = vunpack.c.l.b16 %v945
        %v996 = vunpack.c.l.b16 %v952
        %v997 = vunpack.c.l.b16 %v959
        %v998 = vunpack.c.l.b16 %v966
        %v999 = vunpack.c.l.b16 %v973
        %v1000 = vunpack.c.l.b16 %v980
        %v1001 = vunpack.c.l.b16 %v987
        %v1002 = vunpack.c.l.b16 %v994
        %v1003 = vrot.slane %v995, 1
        %v1004 = vsel %vm582, %v996, %v1003
        %v1005 = vrot.slane %v997, 7
        %v1006 = vsel %vm585, %v1005, %v1004
        %v1007 = vrot.slane %v998, 6
        %v1008 = vsel %vm588, %v1007, %v1006
        %v1009 = vrot.slane %v999, 5
        %v1010 = vsel %vm591, %v1009, %v1008
        %v1011 = vrot.slane %v1000, 4
        %v1012 = vsel %vm594, %v1011, %v1010
        %v1013 = vrot.slane %v1001, 3
        %v1014 = vsel %vm597, %v1013, %v1012
        %v1015 = vrot.slane %v1002, 2
        %v1016 = vsel %vm600, %v1015, %v1014
        %v1017 = vpack.c.b16 %v1016, %v1016
        %v1027 = vunpack.c.l.s4 1983009808
        %v1028 = vunpack.c.0.s8 %v1027
        %v1029 = vlaneseq
        %v1030 = vshrl.u32 %v1029, 7
        %v1031 = vsub.s32 %v1028, %v1030
        %v1032 = vrot.slane %v915, %v1031
        %v1034 = vunpack.c.l.s4 1983009808
        %v1035 = vunpack.c.0.s8 %v1034
        %v1036 = vlaneseq
        %v1037 = vshrl.u32 %v1036, 7
        %v1038 = vsub.s32 %v1035, %v1037
        %v1039 = vrot.slane %v916, %v1038
        %v1041 = vunpack.c.l.s4 1983009808
        %v1042 = vunpack.c.0.s8 %v1041
        %v1043 = vlaneseq
        %v1044 = vshrl.u32 %v1043, 7
        %v1045 = vsub.s32 %v1042, %v1044
        %v1046 = vrot.slane %v917, %v1045
        %v1048 = vunpack.c.l.s4 1983009808
        %v1049 = vunpack.c.0.s8 %v1048
        %v1050 = vlaneseq
        %v1051 = vshrl.u32 %v1050, 7
        %v1052 = vsub.s32 %v1049, %v1051
        %v1053 = vrot.slane %v918, %v1052
        %v1055 = vunpack.c.l.s4 1983009808
        %v1056 = vunpack.c.0.s8 %v1055
        %v1057 = vlaneseq
        %v1058 = vshrl.u32 %v1057, 7
        %v1059 = vsub.s32 %v1056, %v1058
        %v1060 = vrot.slane %v919, %v1059
        %v1062 = vunpack.c.l.s4 1983009808
        %v1063 = vunpack.c.0.s8 %v1062
        %v1064 = vlaneseq
        %v1065 = vshrl.u32 %v1064, 7
        %v1066 = vsub.s32 %v1063, %v1065
        %v1067 = vrot.slane %v920, %v1066
        %v1069 = vunpack.c.l.s4 1983009808
        %v1070 = vunpack.c.0.s8 %v1069
        %v1071 = vlaneseq
        %v1072 = vshrl.u32 %v1071, 7
        %v1073 = vsub.s32 %v1070, %v1072
        %v1074 = vrot.slane %v921, %v1073
        %v1076 = vunpack.c.l.s4 1983009808
        %v1077 = vunpack.c.0.s8 %v1076
        %v1078 = vlaneseq
        %v1079 = vshrl.u32 %v1078, 7
        %v1080 = vsub.s32 %v1077, %v1079
        %v1081 = vrot.slane %v922, %v1080
        %v1082 = vunpack.c.l.b16 %v1032
        %v1083 = vunpack.c.l.b16 %v1039
        %v1084 = vunpack.c.l.b16 %v1046
        %v1085 = vunpack.c.l.b16 %v1053
        %v1086 = vunpack.c.l.b16 %v1060
        %v1087 = vunpack.c.l.b16 %v1067
        %v1088 = vunpack.c.l.b16 %v1074
        %v1089 = vunpack.c.l.b16 %v1081
        %v1090 = vrot.slane %v1082, 1
        %v1091 = vsel %vm582, %v1083, %v1090
        %v1092 = vrot.slane %v1084, 7
        %v1093 = vsel %vm585, %v1092, %v1091
        %v1094 = vrot.slane %v1085, 6
        %v1095 = vsel %vm588, %v1094, %v1093
        %v1096 = vrot.slane %v1086, 5
        %v1097 = vsel %vm591, %v1096, %v1095
        %v1098 = vrot.slane %v1087, 4
        %v1099 = vsel %vm594, %v1098, %v1097
        %v1100 = vrot.slane %v1088, 3
        %v1101 = vsel %vm597, %v1100, %v1099
        %v1102 = vrot.slane %v1089, 2
        %v1103 = vsel %vm600, %v1102, %v1101
        %v1104 = vpack.c.b16 %v1103, %v1103
        %v1106 = vsel %vm690, %v1017, 0
        %v1109 = vsel %vm690, %v1104, 0
        %1111 = vmatprep.subr.bf16.mxu0 0
        %1112 = vmatpush1.bf16.xpose.msra.mxu0 %v1109
        %1113 = vmatprep.subr.bf16.mxu0 0
        %1114 = vmatpush1.bf16.xpose.msra.mxu0 0
        %1115 = vmatprep.subr.bf16.mxu0 0
        %1116 = vmatpush1.bf16.xpose.msra.mxu0 0
        %1117 = vmatprep.subr.bf16.mxu0 0
        %1118 = vmatpush1.bf16.xpose.msra.mxu0 0
        %1119 = vmatprep.subr.bf16.mxu0 0
        %1120 = vmatpush1.bf16.xpose.msra.mxu0 0
        %1121 = vmatprep.subr.bf16.mxu0 0
        %1122 = vmatpush1.bf16.xpose.msra.mxu0 0
        %1123 = vmatprep.subr.bf16.mxu0 0
        %1124 = vmatpush1.bf16.xpose.msra.mxu0 0
        %1125 = vmatprep.subr.bf16.mxu0 0
        %1126 = vmatpush1.bf16.xpose.msra.mxu0 0
        %1127 = vmatprep.subr.bf16.mxu0 0
        %1128 = vmatpush1.bf16.xpose.msra.mxu0 0
        %1129 = vmatprep.subr.bf16.mxu0 0
        %1130 = vmatpush1.bf16.xpose.msra.mxu0 0
        %1131 = vmatprep.subr.bf16.mxu0 0
        %1132 = vmatpush1.bf16.xpose.msra.mxu0 0
        %1133 = vmatprep.subr.bf16.mxu0 0
        %1134 = vmatpush1.bf16.xpose.msra.mxu0 0
        %1135 = vmatprep.subr.bf16.mxu0 0
        %1136 = vmatpush1.bf16.xpose.msra.mxu0 0
        %1137 = vmatprep.subr.bf16.mxu0 0
        %1138 = vmatpush1.bf16.xpose.msra.mxu0 0
        %1139 = vmatprep.subr.bf16.mxu0 0
        %1140 = vmatpush1.bf16.xpose.msra.mxu0 0
        %1141 = vmatprep.subr.bf16.mxu0 0
        %1142 = vmatpush1.bf16.xpose.msra.mxu0 0
        %1143 = vmatprep.mubr.bf16.mxu0 0
        %1144 = vmatmul.mubr.bf16.gmra.mrb[0].mxu0 %v1106
        %v1145 = vpop.f32.mrb[0].mxu0
        %v1146 = vadd.f32 0.0, %v1145
        %v1147 = vpop.f32.mrb[0].mxu0
        %v1148 = vpop.f32.mrb[0].mxu0
        %v1149 = vpop.f32.mrb[0].mxu0
        %1150 = vdwg.mxu0
        %v1151 = vmul.f32 %v1146, 0.35355338
        %s1152 = scalar_lea.vmem [#allocation2], 8
        %v1153 = vld [vmem:[%s1152] sm:$0xff]
        %v1154 = vsel %vm690, %v1151, -inf
        %1155 = vmax.xlane.f32.xlu0 %v1154
        %v1156 = vpop.xlane.xlu0 %1155
        %v1157 = vmax.f32 %v1153, %v1156
        %v1158 = vsub.f32 %v1153, %v1157
        %v1159 = vmul.f32 %v1158, 1.442695
        %v1160 = vpow.pop %v1159
        %1162 = vset.pattern.permute.xlu0 0
        %1163 = vperm.xlu0 %1162, %v1157
        %v1164 = vpop.permute.xlu0 %1163
        %v1166 = vsub.f32 %v1151, %v1164
        %v1167 = vmul.f32 %v1166, 1.442695
        %v1168 = vpow.pop %v1167
        %s1169 = scalar_lea.vmem [#allocation3], 8
        %v1170 = vld [vmem:[%s1169] sm:$0xff]
        %v1171 = vmul.f32 %v1160, %v1170
        %v1172 = vsel %vm690, %v1168, 0.0
        %1173 = vadd.xlane.f32.xlu0 %v1172
        %v1174 = vpop.xlane.xlu0 %1173
        %v1175 = vadd.f32 %v1171, %v1174
        %1176 = vst.msk [vmem:[%s1169] sm:$0xff] %vm760, %v1175
        %s1177 = scalar_lea.vmem [#allocation4], 8
        %v1178 = vld [vmem:[%s1177] sm:$0xff]
        %1180 = vset.pattern.permute.xlu0 0
        %1181 = vperm.xlu0 %1180, %v1160
        %v1182 = vpop.permute.xlu0 %1181
        %v1184 = vmul.f32 %v1182, %v1178
        %v1185 = vpack.c.bf16 %v1168, %v1168
        %v1195 = vunpack.c.l.s4 1983009808
        %v1196 = vunpack.c.0.s8 %v1195
        %v1197 = vlaneseq
        %v1198 = vshrl.u32 %v1197, 7
        %v1199 = vsub.s32 %v1196, %v1198
        %v1200 = vrot.slane %v923, %v1199
        %v1202 = vunpack.c.l.s4 1983009808
        %v1203 = vunpack.c.0.s8 %v1202
        %v1204 = vlaneseq
        %v1205 = vshrl.u32 %v1204, 7
        %v1206 = vsub.s32 %v1203, %v1205
        %v1207 = vrot.slane %v924, %v1206
        %v1209 = vunpack.c.l.s4 1983009808
        %v1210 = vunpack.c.0.s8 %v1209
        %v1211 = vlaneseq
        %v1212 = vshrl.u32 %v1211, 7
        %v1213 = vsub.s32 %v1210, %v1212
        %v1214 = vrot.slane %v925, %v1213
        %v1216 = vunpack.c.l.s4 1983009808
        %v1217 = vunpack.c.0.s8 %v1216
        %v1218 = vlaneseq
        %v1219 = vshrl.u32 %v1218, 7
        %v1220 = vsub.s32 %v1217, %v1219
        %v1221 = vrot.slane %v926, %v1220
        %v1223 = vunpack.c.l.s4 1983009808
        %v1224 = vunpack.c.0.s8 %v1223
        %v1225 = vlaneseq
        %v1226 = vshrl.u32 %v1225, 7
        %v1227 = vsub.s32 %v1224, %v1226
        %v1228 = vrot.slane %v927, %v1227
        %v1230 = vunpack.c.l.s4 1983009808
        %v1231 = vunpack.c.0.s8 %v1230
        %v1232 = vlaneseq
        %v1233 = vshrl.u32 %v1232, 7
        %v1234 = vsub.s32 %v1231, %v1233
        %v1235 = vrot.slane %v928, %v1234
        %v1237 = vunpack.c.l.s4 1983009808
        %v1238 = vunpack.c.0.s8 %v1237
        %v1239 = vlaneseq
        %v1240 = vshrl.u32 %v1239, 7
        %v1241 = vsub.s32 %v1238, %v1240
        %v1242 = vrot.slane %v929, %v1241
        %v1244 = vunpack.c.l.s4 1983009808
        %v1245 = vunpack.c.0.s8 %v1244
        %v1246 = vlaneseq
        %v1247 = vshrl.u32 %v1246, 7
        %v1248 = vsub.s32 %v1245, %v1247
        %v1249 = vrot.slane %v930, %v1248
        %v1250 = vunpack.c.l.b16 %v1200
        %v1251 = vunpack.c.l.b16 %v1207
        %v1252 = vunpack.c.l.b16 %v1214
        %v1253 = vunpack.c.l.b16 %v1221
        %v1254 = vunpack.c.l.b16 %v1228
        %v1255 = vunpack.c.l.b16 %v1235
        %v1256 = vunpack.c.l.b16 %v1242
        %v1257 = vunpack.c.l.b16 %v1249
        %v1258 = vrot.slane %v1250, 1
        %v1259 = vsel %vm582, %v1251, %v1258
        %v1260 = vrot.slane %v1252, 7
        %v1261 = vsel %vm585, %v1260, %v1259
        %v1262 = vrot.slane %v1253, 6
        %v1263 = vsel %vm588, %v1262, %v1261
        %v1264 = vrot.slane %v1254, 5
        %v1265 = vsel %vm591, %v1264, %v1263
        %v1266 = vrot.slane %v1255, 4
        %v1267 = vsel %vm594, %v1266, %v1265
        %v1268 = vrot.slane %v1256, 3
        %v1269 = vsel %vm597, %v1268, %v1267
        %v1270 = vrot.slane %v1257, 2
        %v1271 = vsel %vm600, %v1270, %v1269
        %v1272 = vpack.c.b16 %v1271, %v1271
        %v1274 = vsel %vm690, %v1185, 0
        %v1277 = vsel %vm860, %v1272, 0
        %1279 = vmatprep.subr.bf16.mxu0 0
        %1280 = vmatpush1.bf16.msra.mxu0 %v1277
        %1281 = vmatprep.subr.bf16.mxu0 0
        %1282 = vmatpush1.bf16.msra.mxu0 0
        %1283 = vmatprep.subr.bf16.mxu0 0
        %1284 = vmatpush1.bf16.msra.mxu0 0
        %1285 = vmatprep.subr.bf16.mxu0 0
        %1286 = vmatpush1.bf16.msra.mxu0 0
        %1287 = vmatprep.subr.bf16.mxu0 0
        %1288 = vmatpush1.bf16.msra.mxu0 0
        %1289 = vmatprep.subr.bf16.mxu0 0
        %1290 = vmatpush1.bf16.msra.mxu0 0
        %1291 = vmatprep.subr.bf16.mxu0 0
        %1292 = vmatpush1.bf16.msra.mxu0 0
        %1293 = vmatprep.subr.bf16.mxu0 0
        %1294 = vmatpush1.bf16.msra.mxu0 0
        %1295 = vmatprep.subr.bf16.mxu0 0
        %1296 = vmatpush1.bf16.msra.mxu0 0
        %1297 = vmatprep.subr.bf16.mxu0 0
        %1298 = vmatpush1.bf16.msra.mxu0 0
        %1299 = vmatprep.subr.bf16.mxu0 0
        %1300 = vmatpush1.bf16.msra.mxu0 0
        %1301 = vmatprep.subr.bf16.mxu0 0
        %1302 = vmatpush1.bf16.msra.mxu0 0
        %1303 = vmatprep.subr.bf16.mxu0 0
        %1304 = vmatpush1.bf16.msra.mxu0 0
        %1305 = vmatprep.subr.bf16.mxu0 0
        %1306 = vmatpush1.bf16.msra.mxu0 0
        %1307 = vmatprep.subr.bf16.mxu0 0
        %1308 = vmatpush1.bf16.msra.mxu0 0
        %1309 = vmatprep.subr.bf16.mxu0 0
        %1310 = vmatpush1.bf16.msra.mxu0 0
        %1311 = vmatprep.mubr.bf16.mxu0 0
        %1312 = vmatmul.mubr.bf16.gmra.mrb[0].mxu0 %v1274
        %v1313 = vpop.f32.mrb[0].mxu0
        %v1314 = vadd.f32 0.0, %v1313
        %v1315 = vpop.f32.mrb[0].mxu0
        %v1316 = vpop.f32.mrb[0].mxu0
        %v1317 = vpop.f32.mrb[0].mxu0
        %1318 = vdwg.mxu0
        %v1319 = vadd.f32 %v1184, %v1314
        %1320 = vst.msk [vmem:[%s1177] sm:$0xff] %vm690, %v1319
        %1321 = vst.msk [vmem:[%s1152] sm:$0xff] %vm760, %v1157
        %v1322 = vld [vmem:[%s411] sm:$0x2]
        %v1323 = vld [vmem:[%s411 + $0x2] sm:$0x2]
        %v1324 = vld [vmem:[%s411 + $0x4] sm:$0x2]
        %v1325 = vld [vmem:[%s411 + $0x6] sm:$0x2]
        %v1326 = vld [vmem:[%s411 + $0x8] sm:$0x2]
        %v1327 = vld [vmem:[%s411 + $0xa] sm:$0x2]
        %v1328 = vld [vmem:[%s411 + $0xc] sm:$0x2]
        %v1329 = vld [vmem:[%s411 + $0xe] sm:$0x2]
        %v1330 = vld [vmem:[%s418] sm:$0x2]
        %v1331 = vld [vmem:[%s418 + $0x2] sm:$0x2]
        %v1332 = vld [vmem:[%s418 + $0x4] sm:$0x2]
        %v1333 = vld [vmem:[%s418 + $0x6] sm:$0x2]
        %v1334 = vld [vmem:[%s418 + $0x8] sm:$0x2]
        %v1335 = vld [vmem:[%s418 + $0xa] sm:$0x2]
        %v1336 = vld [vmem:[%s418 + $0xc] sm:$0x2]
        %v1337 = vld [vmem:[%s418 + $0xe] sm:$0x2]
        %v1338 = vld [vmem:[%s425] sm:$0x2]
        %v1339 = vld [vmem:[%s425 + $0x2] sm:$0x2]
        %v1340 = vld [vmem:[%s425 + $0x4] sm:$0x2]
        %v1341 = vld [vmem:[%s425 + $0x6] sm:$0x2]
        %v1342 = vld [vmem:[%s425 + $0x8] sm:$0x2]
        %v1343 = vld [vmem:[%s425 + $0xa] sm:$0x2]
        %v1344 = vld [vmem:[%s425 + $0xc] sm:$0x2]
        %v1345 = vld [vmem:[%s425 + $0xe] sm:$0x2]
        %v1355 = vunpack.c.l.s4 1983009808
        %v1356 = vunpack.c.0.s8 %v1355
        %v1357 = vlaneseq
        %v1358 = vshrl.u32 %v1357, 7
        %v1359 = vsub.s32 %v1356, %v1358
        %v1360 = vrot.slane %v1322, %v1359
        %v1362 = vunpack.c.l.s4 1983009808
        %v1363 = vunpack.c.0.s8 %v1362
        %v1364 = vlaneseq
        %v1365 = vshrl.u32 %v1364, 7
        %v1366 = vsub.s32 %v1363, %v1365
        %v1367 = vrot.slane %v1323, %v1366
        %v1369 = vunpack.c.l.s4 1983009808
        %v1370 = vunpack.c.0.s8 %v1369
        %v1371 = vlaneseq
        %v1372 = vshrl.u32 %v1371, 7
        %v1373 = vsub.s32 %v1370, %v1372
        %v1374 = vrot.slane %v1324, %v1373
        %v1376 = vunpack.c.l.s4 1983009808
        %v1377 = vunpack.c.0.s8 %v1376
        %v1378 = vlaneseq
        %v1379 = vshrl.u32 %v1378, 7
        %v1380 = vsub.s32 %v1377, %v1379
        %v1381 = vrot.slane %v1325, %v1380
        %v1383 = vunpack.c.l.s4 1983009808
        %v1384 = vunpack.c.0.s8 %v1383
        %v1385 = vlaneseq
        %v1386 = vshrl.u32 %v1385, 7
        %v1387 = vsub.s32 %v1384, %v1386
        %v1388 = vrot.slane %v1326, %v1387
        %v1390 = vunpack.c.l.s4 1983009808
        %v1391 = vunpack.c.0.s8 %v1390
        %v1392 = vlaneseq
        %v1393 = vshrl.u32 %v1392, 7
        %v1394 = vsub.s32 %v1391, %v1393
        %v1395 = vrot.slane %v1327, %v1394
        %v1397 = vunpack.c.l.s4 1983009808
        %v1398 = vunpack.c.0.s8 %v1397
        %v1399 = vlaneseq
        %v1400 = vshrl.u32 %v1399, 7
        %v1401 = vsub.s32 %v1398, %v1400
        %v1402 = vrot.slane %v1328, %v1401
        %v1404 = vunpack.c.l.s4 1983009808
        %v1405 = vunpack.c.0.s8 %v1404
        %v1406 = vlaneseq
        %v1407 = vshrl.u32 %v1406, 7
        %v1408 = vsub.s32 %v1405, %v1407
        %v1409 = vrot.slane %v1329, %v1408
        %v1410 = vunpack.c.l.b16 %v1360
        %v1411 = vunpack.c.l.b16 %v1367
        %v1412 = vunpack.c.l.b16 %v1374
        %v1413 = vunpack.c.l.b16 %v1381
        %v1414 = vunpack.c.l.b16 %v1388
        %v1415 = vunpack.c.l.b16 %v1395
        %v1416 = vunpack.c.l.b16 %v1402
        %v1417 = vunpack.c.l.b16 %v1409
        %v1418 = vrot.slane %v1410, 2
        %v1419 = vrot.slane %v1411, 1
        %v1420 = vsel %vm582, %v1419, %v1418
        %v1421 = vsel %vm585, %v1412, %v1420
        %v1422 = vrot.slane %v1413, 7
        %v1423 = vsel %vm588, %v1422, %v1421
        %v1424 = vrot.slane %v1414, 6
        %v1425 = vsel %vm591, %v1424, %v1423
        %v1426 = vrot.slane %v1415, 5
        %v1427 = vsel %vm594, %v1426, %v1425
        %v1428 = vrot.slane %v1416, 4
        %v1429 = vsel %vm597, %v1428, %v1427
        %v1430 = vrot.slane %v1417, 3
        %v1431 = vsel %vm600, %v1430, %v1429
        %v1432 = vpack.c.b16 %v1431, %v1431
        %v1442 = vunpack.c.l.s4 1983009808
        %v1443 = vunpack.c.0.s8 %v1442
        %v1444 = vlaneseq
        %v1445 = vshrl.u32 %v1444, 7
        %v1446 = vsub.s32 %v1443, %v1445
        %v1447 = vrot.slane %v1330, %v1446
        %v1449 = vunpack.c.l.s4 1983009808
        %v1450 = vunpack.c.0.s8 %v1449
        %v1451 = vlaneseq
        %v1452 = vshrl.u32 %v1451, 7
        %v1453 = vsub.s32 %v1450, %v1452
        %v1454 = vrot.slane %v1331, %v1453
        %v1456 = vunpack.c.l.s4 1983009808
        %v1457 = vunpack.c.0.s8 %v1456
        %v1458 = vlaneseq
        %v1459 = vshrl.u32 %v1458, 7
        %v1460 = vsub.s32 %v1457, %v1459
        %v1461 = vrot.slane %v1332, %v1460
        %v1463 = vunpack.c.l.s4 1983009808
        %v1464 = vunpack.c.0.s8 %v1463
        %v1465 = vlaneseq
        %v1466 = vshrl.u32 %v1465, 7
        %v1467 = vsub.s32 %v1464, %v1466
        %v1468 = vrot.slane %v1333, %v1467
        %v1470 = vunpack.c.l.s4 1983009808
        %v1471 = vunpack.c.0.s8 %v1470
        %v1472 = vlaneseq
        %v1473 = vshrl.u32 %v1472, 7
        %v1474 = vsub.s32 %v1471, %v1473
        %v1475 = vrot.slane %v1334, %v1474
        %v1477 = vunpack.c.l.s4 1983009808
        %v1478 = vunpack.c.0.s8 %v1477
        %v1479 = vlaneseq
        %v1480 = vshrl.u32 %v1479, 7
        %v1481 = vsub.s32 %v1478, %v1480
        %v1482 = vrot.slane %v1335, %v1481
        %v1484 = vunpack.c.l.s4 1983009808
        %v1485 = vunpack.c.0.s8 %v1484
        %v1486 = vlaneseq
        %v1487 = vshrl.u32 %v1486, 7
        %v1488 = vsub.s32 %v1485, %v1487
        %v1489 = vrot.slane %v1336, %v1488
        %v1491 = vunpack.c.l.s4 1983009808
        %v1492 = vunpack.c.0.s8 %v1491
        %v1493 = vlaneseq
        %v1494 = vshrl.u32 %v1493, 7
        %v1495 = vsub.s32 %v1492, %v1494
        %v1496 = vrot.slane %v1337, %v1495
        %v1497 = vunpack.c.l.b16 %v1447
        %v1498 = vunpack.c.l.b16 %v1454
        %v1499 = vunpack.c.l.b16 %v1461
        %v1500 = vunpack.c.l.b16 %v1468
        %v1501 = vunpack.c.l.b16 %v1475
        %v1502 = vunpack.c.l.b16 %v1482
        %v1503 = vunpack.c.l.b16 %v1489
        %v1504 = vunpack.c.l.b16 %v1496
        %v1505 = vrot.slane %v1497, 2
        %v1506 = vrot.slane %v1498, 1
        %v1507 = vsel %vm582, %v1506, %v1505
        %v1508 = vsel %vm585, %v1499, %v1507
        %v1509 = vrot.slane %v1500, 7
        %v1510 = vsel %vm588, %v1509, %v1508
        %v1511 = vrot.slane %v1501, 6
        %v1512 = vsel %vm591, %v1511, %v1510
        %v1513 = vrot.slane %v1502, 5
        %v1514 = vsel %vm594, %v1513, %v1512
        %v1515 = vrot.slane %v1503, 4
        %v1516 = vsel %vm597, %v1515, %v1514
        %v1517 = vrot.slane %v1504, 3
        %v1518 = vsel %vm600, %v1517, %v1516
        %v1519 = vpack.c.b16 %v1518, %v1518
        %v1521 = vsel %vm690, %v1432, 0
        %v1524 = vsel %vm690, %v1519, 0
        %1526 = vmatprep.subr.bf16.mxu0 0
        %1527 = vmatpush1.bf16.xpose.msra.mxu0 %v1524
        %1528 = vmatprep.subr.bf16.mxu0 0
        %1529 = vmatpush1.bf16.xpose.msra.mxu0 0
        %1530 = vmatprep.subr.bf16.mxu0 0
        %1531 = vmatpush1.bf16.xpose.msra.mxu0 0
        %1532 = vmatprep.subr.bf16.mxu0 0
        %1533 = vmatpush1.bf16.xpose.msra.mxu0 0
        %1534 = vmatprep.subr.bf16.mxu0 0
        %1535 = vmatpush1.bf16.xpose.msra.mxu0 0
        %1536 = vmatprep.subr.bf16.mxu0 0
        %1537 = vmatpush1.bf16.xpose.msra.mxu0 0
        %1538 = vmatprep.subr.bf16.mxu0 0
        %1539 = vmatpush1.bf16.xpose.msra.mxu0 0
        %1540 = vmatprep.subr.bf16.mxu0 0
        %1541 = vmatpush1.bf16.xpose.msra.mxu0 0
        %1542 = vmatprep.subr.bf16.mxu0 0
        %1543 = vmatpush1.bf16.xpose.msra.mxu0 0
        %1544 = vmatprep.subr.bf16.mxu0 0
        %1545 = vmatpush1.bf16.xpose.msra.mxu0 0
        %1546 = vmatprep.subr.bf16.mxu0 0
        %1547 = vmatpush1.bf16.xpose.msra.mxu0 0
        %1548 = vmatprep.subr.bf16.mxu0 0
        %1549 = vmatpush1.bf16.xpose.msra.mxu0 0
        %1550 = vmatprep.subr.bf16.mxu0 0
        %1551 = vmatpush1.bf16.xpose.msra.mxu0 0
        %1552 = vmatprep.subr.bf16.mxu0 0
        %1553 = vmatpush1.bf16.xpose.msra.mxu0 0
        %1554 = vmatprep.subr.bf16.mxu0 0
        %1555 = vmatpush1.bf16.xpose.msra.mxu0 0
        %1556 = vmatprep.subr.bf16.mxu0 0
        %1557 = vmatpush1.bf16.xpose.msra.mxu0 0
        %1558 = vmatprep.mubr.bf16.mxu0 0
        %1559 = vmatmul.mubr.bf16.gmra.mrb[0].mxu0 %v1521
        %v1560 = vpop.f32.mrb[0].mxu0
        %v1561 = vadd.f32 0.0, %v1560
        %v1562 = vpop.f32.mrb[0].mxu0
        %v1563 = vpop.f32.mrb[0].mxu0
        %v1564 = vpop.f32.mrb[0].mxu0
        %1565 = vdwg.mxu0
        %v1566 = vmul.f32 %v1561, 0.35355338
        %s1567 = scalar_lea.vmem [#allocation2], 16
        %v1568 = vld [vmem:[%s1567] sm:$0xff]
        %v1569 = vsel %vm690, %v1566, -inf
        %1570 = vmax.xlane.f32.xlu0 %v1569
        %v1571 = vpop.xlane.xlu0 %1570
        %v1572 = vmax.f32 %v1568, %v1571
        %v1573 = vsub.f32 %v1568, %v1572
        %v1574 = vmul.f32 %v1573, 1.442695
        %v1575 = vpow.pop %v1574
        %1577 = vset.pattern.permute.xlu0 0
        %1578 = vperm.xlu0 %1577, %v1572
        %v1579 = vpop.permute.xlu0 %1578
        %v1581 = vsub.f32 %v1566, %v1579
        %v1582 = vmul.f32 %v1581, 1.442695
        %v1583 = vpow.pop %v1582
        %s1584 = scalar_lea.vmem [#allocation3], 16
        %v1585 = vld [vmem:[%s1584] sm:$0xff]
        %v1586 = vmul.f32 %v1575, %v1585
        %v1587 = vsel %vm690, %v1583, 0.0
        %1588 = vadd.xlane.f32.xlu0 %v1587
        %v1589 = vpop.xlane.xlu0 %1588
        %v1590 = vadd.f32 %v1586, %v1589
        %1591 = vst.msk [vmem:[%s1584] sm:$0xff] %vm760, %v1590
        %s1592 = scalar_lea.vmem [#allocation4], 16
        %v1593 = vld [vmem:[%s1592] sm:$0xff]
        %1595 = vset.pattern.permute.xlu0 0
        %1596 = vperm.xlu0 %1595, %v1575
        %v1597 = vpop.permute.xlu0 %1596
        %v1599 = vmul.f32 %v1597, %v1593
        %v1600 = vpack.c.bf16 %v1583, %v1583
        %v1610 = vunpack.c.l.s4 1983009808
        %v1611 = vunpack.c.0.s8 %v1610
        %v1612 = vlaneseq
        %v1613 = vshrl.u32 %v1612, 7
        %v1614 = vsub.s32 %v1611, %v1613
        %v1615 = vrot.slane %v1338, %v1614
        %v1617 = vunpack.c.l.s4 1983009808
        %v1618 = vunpack.c.0.s8 %v1617
        %v1619 = vlaneseq
        %v1620 = vshrl.u32 %v1619, 7
        %v1621 = vsub.s32 %v1618, %v1620
        %v1622 = vrot.slane %v1339, %v1621
        %v1624 = vunpack.c.l.s4 1983009808
        %v1625 = vunpack.c.0.s8 %v1624
        %v1626 = vlaneseq
        %v1627 = vshrl.u32 %v1626, 7
        %v1628 = vsub.s32 %v1625, %v1627
        %v1629 = vrot.slane %v1340, %v1628
        %v1631 = vunpack.c.l.s4 1983009808
        %v1632 = vunpack.c.0.s8 %v1631
        %v1633 = vlaneseq
        %v1634 = vshrl.u32 %v1633, 7
        %v1635 = vsub.s32 %v1632, %v1634
        %v1636 = vrot.slane %v1341, %v1635
        %v1638 = vunpack.c.l.s4 1983009808
        %v1639 = vunpack.c.0.s8 %v1638
        %v1640 = vlaneseq
        %v1641 = vshrl.u32 %v1640, 7
        %v1642 = vsub.s32 %v1639, %v1641
        %v1643 = vrot.slane %v1342, %v1642
        %v1645 = vunpack.c.l.s4 1983009808
        %v1646 = vunpack.c.0.s8 %v1645
        %v1647 = vlaneseq
        %v1648 = vshrl.u32 %v1647, 7
        %v1649 = vsub.s32 %v1646, %v1648
        %v1650 = vrot.slane %v1343, %v1649
        %v1652 = vunpack.c.l.s4 1983009808
        %v1653 = vunpack.c.0.s8 %v1652
        %v1654 = vlaneseq
        %v1655 = vshrl.u32 %v1654, 7
        %v1656 = vsub.s32 %v1653, %v1655
        %v1657 = vrot.slane %v1344, %v1656
        %v1659 = vunpack.c.l.s4 1983009808
        %v1660 = vunpack.c.0.s8 %v1659
        %v1661 = vlaneseq
        %v1662 = vshrl.u32 %v1661, 7
        %v1663 = vsub.s32 %v1660, %v1662
        %v1664 = vrot.slane %v1345, %v1663
        %v1665 = vunpack.c.l.b16 %v1615
        %v1666 = vunpack.c.l.b16 %v1622
        %v1667 = vunpack.c.l.b16 %v1629
        %v1668 = vunpack.c.l.b16 %v1636
        %v1669 = vunpack.c.l.b16 %v1643
        %v1670 = vunpack.c.l.b16 %v1650
        %v1671 = vunpack.c.l.b16 %v1657
        %v1672 = vunpack.c.l.b16 %v1664
        %v1673 = vrot.slane %v1665, 2
        %v1674 = vrot.slane %v1666, 1
        %v1675 = vsel %vm582, %v1674, %v1673
        %v1676 = vsel %vm585, %v1667, %v1675
        %v1677 = vrot.slane %v1668, 7
        %v1678 = vsel %vm588, %v1677, %v1676
        %v1679 = vrot.slane %v1669, 6
        %v1680 = vsel %vm591, %v1679, %v1678
        %v1681 = vrot.slane %v1670, 5
        %v1682 = vsel %vm594, %v1681, %v1680
        %v1683 = vrot.slane %v1671, 4
        %v1684 = vsel %vm597, %v1683, %v1682
        %v1685 = vrot.slane %v1672, 3
        %v1686 = vsel %vm600, %v1685, %v1684
        %v1687 = vpack.c.b16 %v1686, %v1686
        %v1689 = vsel %vm690, %v1600, 0
        %v1692 = vsel %vm860, %v1687, 0
        %1694 = vmatprep.subr.bf16.mxu0 0
        %1695 = vmatpush1.bf16.msra.mxu0 %v1692
        %1696 = vmatprep.subr.bf16.mxu0 0
        %1697 = vmatpush1.bf16.msra.mxu0 0
        %1698 = vmatprep.subr.bf16.mxu0 0
        %1699 = vmatpush1.bf16.msra.mxu0 0
        %1700 = vmatprep.subr.bf16.mxu0 0
        %1701 = vmatpush1.bf16.msra.mxu0 0
        %1702 = vmatprep.subr.bf16.mxu0 0
        %1703 = vmatpush1.bf16.msra.mxu0 0
        %1704 = vmatprep.subr.bf16.mxu0 0
        %1705 = vmatpush1.bf16.msra.mxu0 0
        %1706 = vmatprep.subr.bf16.mxu0 0
        %1707 = vmatpush1.bf16.msra.mxu0 0
        %1708 = vmatprep.subr.bf16.mxu0 0
        %1709 = vmatpush1.bf16.msra.mxu0 0
        %1710 = vmatprep.subr.bf16.mxu0 0
        %1711 = vmatpush1.bf16.msra.mxu0 0
        %1712 = vmatprep.subr.bf16.mxu0 0
        %1713 = vmatpush1.bf16.msra.mxu0 0
        %1714 = vmatprep.subr.bf16.mxu0 0
        %1715 = vmatpush1.bf16.msra.mxu0 0
        %1716 = vmatprep.subr.bf16.mxu0 0
        %1717 = vmatpush1.bf16.msra.mxu0 0
        %1718 = vmatprep.subr.bf16.mxu0 0
        %1719 = vmatpush1.bf16.msra.mxu0 0
        %1720 = vmatprep.subr.bf16.mxu0 0
        %1721 = vmatpush1.bf16.msra.mxu0 0
        %1722 = vmatprep.subr.bf16.mxu0 0
        %1723 = vmatpush1.bf16.msra.mxu0 0
        %1724 = vmatprep.subr.bf16.mxu0 0
        %1725 = vmatpush1.bf16.msra.mxu0 0
        %1726 = vmatprep.mubr.bf16.mxu0 0
        %1727 = vmatmul.mubr.bf16.gmra.mrb[0].mxu0 %v1689
        %v1728 = vpop.f32.mrb[0].mxu0
        %v1729 = vadd.f32 0.0, %v1728
        %v1730 = vpop.f32.mrb[0].mxu0
        %v1731 = vpop.f32.mrb[0].mxu0
        %v1732 = vpop.f32.mrb[0].mxu0
        %1733 = vdwg.mxu0
        %v1734 = vadd.f32 %v1599, %v1729
        %1735 = vst.msk [vmem:[%s1592] sm:$0xff] %vm690, %v1734
        %1736 = vst.msk [vmem:[%s1567] sm:$0xff] %vm760, %v1572
        %v1737 = vld [vmem:[%s411] sm:$0x2]
        %v1738 = vld [vmem:[%s411 + $0x2] sm:$0x2]
        %v1739 = vld [vmem:[%s411 + $0x4] sm:$0x2]
        %v1740 = vld [vmem:[%s411 + $0x6] sm:$0x2]
        %v1741 = vld [vmem:[%s411 + $0x8] sm:$0x2]
        %v1742 = vld [vmem:[%s411 + $0xa] sm:$0x2]
        %v1743 = vld [vmem:[%s411 + $0xc] sm:$0x2]
        %v1744 = vld [vmem:[%s411 + $0xe] sm:$0x2]
        %v1745 = vld [vmem:[%s418] sm:$0x2]
        %v1746 = vld [vmem:[%s418 + $0x2] sm:$0x2]
        %v1747 = vld [vmem:[%s418 + $0x4] sm:$0x2]
        %v1748 = vld [vmem:[%s418 + $0x6] sm:$0x2]
        %v1749 = vld [vmem:[%s418 + $0x8] sm:$0x2]
        %v1750 = vld [vmem:[%s418 + $0xa] sm:$0x2]
        %v1751 = vld [vmem:[%s418 + $0xc] sm:$0x2]
        %v1752 = vld [vmem:[%s418 + $0xe] sm:$0x2]
        %v1753 = vld [vmem:[%s425] sm:$0x2]
        %v1754 = vld [vmem:[%s425 + $0x2] sm:$0x2]
        %v1755 = vld [vmem:[%s425 + $0x4] sm:$0x2]
        %v1756 = vld [vmem:[%s425 + $0x6] sm:$0x2]
        %v1757 = vld [vmem:[%s425 + $0x8] sm:$0x2]
        %v1758 = vld [vmem:[%s425 + $0xa] sm:$0x2]
        %v1759 = vld [vmem:[%s425 + $0xc] sm:$0x2]
        %v1760 = vld [vmem:[%s425 + $0xe] sm:$0x2]
        %v1770 = vunpack.c.l.s4 1983009808
        %v1771 = vunpack.c.0.s8 %v1770
        %v1772 = vlaneseq
        %v1773 = vshrl.u32 %v1772, 7
        %v1774 = vsub.s32 %v1771, %v1773
        %v1775 = vrot.slane %v1737, %v1774
        %v1777 = vunpack.c.l.s4 1983009808
        %v1778 = vunpack.c.0.s8 %v1777
        %v1779 = vlaneseq
        %v1780 = vshrl.u32 %v1779, 7
        %v1781 = vsub.s32 %v1778, %v1780
        %v1782 = vrot.slane %v1738, %v1781
        %v1784 = vunpack.c.l.s4 1983009808
        %v1785 = vunpack.c.0.s8 %v1784
        %v1786 = vlaneseq
        %v1787 = vshrl.u32 %v1786, 7
        %v1788 = vsub.s32 %v1785, %v1787
        %v1789 = vrot.slane %v1739, %v1788
        %v1791 = vunpack.c.l.s4 1983009808
        %v1792 = vunpack.c.0.s8 %v1791
        %v1793 = vlaneseq
        %v1794 = vshrl.u32 %v1793, 7
        %v1795 = vsub.s32 %v1792, %v1794
        %v1796 = vrot.slane %v1740, %v1795
        %v1798 = vunpack.c.l.s4 1983009808
        %v1799 = vunpack.c.0.s8 %v1798
        %v1800 = vlaneseq
        %v1801 = vshrl.u32 %v1800, 7
        %v1802 = vsub.s32 %v1799, %v1801
        %v1803 = vrot.slane %v1741, %v1802
        %v1805 = vunpack.c.l.s4 1983009808
        %v1806 = vunpack.c.0.s8 %v1805
        %v1807 = vlaneseq
        %v1808 = vshrl.u32 %v1807, 7
        %v1809 = vsub.s32 %v1806, %v1808
        %v1810 = vrot.slane %v1742, %v1809
        %v1812 = vunpack.c.l.s4 1983009808
        %v1813 = vunpack.c.0.s8 %v1812
        %v1814 = vlaneseq
        %v1815 = vshrl.u32 %v1814, 7
        %v1816 = vsub.s32 %v1813, %v1815
        %v1817 = vrot.slane %v1743, %v1816
        %v1819 = vunpack.c.l.s4 1983009808
        %v1820 = vunpack.c.0.s8 %v1819
        %v1821 = vlaneseq
        %v1822 = vshrl.u32 %v1821, 7
        %v1823 = vsub.s32 %v1820, %v1822
        %v1824 = vrot.slane %v1744, %v1823
        %v1825 = vunpack.c.l.b16 %v1775
        %v1826 = vunpack.c.l.b16 %v1782
        %v1827 = vunpack.c.l.b16 %v1789
        %v1828 = vunpack.c.l.b16 %v1796
        %v1829 = vunpack.c.l.b16 %v1803
        %v1830 = vunpack.c.l.b16 %v1810
        %v1831 = vunpack.c.l.b16 %v1817
        %v1832 = vunpack.c.l.b16 %v1824
        %v1833 = vrot.slane %v1825, 3
        %v1834 = vrot.slane %v1826, 2
        %v1835 = vsel %vm582, %v1834, %v1833
        %v1836 = vrot.slane %v1827, 1
        %v1837 = vsel %vm585, %v1836, %v1835
        %v1838 = vsel %vm588, %v1828, %v1837
        %v1839 = vrot.slane %v1829, 7
        %v1840 = vsel %vm591, %v1839, %v1838
        %v1841 = vrot.slane %v1830, 6
        %v1842 = vsel %vm594, %v1841, %v1840
        %v1843 = vrot.slane %v1831, 5
        %v1844 = vsel %vm597, %v1843, %v1842
        %v1845 = vrot.slane %v1832, 4
        %v1846 = vsel %vm600, %v1845, %v1844
        %v1847 = vpack.c.b16 %v1846, %v1846
        %v1857 = vunpack.c.l.s4 1983009808
        %v1858 = vunpack.c.0.s8 %v1857
        %v1859 = vlaneseq
        %v1860 = vshrl.u32 %v1859, 7
        %v1861 = vsub.s32 %v1858, %v1860
        %v1862 = vrot.slane %v1745, %v1861
        %v1864 = vunpack.c.l.s4 1983009808
        %v1865 = vunpack.c.0.s8 %v1864
        %v1866 = vlaneseq
        %v1867 = vshrl.u32 %v1866, 7
        %v1868 = vsub.s32 %v1865, %v1867
        %v1869 = vrot.slane %v1746, %v1868
        %v1871 = vunpack.c.l.s4 1983009808
        %v1872 = vunpack.c.0.s8 %v1871
        %v1873 = vlaneseq
        %v1874 = vshrl.u32 %v1873, 7
        %v1875 = vsub.s32 %v1872, %v1874
        %v1876 = vrot.slane %v1747, %v1875
        %v1878 = vunpack.c.l.s4 1983009808
        %v1879 = vunpack.c.0.s8 %v1878
        %v1880 = vlaneseq
        %v1881 = vshrl.u32 %v1880, 7
        %v1882 = vsub.s32 %v1879, %v1881
        %v1883 = vrot.slane %v1748, %v1882
        %v1885 = vunpack.c.l.s4 1983009808
        %v1886 = vunpack.c.0.s8 %v1885
        %v1887 = vlaneseq
        %v1888 = vshrl.u32 %v1887, 7
        %v1889 = vsub.s32 %v1886, %v1888
        %v1890 = vrot.slane %v1749, %v1889
        %v1892 = vunpack.c.l.s4 1983009808
        %v1893 = vunpack.c.0.s8 %v1892
        %v1894 = vlaneseq
        %v1895 = vshrl.u32 %v1894, 7
        %v1896 = vsub.s32 %v1893, %v1895
        %v1897 = vrot.slane %v1750, %v1896
        %v1899 = vunpack.c.l.s4 1983009808
        %v1900 = vunpack.c.0.s8 %v1899
        %v1901 = vlaneseq
        %v1902 = vshrl.u32 %v1901, 7
        %v1903 = vsub.s32 %v1900, %v1902
        %v1904 = vrot.slane %v1751, %v1903
        %v1906 = vunpack.c.l.s4 1983009808
        %v1907 = vunpack.c.0.s8 %v1906
        %v1908 = vlaneseq
        %v1909 = vshrl.u32 %v1908, 7
        %v1910 = vsub.s32 %v1907, %v1909
        %v1911 = vrot.slane %v1752, %v1910
        %v1912 = vunpack.c.l.b16 %v1862
        %v1913 = vunpack.c.l.b16 %v1869
        %v1914 = vunpack.c.l.b16 %v1876
        %v1915 = vunpack.c.l.b16 %v1883
        %v1916 = vunpack.c.l.b16 %v1890
        %v1917 = vunpack.c.l.b16 %v1897
        %v1918 = vunpack.c.l.b16 %v1904
        %v1919 = vunpack.c.l.b16 %v1911
        %v1920 = vrot.slane %v1912, 3
        %v1921 = vrot.slane %v1913, 2
        %v1922 = vsel %vm582, %v1921, %v1920
        %v1923 = vrot.slane %v1914, 1
        %v1924 = vsel %vm585, %v1923, %v1922
        %v1925 = vsel %vm588, %v1915, %v1924
        %v1926 = vrot.slane %v1916, 7
        %v1927 = vsel %vm591, %v1926, %v1925
        %v1928 = vrot.slane %v1917, 6
        %v1929 = vsel %vm594, %v1928, %v1927
        %v1930 = vrot.slane %v1918, 5
        %v1931 = vsel %vm597, %v1930, %v1929
        %v1932 = vrot.slane %v1919, 4
        %v1933 = vsel %vm600, %v1932, %v1931
        %v1934 = vpack.c.b16 %v1933, %v1933
        %v1936 = vsel %vm690, %v1847, 0
        %v1939 = vsel %vm690, %v1934, 0
        %1941 = vmatprep.subr.bf16.mxu0 0
        %1942 = vmatpush1.bf16.xpose.msra.mxu0 %v1939
        %1943 = vmatprep.subr.bf16.mxu0 0
        %1944 = vmatpush1.bf16.xpose.msra.mxu0 0
        %1945 = vmatprep.subr.bf16.mxu0 0
        %1946 = vmatpush1.bf16.xpose.msra.mxu0 0
        %1947 = vmatprep.subr.bf16.mxu0 0
        %1948 = vmatpush1.bf16.xpose.msra.mxu0 0
        %1949 = vmatprep.subr.bf16.mxu0 0
        %1950 = vmatpush1.bf16.xpose.msra.mxu0 0
        %1951 = vmatprep.subr.bf16.mxu0 0
        %1952 = vmatpush1.bf16.xpose.msra.mxu0 0
        %1953 = vmatprep.subr.bf16.mxu0 0
        %1954 = vmatpush1.bf16.xpose.msra.mxu0 0
        %1955 = vmatprep.subr.bf16.mxu0 0
        %1956 = vmatpush1.bf16.xpose.msra.mxu0 0
        %1957 = vmatprep.subr.bf16.mxu0 0
        %1958 = vmatpush1.bf16.xpose.msra.mxu0 0
        %1959 = vmatprep.subr.bf16.mxu0 0
        %1960 = vmatpush1.bf16.xpose.msra.mxu0 0
        %1961 = vmatprep.subr.bf16.mxu0 0
        %1962 = vmatpush1.bf16.xpose.msra.mxu0 0
        %1963 = vmatprep.subr.bf16.mxu0 0
        %1964 = vmatpush1.bf16.xpose.msra.mxu0 0
        %1965 = vmatprep.subr.bf16.mxu0 0
        %1966 = vmatpush1.bf16.xpose.msra.mxu0 0
        %1967 = vmatprep.subr.bf16.mxu0 0
        %1968 = vmatpush1.bf16.xpose.msra.mxu0 0
        %1969 = vmatprep.subr.bf16.mxu0 0
        %1970 = vmatpush1.bf16.xpose.msra.mxu0 0
        %1971 = vmatprep.subr.bf16.mxu0 0
        %1972 = vmatpush1.bf16.xpose.msra.mxu0 0
        %1973 = vmatprep.mubr.bf16.mxu0 0
        %1974 = vmatmul.mubr.bf16.gmra.mrb[0].mxu0 %v1936
        %v1975 = vpop.f32.mrb[0].mxu0
        %v1976 = vadd.f32 0.0, %v1975
        %v1977 = vpop.f32.mrb[0].mxu0
        %v1978 = vpop.f32.mrb[0].mxu0
        %v1979 = vpop.f32.mrb[0].mxu0
        %1980 = vdwg.mxu0
        %v1981 = vmul.f32 %v1976, 0.35355338
        %s1982 = scalar_lea.vmem [#allocation2], 24
        %v1983 = vld [vmem:[%s1982] sm:$0xff]
        %v1984 = vsel %vm690, %v1981, -inf
        %1985 = vmax.xlane.f32.xlu0 %v1984
        %v1986 = vpop.xlane.xlu0 %1985
        %v1987 = vmax.f32 %v1983, %v1986
        %v1988 = vsub.f32 %v1983, %v1987
        %v1989 = vmul.f32 %v1988, 1.442695
        %v1990 = vpow.pop %v1989
        %1992 = vset.pattern.permute.xlu0 0
        %1993 = vperm.xlu0 %1992, %v1987
        %v1994 = vpop.permute.xlu0 %1993
        %v1996 = vsub.f32 %v1981, %v1994
        %v1997 = vmul.f32 %v1996, 1.442695
        %v1998 = vpow.pop %v1997
        %s1999 = scalar_lea.vmem [#allocation3], 24
        %v2000 = vld [vmem:[%s1999] sm:$0xff]
        %v2001 = vmul.f32 %v1990, %v2000
        %v2002 = vsel %vm690, %v1998, 0.0
        %2003 = vadd.xlane.f32.xlu0 %v2002
        %v2004 = vpop.xlane.xlu0 %2003
        %v2005 = vadd.f32 %v2001, %v2004
        %2006 = vst.msk [vmem:[%s1999] sm:$0xff] %vm760, %v2005
        %s2007 = scalar_lea.vmem [#allocation4], 24
        %v2008 = vld [vmem:[%s2007] sm:$0xff]
        %2010 = vset.pattern.permute.xlu0 0
        %2011 = vperm.xlu0 %2010, %v1990
        %v2012 = vpop.permute.xlu0 %2011
        %v2014 = vmul.f32 %v2012, %v2008
        %v2015 = vpack.c.bf16 %v1998, %v1998
        %v2025 = vunpack.c.l.s4 1983009808
        %v2026 = vunpack.c.0.s8 %v2025
        %v2027 = vlaneseq
        %v2028 = vshrl.u32 %v2027, 7
        %v2029 = vsub.s32 %v2026, %v2028
        %v2030 = vrot.slane %v1753, %v2029
        %v2032 = vunpack.c.l.s4 1983009808
        %v2033 = vunpack.c.0.s8 %v2032
        %v2034 = vlaneseq
        %v2035 = vshrl.u32 %v2034, 7
        %v2036 = vsub.s32 %v2033, %v2035
        %v2037 = vrot.slane %v1754, %v2036
        %v2039 = vunpack.c.l.s4 1983009808
        %v2040 = vunpack.c.0.s8 %v2039
        %v2041 = vlaneseq
        %v2042 = vshrl.u32 %v2041, 7
        %v2043 = vsub.s32 %v2040, %v2042
        %v2044 = vrot.slane %v1755, %v2043
        %v2046 = vunpack.c.l.s4 1983009808
        %v2047 = vunpack.c.0.s8 %v2046
        %v2048 = vlaneseq
        %v2049 = vshrl.u32 %v2048, 7
        %v2050 = vsub.s32 %v2047, %v2049
        %v2051 = vrot.slane %v1756, %v2050
        %v2053 = vunpack.c.l.s4 1983009808
        %v2054 = vunpack.c.0.s8 %v2053
        %v2055 = vlaneseq
        %v2056 = vshrl.u32 %v2055, 7
        %v2057 = vsub.s32 %v2054, %v2056
        %v2058 = vrot.slane %v1757, %v2057
        %v2060 = vunpack.c.l.s4 1983009808
        %v2061 = vunpack.c.0.s8 %v2060
        %v2062 = vlaneseq
        %v2063 = vshrl.u32 %v2062, 7
        %v2064 = vsub.s32 %v2061, %v2063
        %v2065 = vrot.slane %v1758, %v2064
        %v2067 = vunpack.c.l.s4 1983009808
        %v2068 = vunpack.c.0.s8 %v2067
        %v2069 = vlaneseq
        %v2070 = vshrl.u32 %v2069, 7
        %v2071 = vsub.s32 %v2068, %v2070
        %v2072 = vrot.slane %v1759, %v2071
        %v2074 = vunpack.c.l.s4 1983009808
        %v2075 = vunpack.c.0.s8 %v2074
        %v2076 = vlaneseq
        %v2077 = vshrl.u32 %v2076, 7
        %v2078 = vsub.s32 %v2075, %v2077
        %v2079 = vrot.slane %v1760, %v2078
        %v2080 = vunpack.c.l.b16 %v2030
        %v2081 = vunpack.c.l.b16 %v2037
        %v2082 = vunpack.c.l.b16 %v2044
        %v2083 = vunpack.c.l.b16 %v2051
        %v2084 = vunpack.c.l.b16 %v2058
        %v2085 = vunpack.c.l.b16 %v2065
        %v2086 = vunpack.c.l.b16 %v2072
        %v2087 = vunpack.c.l.b16 %v2079
        %v2088 = vrot.slane %v2080, 3
        %v2089 = vrot.slane %v2081, 2
        %v2090 = vsel %vm582, %v2089, %v2088
        %v2091 = vrot.slane %v2082, 1
        %v2092 = vsel %vm585, %v2091, %v2090
        %v2093 = vsel %vm588, %v2083, %v2092
        %v2094 = vrot.slane %v2084, 7
        %v2095 = vsel %vm591, %v2094, %v2093
        %v2096 = vrot.slane %v2085, 6
        %v2097 = vsel %vm594, %v2096, %v2095
        %v2098 = vrot.slane %v2086, 5
        %v2099 = vsel %vm597, %v2098, %v2097
        %v2100 = vrot.slane %v2087, 4
        %v2101 = vsel %vm600, %v2100, %v2099
        %v2102 = vpack.c.b16 %v2101, %v2101
        %v2104 = vsel %vm690, %v2015, 0
        %v2107 = vsel %vm860, %v2102, 0
        %2109 = vmatprep.subr.bf16.mxu0 0
        %2110 = vmatpush1.bf16.msra.mxu0 %v2107
        %2111 = vmatprep.subr.bf16.mxu0 0
        %2112 = vmatpush1.bf16.msra.mxu0 0
        %2113 = vmatprep.subr.bf16.mxu0 0
        %2114 = vmatpush1.bf16.msra.mxu0 0
        %2115 = vmatprep.subr.bf16.mxu0 0
        %2116 = vmatpush1.bf16.msra.mxu0 0
        %2117 = vmatprep.subr.bf16.mxu0 0
        %2118 = vmatpush1.bf16.msra.mxu0 0
        %2119 = vmatprep.subr.bf16.mxu0 0
        %2120 = vmatpush1.bf16.msra.mxu0 0
        %2121 = vmatprep.subr.bf16.mxu0 0
        %2122 = vmatpush1.bf16.msra.mxu0 0
        %2123 = vmatprep.subr.bf16.mxu0 0
        %2124 = vmatpush1.bf16.msra.mxu0 0
        %2125 = vmatprep.subr.bf16.mxu0 0
        %2126 = vmatpush1.bf16.msra.mxu0 0
        %2127 = vmatprep.subr.bf16.mxu0 0
        %2128 = vmatpush1.bf16.msra.mxu0 0
        %2129 = vmatprep.subr.bf16.mxu0 0
        %2130 = vmatpush1.bf16.msra.mxu0 0
        %2131 = vmatprep.subr.bf16.mxu0 0
        %2132 = vmatpush1.bf16.msra.mxu0 0
        %2133 = vmatprep.subr.bf16.mxu0 0
        %2134 = vmatpush1.bf16.msra.mxu0 0
        %2135 = vmatprep.subr.bf16.mxu0 0
        %2136 = vmatpush1.bf16.msra.mxu0 0
        %2137 = vmatprep.subr.bf16.mxu0 0
        %2138 = vmatpush1.bf16.msra.mxu0 0
        %2139 = vmatprep.subr.bf16.mxu0 0
        %2140 = vmatpush1.bf16.msra.mxu0 0
        %2141 = vmatprep.mubr.bf16.mxu0 0
        %2142 = vmatmul.mubr.bf16.gmra.mrb[0].mxu0 %v2104
        %v2143 = vpop.f32.mrb[0].mxu0
        %v2144 = vadd.f32 0.0, %v2143
        %v2145 = vpop.f32.mrb[0].mxu0
        %v2146 = vpop.f32.mrb[0].mxu0
        %v2147 = vpop.f32.mrb[0].mxu0
        %2148 = vdwg.mxu0
        %v2149 = vadd.f32 %v2014, %v2144
        %2150 = vst.msk [vmem:[%s2007] sm:$0xff] %vm690, %v2149
        %2151 = vst.msk [vmem:[%s1982] sm:$0xff] %vm760, %v1987
        // Predicated region
        $region160: #{block_forward.9} parent=142 // pred_check
          %p2152 = pneg %p467
        $region161: #{block_forward.9} parent=142 // pred_check_branch
          %2154 = sbr.rel (%p2152) target = $region163
        $region162: #{block_forward.9} parent=142 // pred_region
          %v2155 = vld [vmem:[#allocation3] sm:$0xff]
          %v2156 = vrcp.pop %v2155
          %v2157 = vld [vmem:[#allocation4] sm:$0xff]
          %2159 = vset.pattern.permute.xlu0 0
          %2160 = vperm.xlu0 %2159, %v2156
          %v2161 = vpop.permute.xlu0 %2160
          %v2163 = vmul.f32 %v2157, %v2161
          %v2164 = vld [vmem:[%s1169] sm:$0xff]
          %v2165 = vrcp.pop %v2164
          %v2166 = vld [vmem:[%s1177] sm:$0xff]
          %2168 = vset.pattern.permute.xlu0 0
          %2169 = vperm.xlu0 %2168, %v2165
          %v2170 = vpop.permute.xlu0 %2169
          %v2172 = vmul.f32 %v2166, %v2170
          %v2173 = vld [vmem:[%s1584] sm:$0xff]
          %v2174 = vrcp.pop %v2173
          %v2175 = vld [vmem:[%s1592] sm:$0xff]
          %2177 = vset.pattern.permute.xlu0 0
          %2178 = vperm.xlu0 %2177, %v2174
          %v2179 = vpop.permute.xlu0 %2178
          %v2181 = vmul.f32 %v2175, %v2179
          %v2182 = vld [vmem:[%s1999] sm:$0xff]
          %v2183 = vrcp.pop %v2182
          %v2184 = vld [vmem:[%s2007] sm:$0xff]
          %2186 = vset.pattern.permute.xlu0 0
          %2187 = vperm.xlu0 %2186, %v2183
          %v2188 = vpop.permute.xlu0 %2187
          %v2190 = vmul.f32 %v2184, %v2188
          %2192 = vrot.lane.b32.xlu0 %v2172, 8
          %v2193 = vpop.permute.xlu0 %2192
          %2196 = vrot.lane.b32.xlu0 %v2181, 16
          %v2197 = vpop.permute.xlu0 %2196
          %2200 = vrot.lane.b32.xlu0 %v2190, 24
          %v2201 = vpop.permute.xlu0 %2200
          %v2203 = vsel %vm690, %v2163, %v2193
          %vm2204 = vcmask 130048
          %v2205 = vsel %vm2204, %v2203, %v2197
          %vm2206 = vcmask 195584
          %v2207 = vsel %vm2206, %v2205, %v2201
          %v2208 = vpack.c.bf16 %v2207, %v2207
          %vm2209 = vcmask 257024
          %2210 = vst.msk [vmem:[%s465] sm:$0xf] %vm2209, %v2208
        $region163: #{block_forward.9} parent=142 // pred_fallthru
          _
        %p2211 = scmp.lt.s32.totalorder %s19, 1
        %s2212 = scalar_select %p2211, %s19, 1
        %p2213 = scmp.lt.s32.totalorder %s20, 0
        %s2214 = scalar_select %p2213, %s20, 0
        %s2215 = sadd.s32 %s2214, %s2212
        %s2216 = smul.addr %s2215, 4
        %s2217 = scalar_lea.vmem %s3, %s2216
        // Predicated region
        $region164: #{block_forward.9} parent=142 // pred_check
          %p2218 = pneg %p137
        $region165: #{block_forward.9} parent=142 // pred_check_branch
          %2220 = sbr.rel (%p2218) target = $region167
        $region166: #{block_forward.9} parent=142 // pred_region
          _
        $region167: #{block_forward.9} parent=142 // pred_fallthru
          _
      $region143: #{block_forward.9} parent=5 // pred_fallthru
        _
      %p2221 = scmp.le.s32.totalorder 2, %s9
      // Predicated region
      $region168: #{block_forward.9} parent=5 // pred_check
        %p2222 = pneg %p2221
      $region169: #{block_forward.9} parent=5 // pred_check_branch
        %2224 = sbr.rel (%p2222) target = $region171
      $region170: #{block_forward.9} parent=5 // pred_region
        %s2225 = ssub.s32 %s9, 2
        // Predicated region
        $region172: #{block_forward.9} parent=170 // pred_check
          %p2226 = pneg %p143
        $region173: #{block_forward.9} parent=170 // pred_check_branch
          %2228 = sbr.rel (%p2226) target = $region175
        $region174: #{block_forward.9} parent=170 // pred_region
          %p2229 = scmp.lt.s32.totalorder %s22, 1
          %s2230 = scalar_select %p2229, %s22, 1
          %p2231 = scmp.lt.s32.totalorder %s23, 0
          %s2232 = scalar_select %p2231, %s23, 0
          %s2233 = sadd.s32 %s2232, %s2230
          %s2234 = smul.addr %s2233, 4
          %s2235 = scalar_lea.vmem %s3, %s2234
        $region175: #{block_forward.9} parent=170 // pred_fallthru
          _
      $region171: #{block_forward.9} parent=5 // pred_fallthru
        _
    $region6: #{block_forward.9} parent=1 // loop_footer
      %s13 = sadd.s32 1, %s9
    $region7: #{block_forward.9} parent=1 // loop_footer_branch
      %8 = sbr.rel target = $region3
    $region8: #{block_forward.9} parent=1 // loop_exit
      _

</llo_original>
